<compile_context>
chip_gen: v7x
topology: tpu7x:2x2x1
jax: 0.10.0
libtpu: 0.0.40
codegen_flags: <defaults>
</compile_context>

<pallas_src>
import math
import jax
import jax.numpy as jnp
from jax.experimental import pallas as pl
from jax.experimental.pallas import tpu as pltpu

# ----------------------- hyper-parameters (small) ---------------------------
B = 2
IN_C = 4
L = 64
KSZ = 3                     # all pyramid conv layers use kernel_size=3, stride=1
OUT_CHANNELS = (8, 16, 32)
NUM_CONV = len(OUT_CHANNELS)
CMAX = 32                   # all conv channel dims zero-padded to this width
DIM = 32                    # divisible by num_heads = 16 (head_dim = 2)
NUM_HEADS = 16
HEAD_DIM = DIM // NUM_HEADS
PATCH = 8                   # PatchEmerging: kernel_size = stride = 8
N_TOK = L // PATCH          # tokens per batch element
BT = B * N_TOK              # batch-folded token rows
NUM_CLS = 5
MLP_RATIO = 0.5
HIDDEN = int(DIM * MLP_RATIO)
EPS = 1e-5

PAD = KSZ // 2              # 1
LP = L + 2 * PAD            # padded rows per batch element (66)
R = B * LP                  # flat padded rows, batch folded (132)
RB = R + 2 * PAD            # scratch buffer rows incl. margin (134)
BN_SCALE = 1.0 / math.sqrt(1.0 + EPS)
ATT_SCALE = HEAD_DIM ** (-0.5)


# ----------------------------- in-kernel math --------------------------------
def _erf_approx(x):
    # Abramowitz & Stegun 7.1.26 (exp-only), max abs error ~1.5e-7.
    a1, a2, a3, a4, a5 = 0.254829592, -0.284496736, 1.421413741, -1.453152027, 1.061405429
    pcoef = 0.3275911
    ax = jnp.abs(x)
    t = 1.0 / (1.0 + pcoef * ax)
    poly = ((((a5 * t + a4) * t + a3) * t + a2) * t + a1) * t
    y = 1.0 - poly * jnp.exp(-ax * ax)
    return jnp.where(x >= 0, y, -y)


def _gelu_exact(x):
    return 0.5 * x * (1.0 + _erf_approx(x * (1.0 / math.sqrt(2.0))))


def _layernorm(x, g, b):
    mu = jnp.mean(x, axis=-1, keepdims=True)
    var = jnp.mean(jnp.square(x - mu), axis=-1, keepdims=True)
    return (x - mu) * jax.lax.rsqrt(var + EPS) * g + b


# --------------------------- fused Pallas kernel ------------------------------
def mcsat_fused_kernel(
        x_ref, cw_ref, cb_ref, mask_ref, g_ref, s_ref, wp_ref, bp_ref,
        ln1g_ref, ln1b_ref, wqkv_ref, wproj_ref, bproj_ref,
        ln2g_ref, ln2b_ref, w1_ref, b1_ref, w2_ref, b2_ref,
        rep_ref, hk_ref, rept_ref, mv_ref, bs_ref, hl_ref, bbias_ref,
        pool_ref, wc_ref, bc_ref,
        o_ref, buf):
    f32 = jnp.float32

    # ---- stage 0: deposit the channel-padded input into the padded row buffer.
    buf[...] = jnp.zeros((RB, CMAX), f32)
    for b in range(B):
        buf[pl.ds(PAD + b * LP + PAD, L), :] = x_ref[b]
    mask = mask_ref[...]                                   # (R, 1): 1 at valid rows

    # ---- stage 1: pyramid conv stack (conv + eval-BN + ReLU), batch in rows.
    f_raw = None
    act = None
    for layer in range(NUM_CONV):
        acc = jnp.zeros((R, CMAX), f32)
        for tap in range(KSZ):                             # KSZ tap matmuls on the MXU
            acc = acc + jnp.dot(buf[pl.ds(tap, R), :], cw_ref[layer, tap],
                                preferred_element_type=f32)
        raw = acc + cb_ref[layer]
        if layer == 0:
            f_raw = raw                                    # conv0 output before BN/ReLU
        # BN(eval, default stats) -> scale; ReLU; re-zero pad rows for next layer.
        act = jnp.maximum(raw * BN_SCALE, 0.0) * mask
        buf[pl.ds(PAD, R), :] = act

    # ---- stage 2: nearest-neighbour channel interpolation residual (0/1 matmul).
    h = act + jnp.dot(f_raw, g_ref[...], preferred_element_type=f32)   # (R, CMAX)

    # ---- stage 3: PatchEmerging (Conv1d k=8,s=8) via row-selection matmul.
    sh = jnp.dot(s_ref[...], h, preferred_element_type=f32)            # (PATCH*BT, CMAX)
    tok = jnp.zeros((BT, DIM), f32)
    for p_ in range(PATCH):
        tok = tok + jnp.dot(sh[p_ * BT:(p_ + 1) * BT, :], wp_ref[p_],
                            preferred_element_type=f32)
    tok = tok + bp_ref[...]                                             # (BT, DIM)

    # ---- stage 4: BRAT block — all 16 heads batched via block-mask matmuls.
    xn = _layernorm(tok, ln1g_ref[...], ln1b_ref[...])
    qkv = jnp.dot(xn, wqkv_ref[...], preferred_element_type=f32)        # (BT, 3*DIM)
    q = qkv[:, 0:DIM]
    k = qkv[:, DIM:2 * DIM]
    v = qkv[:, 2 * DIM:3 * DIM]
    # Block-diagonal key matrix: kblk[c, h*BT+m] = k[m, c] if c belongs to head h.
    kblk = jnp.dot(k.T, rep_ref[...], preferred_element_type=f32) * hk_ref[...]
    scores = jnp.dot(q, kblk, preferred_element_type=f32) * ATT_SCALE + bbias_ref[...]
    scores = scores - jnp.max(scores, axis=-1, keepdims=True)
    e = jnp.exp(scores)                                                  # (BT, H*BT)
    # Block-expanded value matrix: vexp[h*BT+m, c] = v[m, c] if c belongs to head h.
    vexp = jnp.dot(rept_ref[...], v, preferred_element_type=f32) * mv_ref[...]
    num = jnp.dot(e, vexp, preferred_element_type=f32)                   # (BT, DIM)
    den = jnp.dot(jnp.dot(e, bs_ref[...], preferred_element_type=f32),
                  hl_ref[...], preferred_element_type=f32)               # (BT, DIM)
    attn = num / den
    attn = jnp.dot(attn, wproj_ref[...], preferred_element_type=f32) + bproj_ref[...]
    x1 = tok + attn                                                      # residual 1

    xn2 = _layernorm(x1, ln2g_ref[...], ln2b_ref[...])
    h1 = jnp.dot(xn2, w1_ref[...], preferred_element_type=f32) + b1_ref[...]
    h1 = _gelu_exact(h1)
    mlp = jnp.dot(h1, w2_ref[...], preferred_element_type=f32) + b2_ref[...]
    y = x1 + mlp                                                         # residual 2

    # ---- stage 5: per-batch mean pool + classifier + softmax.
    pooled = jnp.dot(pool_ref[...], y, preferred_element_type=f32)        # (B, DIM)
    logits = jnp.dot(pooled, wc_ref[...], preferred_element_type=f32) + bc_ref[...]
    logits = logits - jnp.max(logits, axis=-1, keepdims=True)
    el = jnp.exp(logits)
    o_ref[...] = el / jnp.sum(el, axis=-1, keepdims=True)


# ------------------------------ operand prep ----------------------------------
def _prepare_operands(p):
    f32 = jnp.float32
    # conv weights -> (NUM_CONV, KSZ, CMAX, CMAX); input BN folded into layer 0.
    cw_list, cb_list = [], []
    for idx, (w, b) in enumerate(p['convs']):
        w_kio = jnp.transpose(w, (2, 1, 0)).astype(f32)          # (K, Cin, Cout)
        if idx == 0:
            w_kio = w_kio * BN_SCALE
        _, cin, cout = w_kio.shape
        w_kio = jnp.pad(w_kio, ((0, 0), (0, CMAX - cin), (0, CMAX - cout)))
        cw_list.append(w_kio)
        cb_list.append(jnp.pad(b, (0, CMAX - cout)).reshape(1, CMAX))
    cw = jnp.stack(cw_list)                                      # (3, 3, 32, 32)
    cb = jnp.stack(cb_list)                                      # (3, 1, 32)

    # valid-row mask for the padded flat layout
    rows = jnp.arange(R)
    pos = rows % LP
    mask = ((pos >= PAD) & (pos < PAD + L)).astype(f32).reshape(R, 1)

    # nearest-neighbour channel-interpolation matrix (C0 -> CMAX), zero rows >= C0
    c0 = OUT_CHANNELS[0]
    src = (jnp.arange(CMAX) * c0) // CMAX
    gmat = (jnp.arange(CMAX)[:, None] == src[None, :]).astype(f32)       # (32, 32)

    # patch row-selection: row p*BT + b*N + n picks padded row b*LP + PAD + n*PATCH + p
    pidx = jnp.arange(PATCH * BT)
    pp = pidx // BT
    tt = pidx % BT
    bb = tt // N_TOK
    nn = tt % N_TOK
    src_row = bb * LP + PAD + nn * PATCH + pp
    smat = (src_row[:, None] == jnp.arange(R)[None, :]).astype(f32)      # (128, 132)

    wp = jnp.transpose(p['patch_w'], (2, 1, 0)).astype(f32)      # (PATCH, CMAX, DIM)
    bp = p['patch_b'].reshape(1, DIM)

    # attention block/permutation masks (head index unrolled into lane blocks)
    j = jnp.arange(NUM_HEADS * BT)
    m_of_j = j % BT
    h_of_j = j // BT
    c = jnp.arange(DIM)
    t = jnp.arange(BT)
    rep = (t[:, None] == m_of_j[None, :]).astype(f32)            # (BT, H*BT)
    rept = rep.T                                                  # (H*BT, BT)
    hk = ((c[:, None] // HEAD_DIM) == h_of_j[None, :]).astype(f32)  # (DIM, H*BT)
    mv = hk.T                                                     # (H*BT, DIM)
    bsm = (h_of_j[:, None] == jnp.arange(NUM_HEADS)[None, :]).astype(f32)  # (H*BT, H)
    hl = (jnp.arange(NUM_HEADS)[:, None] == (c[None, :] // HEAD_DIM)).astype(f32)  # (H, DIM)
    bbias = jnp.where((t[:, None] // N_TOK) == (m_of_j[None, :] // N_TOK),
                      0.0, -1e30).astype(f32)                     # (BT, H*BT)

    pool = ((jnp.arange(B)[:, None] == (t[None, :] // N_TOK)).astype(f32)
            / float(N_TOK))                                       # (B, BT)

    return (cw, cb, mask, gmat, smat, wp, bp,
            p['ln1_g'].reshape(1, DIM), p['ln1_b'].reshape(1, DIM),
            p['wqkv'].T, p['wproj'].T, p['bproj'].reshape(1, DIM),
            p['ln2_g'].reshape(1, DIM), p['ln2_b'].reshape(1, DIM),
            p['w1'].T, p['b1'].reshape(1, HIDDEN),
            p['w2'].T, p['b2'].reshape(1, DIM),
            rep, hk, rept, mv, bsm, hl, bbias,
            pool, p['wc'].T, p['bc'].reshape(1, NUM_CLS))


# ------------------------------ full forward ----------------------------------
def mcsat_forward_pallas(x_bcl, p):
    ops = _prepare_operands(p)
    # one-time input layout glue: NCW -> (B, L, C), channel-pad to CMAX lanes
    x = jnp.transpose(x_bcl, (0, 2, 1))
    x = jnp.pad(x, ((0, 0), (0, 0), (0, CMAX - IN_C)))
    return pl.pallas_call(
        mcsat_fused_kernel,
        out_shape=jax.ShapeDtypeStruct((B, NUM_CLS), jnp.float32),
        scratch_shapes=[pltpu.VMEM((RB, CMAX), jnp.float32)],
    )(x, *ops)


# --------------------------- parameters (deterministic) -----------------------
def build_params(key):
    keys = iter(jax.random.split(key, 32))

    def u(shape, fan_in):
        bound = 1.0 / math.sqrt(fan_in)
        return jax.random.uniform(next(keys), shape, jnp.float32, -bound, bound)

    p = {}
    chans = [IN_C] + list(OUT_CHANNELS)
    p['convs'] = []
    for idx in range(NUM_CONV):
        ci, co = chans[idx], chans[idx + 1]
        p['convs'].append((u((co, ci, KSZ), ci * KSZ), u((co,), ci * KSZ)))
    p['patch_w'] = u((DIM, OUT_CHANNELS[-1], PATCH), OUT_CHANNELS[-1] * PATCH)
    p['patch_b'] = u((DIM,), OUT_CHANNELS[-1] * PATCH)
    p['ln1_g'] = jnp.ones((DIM,), jnp.float32)
    p['ln1_b'] = jnp.zeros((DIM,), jnp.float32)
    p['wqkv'] = u((3 * DIM, DIM), DIM)          # qkv_bias=False
    p['wproj'] = u((DIM, DIM), DIM)
    p['bproj'] = u((DIM,), DIM)
    p['ln2_g'] = jnp.ones((DIM,), jnp.float32)
    p['ln2_b'] = jnp.zeros((DIM,), jnp.float32)
    p['w1'] = u((HIDDEN, DIM), DIM)
    p['b1'] = u((HIDDEN,), DIM)
    p['w2'] = u((DIM, HIDDEN), HIDDEN)
    p['b2'] = u((DIM,), HIDDEN)
    p['wc'] = u((NUM_CLS, DIM), DIM)
    p['bc'] = u((NUM_CLS,), DIM)
    return p


# --------------------------- pure-JAX reference --------------------------------
def mcsat_forward_ref(x_bcl, p):
    x = x_bcl / jnp.sqrt(1.0 + EPS)                  # input BatchNorm (eval)
    f = None
    for idx, (w, b) in enumerate(p['convs']):
        k = w.shape[-1]
        x = jax.lax.conv_general_dilated(
            x, w, (1,), [(k // 2, k // 2)],
            dimension_numbers=('NCH', 'OIH', 'NCH')) + b[None, :, None]
        if idx == 0:
            f = x
        x = x / jnp.sqrt(1.0 + EPS)
        x = jnp.maximum(x, 0.0)
    ft = jnp.transpose(f, (0, 2, 1))
    c_last = x.shape[1]
    c0 = ft.shape[-1]
    idxs = (jnp.arange(c_last) * c0) // c_last
    ft = ft[:, :, idxs]
    x = x + jnp.transpose(ft, (0, 2, 1))
    x = jax.lax.conv_general_dilated(
        x, p['patch_w'], (PATCH,), [(0, 0)],
        dimension_numbers=('NCH', 'OIH', 'NCH')) + p['patch_b'][None, :, None]
    x = jnp.transpose(x, (0, 2, 1))                  # (B, N, DIM)

    def ln(z, g, b):
        mu = jnp.mean(z, -1, keepdims=True)
        var = jnp.mean((z - mu) ** 2, -1, keepdims=True)
        return (z - mu) / jnp.sqrt(var + EPS) * g + b

    Bsz, N, C = x.shape
    hd = C // NUM_HEADS
    x1 = x
    z = ln(x, p['ln1_g'], p['ln1_b'])
    qkv = jnp.einsum('bnc,dc->bnd', z, p['wqkv']).reshape(Bsz, N, 3, NUM_HEADS, hd)
    qkv = jnp.transpose(qkv, (2, 0, 3, 1, 4))
    q, k_, v = qkv[0], qkv[1], qkv[2]
    attn = jnp.einsum('bhnd,bhmd->bhnm', q, k_) * (hd ** -0.5)
    attn = jax.nn.softmax(attn, axis=-1)
    o = jnp.einsum('bhnm,bhmd->bhnd', attn, v)
    o = jnp.transpose(o, (0, 2, 1, 3)).reshape(Bsz, N, C)
    o = jnp.einsum('bnc,dc->bnd', o, p['wproj']) + p['bproj']
    x = o + x1
    z = ln(x, p['ln2_g'], p['ln2_b'])
    h1 = jnp.einsum('bnc,hc->bnh', z, p['w1']) + p['b1']
    h1 = 0.5 * h1 * (1.0 + jax.scipy.special.erf(h1 / jnp.sqrt(2.0)))
    m = jnp.einsum('bnh,ch->bnc', h1, p['w2']) + p['b2']
    x = x + m
    pooled = jnp.mean(x, axis=1)
    logits = pooled @ p['wc'].T + p['bc']
    return jax.nn.softmax(logits, axis=-1)


# ----------------------------------- main --------------------------------------
if __name__ == "__main__":
    root = jax.random.PRNGKey(0)
    kx, kp = jax.random.split(root)
    x = jax.random.normal(kx, (B, IN_C, L), jnp.float32)
    params = build_params(kp)

    out = jax.jit(mcsat_forward_pallas)(x, params)
    out = jax.block_until_ready(out)

    ref = mcsat_forward_ref(x, params)
    err = float(jnp.max(jnp.abs(out - ref)))
    assert out.shape == (B, NUM_CLS), out.shape
    assert err < 1e-3, f"mismatch vs reference: max abs err = {err}"
    print("KERNEL_OK")
</pallas_src>

<mosaic_0001>
module attributes {stable_mosaic.version = 11 : i64} {
  func.func @mcsat_fused_kernel(%arg0: memref<2x64x32xf32, #tpu.memory_space<vmem>>, %arg1: memref<3x3x32x32xf32, #tpu.memory_space<vmem>>, %arg2: memref<3x1x32xf32, #tpu.memory_space<vmem>>, %arg3: memref<132x1xf32, #tpu.memory_space<vmem>>, %arg4: memref<32x32xf32, #tpu.memory_space<vmem>>, %arg5: memref<128x132xf32, #tpu.memory_space<vmem>>, %arg6: memref<8x32x32xf32, #tpu.memory_space<vmem>>, %arg7: memref<1x32xf32, #tpu.memory_space<vmem>>, %arg8: memref<1x32xf32, #tpu.memory_space<vmem>>, %arg9: memref<1x32xf32, #tpu.memory_space<vmem>>, %arg10: memref<32x96xf32, #tpu.memory_space<vmem>>, %arg11: memref<32x32xf32, #tpu.memory_space<vmem>>, %arg12: memref<1x32xf32, #tpu.memory_space<vmem>>, %arg13: memref<1x32xf32, #tpu.memory_space<vmem>>, %arg14: memref<1x32xf32, #tpu.memory_space<vmem>>, %arg15: memref<32x16xf32, #tpu.memory_space<vmem>>, %arg16: memref<1x16xf32, #tpu.memory_space<vmem>>, %arg17: memref<16x32xf32, #tpu.memory_space<vmem>>, %arg18: memref<1x32xf32, #tpu.memory_space<vmem>>, %arg19: memref<16x256xf32, #tpu.memory_space<vmem>>, %arg20: memref<32x256xf32, #tpu.memory_space<vmem>>, %arg21: memref<256x16xf32, #tpu.memory_space<vmem>>, %arg22: memref<256x32xf32, #tpu.memory_space<vmem>>, %arg23: memref<256x16xf32, #tpu.memory_space<vmem>>, %arg24: memref<16x32xf32, #tpu.memory_space<vmem>>, %arg25: memref<16x256xf32, #tpu.memory_space<vmem>>, %arg26: memref<2x16xf32, #tpu.memory_space<vmem>>, %arg27: memref<32x5xf32, #tpu.memory_space<vmem>>, %arg28: memref<1x5xf32, #tpu.memory_space<vmem>>, %arg29: memref<2x5xf32, #tpu.memory_space<vmem>>, %arg30: memref<134x32xf32, #tpu.memory_space<vmem>>) attributes {dimension_semantics = [], scalar_prefetch = 0 : i64, scratch_operands = 1 : i64, tpu.core_type = #tpu.core_type<tc>} {
    %cst = arith.constant 0.000000e+00 : f32
    %0 = vector.broadcast %cst : f32 to vector<134x32xf32>
    %c0 = arith.constant 0 : index
    %c0_0 = arith.constant 0 : index
    %1 = vector.load %arg30[%c0, %c0_0] : memref<134x32xf32, #tpu.memory_space<vmem>>, vector<134x32xf32>
    tpu.vector_store %arg30[%c0, %c0_0], %0 {strides = array<i32>} : memref<134x32xf32, #tpu.memory_space<vmem>>, vector<134x32xf32>,
    %c0_1 = arith.constant 0 : index
    %c0_2 = arith.constant 0 : index
    %c0_3 = arith.constant 0 : index
    %2 = vector.load %arg0[%c0_1, %c0_2, %c0_3] : memref<2x64x32xf32, #tpu.memory_space<vmem>>, vector<1x64x32xf32>
    %3 = vector.shape_cast %2 : vector<1x64x32xf32> to vector<64x32xf32>
    %c2 = arith.constant 2 : index
    %c0_4 = arith.constant 0 : index
    %4 = vector.load %arg30[%c2, %c0_4] : memref<134x32xf32, #tpu.memory_space<vmem>>, vector<64x32xf32>
    tpu.vector_store %arg30[%c2, %c0_4], %3 {strides = array<i32>} : memref<134x32xf32, #tpu.memory_space<vmem>>, vector<64x32xf32>,
    %c1 = arith.constant 1 : index
    %c0_5 = arith.constant 0 : index
    %c0_6 = arith.constant 0 : index
    %5 = vector.load %arg0[%c1, %c0_5, %c0_6] : memref<2x64x32xf32, #tpu.memory_space<vmem>>, vector<1x64x32xf32>
    %6 = vector.shape_cast %5 : vector<1x64x32xf32> to vector<64x32xf32>
    %c68 = arith.constant 68 : index
    %c0_7 = arith.constant 0 : index
    %7 = vector.load %arg30[%c68, %c0_7] : memref<134x32xf32, #tpu.memory_space<vmem>>, vector<64x32xf32>
    tpu.vector_store %arg30[%c68, %c0_7], %6 {strides = array<i32>} : memref<134x32xf32, #tpu.memory_space<vmem>>, vector<64x32xf32>,
    %c0_8 = arith.constant 0 : index
    %c0_9 = arith.constant 0 : index
    %8 = vector.load %arg3[%c0_8, %c0_9] : memref<132x1xf32, #tpu.memory_space<vmem>>, vector<132x1xf32>
    %cst_10 = arith.constant 0.000000e+00 : f32
    %9 = vector.broadcast %cst_10 : f32 to vector<132x32xf32>
    %c0_11 = arith.constant 0 : index
    %c0_12 = arith.constant 0 : index
    %10 = vector.load %arg30[%c0_11, %c0_12] : memref<134x32xf32, #tpu.memory_space<vmem>>, vector<132x32xf32>
    %c0_13 = arith.constant 0 : index
    %c0_14 = arith.constant 0 : index
    %c0_15 = arith.constant 0 : index
    %c0_16 = arith.constant 0 : index
    %11 = vector.load %arg1[%c0_13, %c0_14, %c0_15, %c0_16] : memref<3x3x32x32xf32, #tpu.memory_space<vmem>>, vector<1x1x32x32xf32>
    %12 = vector.shape_cast %11 : vector<1x1x32x32xf32> to vector<32x32xf32>
    %cst_17 = arith.constant dense<0.000000e+00> : vector<132x32xf32>
    %13 = tpu.matmul %10, %12, %cst_17 {dimension_numbers = #tpu.dot_dimension_numbers<[1], [0], [0], [1], [0, 0, 1, 1], [], []>} : vector<132x32xf32>, vector<32x32xf32>, vector<132x32xf32> -> vector<132x32xf32>
    %14 = arith.addf %9, %13 : vector<132x32xf32>
    %c1_18 = arith.constant 1 : index
    %c0_19 = arith.constant 0 : index
    %15 = vector.load %arg30[%c1_18, %c0_19] : memref<134x32xf32, #tpu.memory_space<vmem>>, vector<132x32xf32>
    %c0_20 = arith.constant 0 : index
    %c1_21 = arith.constant 1 : index
    %c0_22 = arith.constant 0 : index
    %c0_23 = arith.constant 0 : index
    %16 = vector.load %arg1[%c0_20, %c1_21, %c0_22, %c0_23] : memref<3x3x32x32xf32, #tpu.memory_space<vmem>>, vector<1x1x32x32xf32>
    %17 = vector.shape_cast %16 : vector<1x1x32x32xf32> to vector<32x32xf32>
    %cst_24 = arith.constant dense<0.000000e+00> : vector<132x32xf32>
    %18 = tpu.matmul %15, %17, %cst_24 {dimension_numbers = #tpu.dot_dimension_numbers<[1], [0], [0], [1], [0, 0, 1, 1], [], []>} : vector<132x32xf32>, vector<32x32xf32>, vector<132x32xf32> -> vector<132x32xf32>
    %19 = arith.addf %14, %18 : vector<132x32xf32>
    %c2_25 = arith.constant 2 : index
    %c0_26 = arith.constant 0 : index
    %20 = vector.load %arg30[%c2_25, %c0_26] : memref<134x32xf32, #tpu.memory_space<vmem>>, vector<132x32xf32>
    %c0_27 = arith.constant 0 : index
    %c2_28 = arith.constant 2 : index
    %c0_29 = arith.constant 0 : index
    %c0_30 = arith.constant 0 : index
    %21 = vector.load %arg1[%c0_27, %c2_28, %c0_29, %c0_30] : memref<3x3x32x32xf32, #tpu.memory_space<vmem>>, vector<1x1x32x32xf32>
    %22 = vector.shape_cast %21 : vector<1x1x32x32xf32> to vector<32x32xf32>
    %cst_31 = arith.constant dense<0.000000e+00> : vector<132x32xf32>
    %23 = tpu.matmul %20, %22, %cst_31 {dimension_numbers = #tpu.dot_dimension_numbers<[1], [0], [0], [1], [0, 0, 1, 1], [], []>} : vector<132x32xf32>, vector<32x32xf32>, vector<132x32xf32> -> vector<132x32xf32>
    %24 = arith.addf %19, %23 : vector<132x32xf32>
    %c0_32 = arith.constant 0 : index
    %c0_33 = arith.constant 0 : index
    %c0_34 = arith.constant 0 : index
    %25 = vector.load %arg2[%c0_32, %c0_33, %c0_34] : memref<3x1x32xf32, #tpu.memory_space<vmem>>, vector<1x1x32xf32>
    %26 = vector.shape_cast %25 : vector<1x1x32xf32> to vector<1x32xf32>
    %27 = vector.broadcast %26 : vector<1x32xf32> to vector<132x32xf32>
    %28 = arith.addf %24, %27 : vector<132x32xf32>
    %cst_35 = arith.constant 0.999994993 : f32
    %29 = vector.broadcast %cst_35 : f32 to vector<132x32xf32>
    %30 = arith.mulf %28, %29 : vector<132x32xf32>
    %cst_36 = arith.constant 0.000000e+00 : f32
    %31 = vector.broadcast %cst_36 : f32 to vector<132x32xf32>
    %32 = arith.maximumf %30, %31 : vector<132x32xf32>
    %33 = vector.broadcast %8 : vector<132x1xf32> to vector<132x32xf32>
    %34 = arith.mulf %32, %33 : vector<132x32xf32>
    %c1_37 = arith.constant 1 : index
    %c0_38 = arith.constant 0 : index
    %35 = vector.load %arg30[%c1_37, %c0_38] : memref<134x32xf32, #tpu.memory_space<vmem>>, vector<132x32xf32>
    tpu.vector_store %arg30[%c1_37, %c0_38], %34 {strides = array<i32>} : memref<134x32xf32, #tpu.memory_space<vmem>>, vector<132x32xf32>,
    %cst_39 = arith.constant 0.000000e+00 : f32
    %36 = vector.broadcast %cst_39 : f32 to vector<132x32xf32>
    %c0_40 = arith.constant 0 : index
    %c0_41 = arith.constant 0 : index
    %37 = vector.load %arg30[%c0_40, %c0_41] : memref<134x32xf32, #tpu.memory_space<vmem>>, vector<132x32xf32>
    %c1_42 = arith.constant 1 : index
    %c0_43 = arith.constant 0 : index
    %c0_44 = arith.constant 0 : index
    %c0_45 = arith.constant 0 : index
    %38 = vector.load %arg1[%c1_42, %c0_43, %c0_44, %c0_45] : memref<3x3x32x32xf32, #tpu.memory_space<vmem>>, vector<1x1x32x32xf32>
    %39 = vector.shape_cast %38 : vector<1x1x32x32xf32> to vector<32x32xf32>
    %cst_46 = arith.constant dense<0.000000e+00> : vector<132x32xf32>
    %40 = tpu.matmul %37, %39, %cst_46 {dimension_numbers = #tpu.dot_dimension_numbers<[1], [0], [0], [1], [0, 0, 1, 1], [], []>} : vector<132x32xf32>, vector<32x32xf32>, vector<132x32xf32> -> vector<132x32xf32>
    %41 = arith.addf %36, %40 : vector<132x32xf32>
    %c1_47 = arith.constant 1 : index
    %c0_48 = arith.constant 0 : index
    %42 = vector.load %arg30[%c1_47, %c0_48] : memref<134x32xf32, #tpu.memory_space<vmem>>, vector<132x32xf32>
    %c1_49 = arith.constant 1 : index
    %c1_50 = arith.constant 1 : index
    %c0_51 = arith.constant 0 : index
    %c0_52 = arith.constant 0 : index
    %43 = vector.load %arg1[%c1_49, %c1_50, %c0_51, %c0_52] : memref<3x3x32x32xf32, #tpu.memory_space<vmem>>, vector<1x1x32x32xf32>
    %44 = vector.shape_cast %43 : vector<1x1x32x32xf32> to vector<32x32xf32>
    %cst_53 = arith.constant dense<0.000000e+00> : vector<132x32xf32>
    %45 = tpu.matmul %42, %44, %cst_53 {dimension_numbers = #tpu.dot_dimension_numbers<[1], [0], [0], [1], [0, 0, 1, 1], [], []>} : vector<132x32xf32>, vector<32x32xf32>, vector<132x32xf32> -> vector<132x32xf32>
    %46 = arith.addf %41, %45 : vector<132x32xf32>
    %c2_54 = arith.constant 2 : index
    %c0_55 = arith.constant 0 : index
    %47 = vector.load %arg30[%c2_54, %c0_55] : memref<134x32xf32, #tpu.memory_space<vmem>>, vector<132x32xf32>
    %c1_56 = arith.constant 1 : index
    %c2_57 = arith.constant 2 : index
    %c0_58 = arith.constant 0 : index
    %c0_59 = arith.constant 0 : index
    %48 = vector.load %arg1[%c1_56, %c2_57, %c0_58, %c0_59] : memref<3x3x32x32xf32, #tpu.memory_space<vmem>>, vector<1x1x32x32xf32>
    %49 = vector.shape_cast %48 : vector<1x1x32x32xf32> to vector<32x32xf32>
    %cst_60 = arith.constant dense<0.000000e+00> : vector<132x32xf32>
    %50 = tpu.matmul %47, %49, %cst_60 {dimension_numbers = #tpu.dot_dimension_numbers<[1], [0], [0], [1], [0, 0, 1, 1], [], []>} : vector<132x32xf32>, vector<32x32xf32>, vector<132x32xf32> -> vector<132x32xf32>
    %51 = arith.addf %46, %50 : vector<132x32xf32>
    %c1_61 = arith.constant 1 : index
    %c0_62 = arith.constant 0 : index
    %c0_63 = arith.constant 0 : index
    %52 = vector.load %arg2[%c1_61, %c0_62, %c0_63] : memref<3x1x32xf32, #tpu.memory_space<vmem>>, vector<1x1x32xf32>
    %53 = vector.shape_cast %52 : vector<1x1x32xf32> to vector<1x32xf32>
    %54 = vector.broadcast %53 : vector<1x32xf32> to vector<132x32xf32>
    %55 = arith.addf %51, %54 : vector<132x32xf32>
    %cst_64 = arith.constant 0.999994993 : f32
    %56 = vector.broadcast %cst_64 : f32 to vector<132x32xf32>
    %57 = arith.mulf %55, %56 : vector<132x32xf32>
    %cst_65 = arith.constant 0.000000e+00 : f32
    %58 = vector.broadcast %cst_65 : f32 to vector<132x32xf32>
    %59 = arith.maximumf %57, %58 : vector<132x32xf32>
    %60 = vector.broadcast %8 : vector<132x1xf32> to vector<132x32xf32>
    %61 = arith.mulf %59, %60 : vector<132x32xf32>
    %c1_66 = arith.constant 1 : index
    %c0_67 = arith.constant 0 : index
    %62 = vector.load %arg30[%c1_66, %c0_67] : memref<134x32xf32, #tpu.memory_space<vmem>>, vector<132x32xf32>
    tpu.vector_store %arg30[%c1_66, %c0_67], %61 {strides = array<i32>} : memref<134x32xf32, #tpu.memory_space<vmem>>, vector<132x32xf32>,
    %cst_68 = arith.constant 0.000000e+00 : f32
    %63 = vector.broadcast %cst_68 : f32 to vector<132x32xf32>
    %c0_69 = arith.constant 0 : index
    %c0_70 = arith.constant 0 : index
    %64 = vector.load %arg30[%c0_69, %c0_70] : memref<134x32xf32, #tpu.memory_space<vmem>>, vector<132x32xf32>
    %c2_71 = arith.constant 2 : index
    %c0_72 = arith.constant 0 : index
    %c0_73 = arith.constant 0 : index
    %c0_74 = arith.constant 0 : index
    %65 = vector.load %arg1[%c2_71, %c0_72, %c0_73, %c0_74] : memref<3x3x32x32xf32, #tpu.memory_space<vmem>>, vector<1x1x32x32xf32>
    %66 = vector.shape_cast %65 : vector<1x1x32x32xf32> to vector<32x32xf32>
    %cst_75 = arith.constant dense<0.000000e+00> : vector<132x32xf32>
    %67 = tpu.matmul %64, %66, %cst_75 {dimension_numbers = #tpu.dot_dimension_numbers<[1], [0], [0], [1], [0, 0, 1, 1], [], []>} : vector<132x32xf32>, vector<32x32xf32>, vector<132x32xf32> -> vector<132x32xf32>
    %68 = arith.addf %63, %67 : vector<132x32xf32>
    %c1_76 = arith.constant 1 : index
    %c0_77 = arith.constant 0 : index
    %69 = vector.load %arg30[%c1_76, %c0_77] : memref<134x32xf32, #tpu.memory_space<vmem>>, vector<132x32xf32>
    %c2_78 = arith.constant 2 : index
    %c1_79 = arith.constant 1 : index
    %c0_80 = arith.constant 0 : index
    %c0_81 = arith.constant 0 : index
    %70 = vector.load %arg1[%c2_78, %c1_79, %c0_80, %c0_81] : memref<3x3x32x32xf32, #tpu.memory_space<vmem>>, vector<1x1x32x32xf32>
    %71 = vector.shape_cast %70 : vector<1x1x32x32xf32> to vector<32x32xf32>
    %cst_82 = arith.constant dense<0.000000e+00> : vector<132x32xf32>
    %72 = tpu.matmul %69, %71, %cst_82 {dimension_numbers = #tpu.dot_dimension_numbers<[1], [0], [0], [1], [0, 0, 1, 1], [], []>} : vector<132x32xf32>, vector<32x32xf32>, vector<132x32xf32> -> vector<132x32xf32>
    %73 = arith.addf %68, %72 : vector<132x32xf32>
    %c2_83 = arith.constant 2 : index
    %c0_84 = arith.constant 0 : index
    %74 = vector.load %arg30[%c2_83, %c0_84] : memref<134x32xf32, #tpu.memory_space<vmem>>, vector<132x32xf32>
    %c2_85 = arith.constant 2 : index
    %c2_86 = arith.constant 2 : index
    %c0_87 = arith.constant 0 : index
    %c0_88 = arith.constant 0 : index
    %75 = vector.load %arg1[%c2_85, %c2_86, %c0_87, %c0_88] : memref<3x3x32x32xf32, #tpu.memory_space<vmem>>, vector<1x1x32x32xf32>
    %76 = vector.shape_cast %75 : vector<1x1x32x32xf32> to vector<32x32xf32>
    %cst_89 = arith.constant dense<0.000000e+00> : vector<132x32xf32>
    %77 = tpu.matmul %74, %76, %cst_89 {dimension_numbers = #tpu.dot_dimension_numbers<[1], [0], [0], [1], [0, 0, 1, 1], [], []>} : vector<132x32xf32>, vector<32x32xf32>, vector<132x32xf32> -> vector<132x32xf32>
    %78 = arith.addf %73, %77 : vector<132x32xf32>
    %c2_90 = arith.constant 2 : index
    %c0_91 = arith.constant 0 : index
    %c0_92 = arith.constant 0 : index
    %79 = vector.load %arg2[%c2_90, %c0_91, %c0_92] : memref<3x1x32xf32, #tpu.memory_space<vmem>>, vector<1x1x32xf32>
    %80 = vector.shape_cast %79 : vector<1x1x32xf32> to vector<1x32xf32>
    %81 = vector.broadcast %80 : vector<1x32xf32> to vector<132x32xf32>
    %82 = arith.addf %78, %81 : vector<132x32xf32>
    %cst_93 = arith.constant 0.999994993 : f32
    %83 = vector.broadcast %cst_93 : f32 to vector<132x32xf32>
    %84 = arith.mulf %82, %83 : vector<132x32xf32>
    %cst_94 = arith.constant 0.000000e+00 : f32
    %85 = vector.broadcast %cst_94 : f32 to vector<132x32xf32>
    %86 = arith.maximumf %84, %85 : vector<132x32xf32>
    %87 = vector.broadcast %8 : vector<132x1xf32> to vector<132x32xf32>
    %88 = arith.mulf %86, %87 : vector<132x32xf32>
    %c1_95 = arith.constant 1 : index
    %c0_96 = arith.constant 0 : index
    %89 = vector.load %arg30[%c1_95, %c0_96] : memref<134x32xf32, #tpu.memory_space<vmem>>, vector<132x32xf32>
    tpu.vector_store %arg30[%c1_95, %c0_96], %88 {strides = array<i32>} : memref<134x32xf32, #tpu.memory_space<vmem>>, vector<132x32xf32>,
    %c0_97 = arith.constant 0 : index
    %c0_98 = arith.constant 0 : index
    %90 = vector.load %arg4[%c0_97, %c0_98] : memref<32x32xf32, #tpu.memory_space<vmem>>, vector<32x32xf32>
    %cst_99 = arith.constant dense<0.000000e+00> : vector<132x32xf32>
    %91 = tpu.matmul %28, %90, %cst_99 {dimension_numbers = #tpu.dot_dimension_numbers<[1], [0], [0], [1], [0, 0, 1, 1], [], []>} : vector<132x32xf32>, vector<32x32xf32>, vector<132x32xf32> -> vector<132x32xf32>
    %92 = arith.addf %88, %91 : vector<132x32xf32>
    %c0_100 = arith.constant 0 : index
    %c0_101 = arith.constant 0 : index
    %93 = vector.load %arg5[%c0_100, %c0_101] : memref<128x132xf32, #tpu.memory_space<vmem>>, vector<128x132xf32>
    %cst_102 = arith.constant dense<0.000000e+00> : vector<128x32xf32>
    %94 = tpu.matmul %93, %92, %cst_102 {dimension_numbers = #tpu.dot_dimension_numbers<[1], [0], [0], [1], [0, 0, 1, 1], [], []>} : vector<128x132xf32>, vector<132x32xf32>, vector<128x32xf32> -> vector<128x32xf32>
    %cst_103 = arith.constant 0.000000e+00 : f32
    %95 = vector.broadcast %cst_103 : f32 to vector<16x32xf32>
    %96 = vector.extract_strided_slice %94 {offsets = [0, 0], sizes = [16, 32], strides = [1, 1]} : vector<128x32xf32> to vector<16x32xf32>
    %c0_104 = arith.constant 0 : index
    %c0_105 = arith.constant 0 : index
    %c0_106 = arith.constant 0 : index
    %97 = vector.load %arg6[%c0_104, %c0_105, %c0_106] : memref<8x32x32xf32, #tpu.memory_space<vmem>>, vector<1x32x32xf32>
    %98 = vector.shape_cast %97 : vector<1x32x32xf32> to vector<32x32xf32>
    %cst_107 = arith.constant dense<0.000000e+00> : vector<16x32xf32>
    %99 = tpu.matmul %96, %98, %cst_107 {dimension_numbers = #tpu.dot_dimension_numbers<[1], [0], [0], [1], [0, 0, 1, 1], [], []>} : vector<16x32xf32>, vector<32x32xf32>, vector<16x32xf32> -> vector<16x32xf32>
    %100 = arith.addf %95, %99 : vector<16x32xf32>
    %101 = vector.extract_strided_slice %94 {offsets = [16, 0], sizes = [16, 32], strides = [1, 1]} : vector<128x32xf32> to vector<16x32xf32>
    %c1_108 = arith.constant 1 : index
    %c0_109 = arith.constant 0 : index
    %c0_110 = arith.constant 0 : index
    %102 = vector.load %arg6[%c1_108, %c0_109, %c0_110] : memref<8x32x32xf32, #tpu.memory_space<vmem>>, vector<1x32x32xf32>
    %103 = vector.shape_cast %102 : vector<1x32x32xf32> to vector<32x32xf32>
    %cst_111 = arith.constant dense<0.000000e+00> : vector<16x32xf32>
    %104 = tpu.matmul %101, %103, %cst_111 {dimension_numbers = #tpu.dot_dimension_numbers<[1], [0], [0], [1], [0, 0, 1, 1], [], []>} : vector<16x32xf32>, vector<32x32xf32>, vector<16x32xf32> -> vector<16x32xf32>
    %105 = arith.addf %100, %104 : vector<16x32xf32>
    %106 = vector.extract_strided_slice %94 {offsets = [32, 0], sizes = [16, 32], strides = [1, 1]} : vector<128x32xf32> to vector<16x32xf32>
    %c2_112 = arith.constant 2 : index
    %c0_113 = arith.constant 0 : index
    %c0_114 = arith.constant 0 : index
    %107 = vector.load %arg6[%c2_112, %c0_113, %c0_114] : memref<8x32x32xf32, #tpu.memory_space<vmem>>, vector<1x32x32xf32>
    %108 = vector.shape_cast %107 : vector<1x32x32xf32> to vector<32x32xf32>
    %cst_115 = arith.constant dense<0.000000e+00> : vector<16x32xf32>
    %109 = tpu.matmul %106, %108, %cst_115 {dimension_numbers = #tpu.dot_dimension_numbers<[1], [0], [0], [1], [0, 0, 1, 1], [], []>} : vector<16x32xf32>, vector<32x32xf32>, vector<16x32xf32> -> vector<16x32xf32>
    %110 = arith.addf %105, %109 : vector<16x32xf32>
    %111 = vector.extract_strided_slice %94 {offsets = [48, 0], sizes = [16, 32], strides = [1, 1]} : vector<128x32xf32> to vector<16x32xf32>
    %c3 = arith.constant 3 : index
    %c0_116 = arith.constant 0 : index
    %c0_117 = arith.constant 0 : index
    %112 = vector.load %arg6[%c3, %c0_116, %c0_117] : memref<8x32x32xf32, #tpu.memory_space<vmem>>, vector<1x32x32xf32>
    %113 = vector.shape_cast %112 : vector<1x32x32xf32> to vector<32x32xf32>
    %cst_118 = arith.constant dense<0.000000e+00> : vector<16x32xf32>
    %114 = tpu.matmul %111, %113, %cst_118 {dimension_numbers = #tpu.dot_dimension_numbers<[1], [0], [0], [1], [0, 0, 1, 1], [], []>} : vector<16x32xf32>, vector<32x32xf32>, vector<16x32xf32> -> vector<16x32xf32>
    %115 = arith.addf %110, %114 : vector<16x32xf32>
    %116 = vector.extract_strided_slice %94 {offsets = [64, 0], sizes = [16, 32], strides = [1, 1]} : vector<128x32xf32> to vector<16x32xf32>
    %c4 = arith.constant 4 : index
    %c0_119 = arith.constant 0 : index
    %c0_120 = arith.constant 0 : index
    %117 = vector.load %arg6[%c4, %c0_119, %c0_120] : memref<8x32x32xf32, #tpu.memory_space<vmem>>, vector<1x32x32xf32>
    %118 = vector.shape_cast %117 : vector<1x32x32xf32> to vector<32x32xf32>
    %cst_121 = arith.constant dense<0.000000e+00> : vector<16x32xf32>
    %119 = tpu.matmul %116, %118, %cst_121 {dimension_numbers = #tpu.dot_dimension_numbers<[1], [0], [0], [1], [0, 0, 1, 1], [], []>} : vector<16x32xf32>, vector<32x32xf32>, vector<16x32xf32> -> vector<16x32xf32>
    %120 = arith.addf %115, %119 : vector<16x32xf32>
    %121 = vector.extract_strided_slice %94 {offsets = [80, 0], sizes = [16, 32], strides = [1, 1]} : vector<128x32xf32> to vector<16x32xf32>
    %c5 = arith.constant 5 : index
    %c0_122 = arith.constant 0 : index
    %c0_123 = arith.constant 0 : index
    %122 = vector.load %arg6[%c5, %c0_122, %c0_123] : memref<8x32x32xf32, #tpu.memory_space<vmem>>, vector<1x32x32xf32>
    %123 = vector.shape_cast %122 : vector<1x32x32xf32> to vector<32x32xf32>
    %cst_124 = arith.constant dense<0.000000e+00> : vector<16x32xf32>
    %124 = tpu.matmul %121, %123, %cst_124 {dimension_numbers = #tpu.dot_dimension_numbers<[1], [0], [0], [1], [0, 0, 1, 1], [], []>} : vector<16x32xf32>, vector<32x32xf32>, vector<16x32xf32> -> vector<16x32xf32>
    %125 = arith.addf %120, %124 : vector<16x32xf32>
    %126 = vector.extract_strided_slice %94 {offsets = [96, 0], sizes = [16, 32], strides = [1, 1]} : vector<128x32xf32> to vector<16x32xf32>
    %c6 = arith.constant 6 : index
    %c0_125 = arith.constant 0 : index
    %c0_126 = arith.constant 0 : index
    %127 = vector.load %arg6[%c6, %c0_125, %c0_126] : memref<8x32x32xf32, #tpu.memory_space<vmem>>, vector<1x32x32xf32>
    %128 = vector.shape_cast %127 : vector<1x32x32xf32> to vector<32x32xf32>
    %cst_127 = arith.constant dense<0.000000e+00> : vector<16x32xf32>
    %129 = tpu.matmul %126, %128, %cst_127 {dimension_numbers = #tpu.dot_dimension_numbers<[1], [0], [0], [1], [0, 0, 1, 1], [], []>} : vector<16x32xf32>, vector<32x32xf32>, vector<16x32xf32> -> vector<16x32xf32>
    %130 = arith.addf %125, %129 : vector<16x32xf32>
    %131 = vector.extract_strided_slice %94 {offsets = [112, 0], sizes = [16, 32], strides = [1, 1]} : vector<128x32xf32> to vector<16x32xf32>
    %c7 = arith.constant 7 : index
    %c0_128 = arith.constant 0 : index
    %c0_129 = arith.constant 0 : index
    %132 = vector.load %arg6[%c7, %c0_128, %c0_129] : memref<8x32x32xf32, #tpu.memory_space<vmem>>, vector<1x32x32xf32>
    %133 = vector.shape_cast %132 : vector<1x32x32xf32> to vector<32x32xf32>
    %cst_130 = arith.constant dense<0.000000e+00> : vector<16x32xf32>
    %134 = tpu.matmul %131, %133, %cst_130 {dimension_numbers = #tpu.dot_dimension_numbers<[1], [0], [0], [1], [0, 0, 1, 1], [], []>} : vector<16x32xf32>, vector<32x32xf32>, vector<16x32xf32> -> vector<16x32xf32>
    %135 = arith.addf %130, %134 : vector<16x32xf32>
    %c0_131 = arith.constant 0 : index
    %c0_132 = arith.constant 0 : index
    %136 = vector.load %arg7[%c0_131, %c0_132] : memref<1x32xf32, #tpu.memory_space<vmem>>, vector<1x32xf32>
    %137 = vector.broadcast %136 : vector<1x32xf32> to vector<16x32xf32>
    %138 = arith.addf %135, %137 : vector<16x32xf32>
    %c0_133 = arith.constant 0 : index
    %c0_134 = arith.constant 0 : index
    %139 = vector.load %arg8[%c0_133, %c0_134] : memref<1x32xf32, #tpu.memory_space<vmem>>, vector<1x32xf32>
    %c0_135 = arith.constant 0 : index
    %c0_136 = arith.constant 0 : index
    %140 = vector.load %arg9[%c0_135, %c0_136] : memref<1x32xf32, #tpu.memory_space<vmem>>, vector<1x32xf32>
    %cst_137 = arith.constant dense<0.000000e+00> : vector<16xf32>
    %141 = vector.multi_reduction <add>, %138, %cst_137 [1] : vector<16x32xf32> to vector<16xf32>
    %142 = vector.shape_cast %141 : vector<16xf32> to vector<16x1xf32>
    %cst_138 = arith.constant 3.200000e+01 : f32
    %143 = vector.broadcast %cst_138 : f32 to vector<16x1xf32>
    %144 = arith.divf %142, %143 : vector<16x1xf32>
    %145 = vector.broadcast %144 : vector<16x1xf32> to vector<16x32xf32>
    %146 = arith.subf %138, %145 : vector<16x32xf32>
    %147 = arith.mulf %146, %146 : vector<16x32xf32>
    %cst_139 = arith.constant dense<0.000000e+00> : vector<16xf32>
    %148 = vector.multi_reduction <add>, %147, %cst_139 [1] : vector<16x32xf32> to vector<16xf32>
    %149 = vector.shape_cast %148 : vector<16xf32> to vector<16x1xf32>
    %cst_140 = arith.constant 3.200000e+01 : f32
    %150 = vector.broadcast %cst_140 : f32 to vector<16x1xf32>
    %151 = arith.divf %149, %150 : vector<16x1xf32>
    %152 = vector.broadcast %144 : vector<16x1xf32> to vector<16x32xf32>
    %153 = arith.subf %138, %152 : vector<16x32xf32>
    %cst_141 = arith.constant 9.99999974E-6 : f32
    %154 = vector.broadcast %cst_141 : f32 to vector<16x1xf32>
    %155 = arith.addf %151, %154 : vector<16x1xf32>
    %156 = math.rsqrt %155 : vector<16x1xf32>
    %157 = vector.broadcast %156 : vector<16x1xf32> to vector<16x32xf32>
    %158 = arith.mulf %153, %157 : vector<16x32xf32>
    %159 = vector.broadcast %139 : vector<1x32xf32> to vector<16x32xf32>
    %160 = arith.mulf %158, %159 : vector<16x32xf32>
    %161 = vector.broadcast %140 : vector<1x32xf32> to vector<16x32xf32>
    %162 = arith.addf %160, %161 : vector<16x32xf32>
    %c0_142 = arith.constant 0 : index
    %c0_143 = arith.constant 0 : index
    %163 = vector.load %arg10[%c0_142, %c0_143] : memref<32x96xf32, #tpu.memory_space<vmem>>, vector<32x96xf32>
    %cst_144 = arith.constant dense<0.000000e+00> : vector<16x96xf32>
    %164 = tpu.matmul %162, %163, %cst_144 {dimension_numbers = #tpu.dot_dimension_numbers<[1], [0], [0], [1], [0, 0, 1, 1], [], []>} : vector<16x32xf32>, vector<32x96xf32>, vector<16x96xf32> -> vector<16x96xf32>
    %165 = vector.extract_strided_slice %164 {offsets = [0, 0], sizes = [16, 32], strides = [1, 1]} : vector<16x96xf32> to vector<16x32xf32>
    %166 = vector.extract_strided_slice %164 {offsets = [0, 32], sizes = [16, 32], strides = [1, 1]} : vector<16x96xf32> to vector<16x32xf32>
    %167 = vector.extract_strided_slice %164 {offsets = [0, 64], sizes = [16, 32], strides = [1, 1]} : vector<16x96xf32> to vector<16x32xf32>
    %168 = tpu.transpose %166, [1, 0] : vector<16x32xf32> -> vector<32x16xf32>
    %c0_145 = arith.constant 0 : index
    %c0_146 = arith.constant 0 : index
    %169 = vector.load %arg19[%c0_145, %c0_146] : memref<16x256xf32, #tpu.memory_space<vmem>>, vector<16x256xf32>
    %cst_147 = arith.constant dense<0.000000e+00> : vector<32x256xf32>
    %170 = tpu.matmul %168, %169, %cst_147 {dimension_numbers = #tpu.dot_dimension_numbers<[1], [0], [0], [1], [0, 0, 1, 1], [], []>} : vector<32x16xf32>, vector<16x256xf32>, vector<32x256xf32> -> vector<32x256xf32>
    %c0_148 = arith.constant 0 : index
    %c0_149 = arith.constant 0 : index
    %171 = vector.load %arg20[%c0_148, %c0_149] : memref<32x256xf32, #tpu.memory_space<vmem>>, vector<32x256xf32>
    %172 = arith.mulf %170, %171 : vector<32x256xf32>
    %cst_150 = arith.constant dense<0.000000e+00> : vector<16x256xf32>
    %173 = tpu.matmul %165, %172, %cst_150 {dimension_numbers = #tpu.dot_dimension_numbers<[1], [0], [0], [1], [0, 0, 1, 1], [], []>} : vector<16x32xf32>, vector<32x256xf32>, vector<16x256xf32> -> vector<16x256xf32>
    %cst_151 = arith.constant 0.707106769 : f32
    %174 = vector.broadcast %cst_151 : f32 to vector<16x256xf32>
    %175 = arith.mulf %173, %174 : vector<16x256xf32>
    %c0_152 = arith.constant 0 : index
    %c0_153 = arith.constant 0 : index
    %176 = vector.load %arg25[%c0_152, %c0_153] : memref<16x256xf32, #tpu.memory_space<vmem>>, vector<16x256xf32>
    %177 = arith.addf %175, %176 : vector<16x256xf32>
    %cst_154 = arith.constant dense<0xFF800000> : vector<16xf32>
    %178 = vector.multi_reduction <maximumf>, %177, %cst_154 [1] : vector<16x256xf32> to vector<16xf32>
    %179 = vector.shape_cast %178 : vector<16xf32> to vector<16x1xf32>
    %180 = vector.broadcast %179 : vector<16x1xf32> to vector<16x256xf32>
    %181 = arith.subf %177, %180 : vector<16x256xf32>
    %182 = math.exp %181 : vector<16x256xf32>
    %c0_155 = arith.constant 0 : index
    %c0_156 = arith.constant 0 : index
    %183 = vector.load %arg21[%c0_155, %c0_156] : memref<256x16xf32, #tpu.memory_space<vmem>>, vector<256x16xf32>
    %cst_157 = arith.constant dense<0.000000e+00> : vector<256x32xf32>
    %184 = tpu.matmul %183, %167, %cst_157 {dimension_numbers = #tpu.dot_dimension_numbers<[1], [0], [0], [1], [0, 0, 1, 1], [], []>} : vector<256x16xf32>, vector<16x32xf32>, vector<256x32xf32> -> vector<256x32xf32>
    %c0_158 = arith.constant 0 : index
    %c0_159 = arith.constant 0 : index
    %185 = vector.load %arg22[%c0_158, %c0_159] : memref<256x32xf32, #tpu.memory_space<vmem>>, vector<256x32xf32>
    %186 = arith.mulf %184, %185 : vector<256x32xf32>
    %cst_160 = arith.constant dense<0.000000e+00> : vector<16x32xf32>
    %187 = tpu.matmul %182, %186, %cst_160 {dimension_numbers = #tpu.dot_dimension_numbers<[1], [0], [0], [1], [0, 0, 1, 1], [], []>} : vector<16x256xf32>, vector<256x32xf32>, vector<16x32xf32> -> vector<16x32xf32>
    %c0_161 = arith.constant 0 : index
    %c0_162 = arith.constant 0 : index
    %188 = vector.load %arg23[%c0_161, %c0_162] : memref<256x16xf32, #tpu.memory_space<vmem>>, vector<256x16xf32>
    %cst_163 = arith.constant dense<0.000000e+00> : vector<16x16xf32>
    %189 = tpu.matmul %182, %188, %cst_163 {dimension_numbers = #tpu.dot_dimension_numbers<[1], [0], [0], [1], [0, 0, 1, 1], [], []>} : vector<16x256xf32>, vector<256x16xf32>, vector<16x16xf32> -> vector<16x16xf32>
    %c0_164 = arith.constant 0 : index
    %c0_165 = arith.constant 0 : index
    %190 = vector.load %arg24[%c0_164, %c0_165] : memref<16x32xf32, #tpu.memory_space<vmem>>, vector<16x32xf32>
    %cst_166 = arith.constant dense<0.000000e+00> : vector<16x32xf32>
    %191 = tpu.matmul %189, %190, %cst_166 {dimension_numbers = #tpu.dot_dimension_numbers<[1], [0], [0], [1], [0, 0, 1, 1], [], []>} : vector<16x16xf32>, vector<16x32xf32>, vector<16x32xf32> -> vector<16x32xf32>
    %192 = arith.divf %187, %191 : vector<16x32xf32>
    %c0_167 = arith.constant 0 : index
    %c0_168 = arith.constant 0 : index
    %193 = vector.load %arg11[%c0_167, %c0_168] : memref<32x32xf32, #tpu.memory_space<vmem>>, vector<32x32xf32>
    %cst_169 = arith.constant dense<0.000000e+00> : vector<16x32xf32>
    %194 = tpu.matmul %192, %193, %cst_169 {dimension_numbers = #tpu.dot_dimension_numbers<[1], [0], [0], [1], [0, 0, 1, 1], [], []>} : vector<16x32xf32>, vector<32x32xf32>, vector<16x32xf32> -> vector<16x32xf32>
    %c0_170 = arith.constant 0 : index
    %c0_171 = arith.constant 0 : index
    %195 = vector.load %arg12[%c0_170, %c0_171] : memref<1x32xf32, #tpu.memory_space<vmem>>, vector<1x32xf32>
    %196 = vector.broadcast %195 : vector<1x32xf32> to vector<16x32xf32>
    %197 = arith.addf %194, %196 : vector<16x32xf32>
    %198 = arith.addf %138, %197 : vector<16x32xf32>
    %c0_172 = arith.constant 0 : index
    %c0_173 = arith.constant 0 : index
    %199 = vector.load %arg13[%c0_172, %c0_173] : memref<1x32xf32, #tpu.memory_space<vmem>>, vector<1x32xf32>
    %c0_174 = arith.constant 0 : index
    %c0_175 = arith.constant 0 : index
    %200 = vector.load %arg14[%c0_174, %c0_175] : memref<1x32xf32, #tpu.memory_space<vmem>>, vector<1x32xf32>
    %cst_176 = arith.constant dense<0.000000e+00> : vector<16xf32>
    %201 = vector.multi_reduction <add>, %198, %cst_176 [1] : vector<16x32xf32> to vector<16xf32>
    %202 = vector.shape_cast %201 : vector<16xf32> to vector<16x1xf32>
    %cst_177 = arith.constant 3.200000e+01 : f32
    %203 = vector.broadcast %cst_177 : f32 to vector<16x1xf32>
    %204 = arith.divf %202, %203 : vector<16x1xf32>
    %205 = vector.broadcast %204 : vector<16x1xf32> to vector<16x32xf32>
    %206 = arith.subf %198, %205 : vector<16x32xf32>
    %207 = arith.mulf %206, %206 : vector<16x32xf32>
    %cst_178 = arith.constant dense<0.000000e+00> : vector<16xf32>
    %208 = vector.multi_reduction <add>, %207, %cst_178 [1] : vector<16x32xf32> to vector<16xf32>
    %209 = vector.shape_cast %208 : vector<16xf32> to vector<16x1xf32>
    %cst_179 = arith.constant 3.200000e+01 : f32
    %210 = vector.broadcast %cst_179 : f32 to vector<16x1xf32>
    %211 = arith.divf %209, %210 : vector<16x1xf32>
    %212 = vector.broadcast %204 : vector<16x1xf32> to vector<16x32xf32>
    %213 = arith.subf %198, %212 : vector<16x32xf32>
    %cst_180 = arith.constant 9.99999974E-6 : f32
    %214 = vector.broadcast %cst_180 : f32 to vector<16x1xf32>
    %215 = arith.addf %211, %214 : vector<16x1xf32>
    %216 = math.rsqrt %215 : vector<16x1xf32>
    %217 = vector.broadcast %216 : vector<16x1xf32> to vector<16x32xf32>
    %218 = arith.mulf %213, %217 : vector<16x32xf32>
    %219 = vector.broadcast %199 : vector<1x32xf32> to vector<16x32xf32>
    %220 = arith.mulf %218, %219 : vector<16x32xf32>
    %221 = vector.broadcast %200 : vector<1x32xf32> to vector<16x32xf32>
    %222 = arith.addf %220, %221 : vector<16x32xf32>
    %c0_181 = arith.constant 0 : index
    %c0_182 = arith.constant 0 : index
    %223 = vector.load %arg15[%c0_181, %c0_182] : memref<32x16xf32, #tpu.memory_space<vmem>>, vector<32x16xf32>
    %cst_183 = arith.constant dense<0.000000e+00> : vector<16x16xf32>
    %224 = tpu.matmul %222, %223, %cst_183 {dimension_numbers = #tpu.dot_dimension_numbers<[1], [0], [0], [1], [0, 0, 1, 1], [], []>} : vector<16x32xf32>, vector<32x16xf32>, vector<16x16xf32> -> vector<16x16xf32>
    %c0_184 = arith.constant 0 : index
    %c0_185 = arith.constant 0 : index
    %225 = vector.load %arg16[%c0_184, %c0_185] : memref<1x16xf32, #tpu.memory_space<vmem>>, vector<1x16xf32>
    %226 = vector.broadcast %225 : vector<1x16xf32> to vector<16x16xf32>
    %227 = arith.addf %224, %226 : vector<16x16xf32>
    %cst_186 = arith.constant 5.000000e-01 : f32
    %228 = vector.broadcast %cst_186 : f32 to vector<16x16xf32>
    %229 = arith.mulf %228, %227 : vector<16x16xf32>
    %cst_187 = arith.constant 0.707106769 : f32
    %230 = vector.broadcast %cst_187 : f32 to vector<16x16xf32>
    %231 = arith.mulf %227, %230 : vector<16x16xf32>
    %232 = math.absf %231 : vector<16x16xf32>
    %cst_188 = arith.constant 0.327591091 : f32
    %233 = vector.broadcast %cst_188 : f32 to vector<16x16xf32>
    %234 = arith.mulf %233, %232 : vector<16x16xf32>
    %cst_189 = arith.constant 1.000000e+00 : f32
    %235 = vector.broadcast %cst_189 : f32 to vector<16x16xf32>
    %236 = arith.addf %235, %234 : vector<16x16xf32>
    %cst_190 = arith.constant 1.000000e+00 : f32
    %237 = vector.broadcast %cst_190 : f32 to vector<16x16xf32>
    %238 = arith.divf %237, %236 : vector<16x16xf32>
    %cst_191 = arith.constant 1.06140542 : f32
    %239 = vector.broadcast %cst_191 : f32 to vector<16x16xf32>
    %240 = arith.mulf %239, %238 : vector<16x16xf32>
    %cst_192 = arith.constant -1.45315206 : f32
    %241 = vector.broadcast %cst_192 : f32 to vector<16x16xf32>
    %242 = arith.addf %240, %241 : vector<16x16xf32>
    %243 = arith.mulf %242, %238 : vector<16x16xf32>
    %cst_193 = arith.constant 1.42141378 : f32
    %244 = vector.broadcast %cst_193 : f32 to vector<16x16xf32>
    %245 = arith.addf %243, %244 : vector<16x16xf32>
    %246 = arith.mulf %245, %238 : vector<16x16xf32>
    %cst_194 = arith.constant -0.284496725 : f32
    %247 = vector.broadcast %cst_194 : f32 to vector<16x16xf32>
    %248 = arith.addf %246, %247 : vector<16x16xf32>
    %249 = arith.mulf %248, %238 : vector<16x16xf32>
    %cst_195 = arith.constant 0.254829586 : f32
    %250 = vector.broadcast %cst_195 : f32 to vector<16x16xf32>
    %251 = arith.addf %249, %250 : vector<16x16xf32>
    %252 = arith.mulf %251, %238 : vector<16x16xf32>
    %cst_196 = arith.constant 0.000000e+00 : f32
    %253 = vector.broadcast %cst_196 : f32 to vector<16x16xf32>
    %254 = arith.subf %253, %232 : vector<16x16xf32>
    %255 = arith.mulf %254, %232 : vector<16x16xf32>
    %256 = math.exp %255 : vector<16x16xf32>
    %257 = arith.mulf %252, %256 : vector<16x16xf32>
    %cst_197 = arith.constant 1.000000e+00 : f32
    %258 = vector.broadcast %cst_197 : f32 to vector<16x16xf32>
    %259 = arith.subf %258, %257 : vector<16x16xf32>
    %cst_198 = arith.constant 0.000000e+00 : f32
    %260 = vector.broadcast %cst_198 : f32 to vector<16x16xf32>
    %261 = arith.cmpf oge, %231, %260 : vector<16x16xf32>
    %cst_199 = arith.constant 0.000000e+00 : f32
    %262 = vector.broadcast %cst_199 : f32 to vector<16x16xf32>
    %263 = arith.subf %262, %259 : vector<16x16xf32>
    %264 = arith.select %261, %259, %263 : vector<16x16xi1>, vector<16x16xf32>
    %cst_200 = arith.constant 1.000000e+00 : f32
    %265 = vector.broadcast %cst_200 : f32 to vector<16x16xf32>
    %266 = arith.addf %265, %264 : vector<16x16xf32>
    %267 = arith.mulf %229, %266 : vector<16x16xf32>
    %c0_201 = arith.constant 0 : index
    %c0_202 = arith.constant 0 : index
    %268 = vector.load %arg17[%c0_201, %c0_202] : memref<16x32xf32, #tpu.memory_space<vmem>>, vector<16x32xf32>
    %cst_203 = arith.constant dense<0.000000e+00> : vector<16x32xf32>
    %269 = tpu.matmul %267, %268, %cst_203 {dimension_numbers = #tpu.dot_dimension_numbers<[1], [0], [0], [1], [0, 0, 1, 1], [], []>} : vector<16x16xf32>, vector<16x32xf32>, vector<16x32xf32> -> vector<16x32xf32>
    %c0_204 = arith.constant 0 : index
    %c0_205 = arith.constant 0 : index
    %270 = vector.load %arg18[%c0_204, %c0_205] : memref<1x32xf32, #tpu.memory_space<vmem>>, vector<1x32xf32>
    %271 = vector.broadcast %270 : vector<1x32xf32> to vector<16x32xf32>
    %272 = arith.addf %269, %271 : vector<16x32xf32>
    %273 = arith.addf %198, %272 : vector<16x32xf32>
    %c0_206 = arith.constant 0 : index
    %c0_207 = arith.constant 0 : index
    %274 = vector.load %arg26[%c0_206, %c0_207] : memref<2x16xf32, #tpu.memory_space<vmem>>, vector<2x16xf32>
    %cst_208 = arith.constant dense<0.000000e+00> : vector<2x32xf32>
    %275 = tpu.matmul %274, %273, %cst_208 {dimension_numbers = #tpu.dot_dimension_numbers<[1], [0], [0], [1], [0, 0, 1, 1], [], []>} : vector<2x16xf32>, vector<16x32xf32>, vector<2x32xf32> -> vector<2x32xf32>
    %c0_209 = arith.constant 0 : index
    %c0_210 = arith.constant 0 : index
    %276 = vector.load %arg27[%c0_209, %c0_210] : memref<32x5xf32, #tpu.memory_space<vmem>>, vector<32x5xf32>
    %cst_211 = arith.constant dense<0.000000e+00> : vector<2x5xf32>
    %277 = tpu.matmul %275, %276, %cst_211 {dimension_numbers = #tpu.dot_dimension_numbers<[1], [0], [0], [1], [0, 0, 1, 1], [], []>} : vector<2x32xf32>, vector<32x5xf32>, vector<2x5xf32> -> vector<2x5xf32>
    %c0_212 = arith.constant 0 : index
    %c0_213 = arith.constant 0 : index
    %278 = vector.load %arg28[%c0_212, %c0_213] : memref<1x5xf32, #tpu.memory_space<vmem>>, vector<1x5xf32>
    %279 = vector.broadcast %278 : vector<1x5xf32> to vector<2x5xf32>
    %280 = arith.addf %277, %279 : vector<2x5xf32>
    %cst_214 = arith.constant dense<0xFF800000> : vector<2xf32>
    %281 = vector.multi_reduction <maximumf>, %280, %cst_214 [1] : vector<2x5xf32> to vector<2xf32>
    %282 = vector.shape_cast %281 : vector<2xf32> to vector<2x1xf32>
    %283 = vector.broadcast %282 : vector<2x1xf32> to vector<2x5xf32>
    %284 = arith.subf %280, %283 : vector<2x5xf32>
    %285 = math.exp %284 : vector<2x5xf32>
    %cst_215 = arith.constant dense<0.000000e+00> : vector<2xf32>
    %286 = vector.multi_reduction <add>, %285, %cst_215 [1] : vector<2x5xf32> to vector<2xf32>
    %287 = vector.shape_cast %286 : vector<2xf32> to vector<2x1xf32>
    %288 = vector.broadcast %287 : vector<2x1xf32> to vector<2x5xf32>
    %289 = arith.divf %285, %288 : vector<2x5xf32>
    %c0_216 = arith.constant 0 : index
    %c0_217 = arith.constant 0 : index
    %290 = vector.load %arg29[%c0_216, %c0_217] : memref<2x5xf32, #tpu.memory_space<vmem>>, vector<2x5xf32>
    tpu.vector_store %arg29[%c0_216, %c0_217], %289 {strides = array<i32>} : memref<2x5xf32, #tpu.memory_space<vmem>>, vector<2x5xf32>,
    return
  }
}

</mosaic_0001>

<llo_original>
// kernel: mcsat_forward_pallas.1
$region0: #{mcsat_forward_pallas.1}
  #allocation0 [shape = 'u32[]', space=smem, size = 0x4, offset = 0x4, fixed_abs, tag = 'smem constant byte address 0x4 - core index']
  #allocation1 [shape = 'u32[144,128]{1,0:T(1,128)}', space=vmem, size = 0x12000, scoped, tag = 'internal scratch']
  #allocation2 [shape = 'f32[134,32]{1,0:T(8,128)}', space=vmem, size = 0x11000, scoped, tag = 'scratch operand']
  %s0 = inlined_call_operand.smem [shape: u32[30], index: -1, kind: input, shape index: {}]
  %s1 = sld [smem:[%s0]]
  %s2 = scalar_lea.smem %s0, 1
  %s3 = sld [smem:[%s2]]
  %s4 = scalar_lea.smem %s0, 2
  %s5 = sld [smem:[%s4]]
  %s6 = scalar_lea.smem %s0, 3
  %s7 = sld [smem:[%s6]]
  %s8 = scalar_lea.smem %s0, 4
  %s9 = sld [smem:[%s8]]
  %s10 = scalar_lea.smem %s0, 5
  %s11 = sld [smem:[%s10]]
  %s12 = scalar_lea.smem %s0, 6
  %s13 = sld [smem:[%s12]]
  %s14 = scalar_lea.smem %s0, 7
  %s15 = sld [smem:[%s14]]
  %s16 = scalar_lea.smem %s0, 8
  %s17 = sld [smem:[%s16]]
  %s18 = scalar_lea.smem %s0, 9
  %s19 = sld [smem:[%s18]]
  %s20 = scalar_lea.smem %s0, 10
  %s21 = sld [smem:[%s20]]
  %s22 = scalar_lea.smem %s0, 11
  %s23 = sld [smem:[%s22]]
  %s24 = scalar_lea.smem %s0, 12
  %s25 = sld [smem:[%s24]]
  %s26 = scalar_lea.smem %s0, 13
  %s27 = sld [smem:[%s26]]
  %s28 = scalar_lea.smem %s0, 14
  %s29 = sld [smem:[%s28]]
  %s30 = scalar_lea.smem %s0, 15
  %s31 = sld [smem:[%s30]]
  %s32 = scalar_lea.smem %s0, 16
  %s33 = sld [smem:[%s32]]
  %s34 = scalar_lea.smem %s0, 17
  %s35 = sld [smem:[%s34]]
  %s36 = scalar_lea.smem %s0, 18
  %s37 = sld [smem:[%s36]]
  %s38 = scalar_lea.smem %s0, 19
  %s39 = sld [smem:[%s38]]
  %s40 = scalar_lea.smem %s0, 20
  %s41 = sld [smem:[%s40]]
  %s42 = scalar_lea.smem %s0, 21
  %s43 = sld [smem:[%s42]]
  %s44 = scalar_lea.smem %s0, 22
  %s45 = sld [smem:[%s44]]
  %s46 = scalar_lea.smem %s0, 23
  %s47 = sld [smem:[%s46]]
  %s48 = scalar_lea.smem %s0, 24
  %s49 = sld [smem:[%s48]]
  %s50 = scalar_lea.smem %s0, 25
  %s51 = sld [smem:[%s50]]
  %s52 = scalar_lea.smem %s0, 26
  %s53 = sld [smem:[%s52]]
  %s54 = scalar_lea.smem %s0, 27
  %s55 = sld [smem:[%s54]]
  %s56 = scalar_lea.smem %s0, 28
  %s57 = sld [smem:[%s56]]
  %s58 = scalar_lea.smem %s0, 29
  %s59 = sld [smem:[%s58]]
  %s60 = sld [smem:[#allocation0]]
  $region126: #{mcsat_forward_pallas.1} parent=0
    _
  %s62 = ssub.s32 1, %s60
  %s63 = scalar_select 0, %s62, %s60
  $region1: #{mcsat_forward_pallas.1} parent=0
    #allocation3 [shape = 'u8[1024]{0}', space=vmem, size = 0x400, scoped, tag = 'output window, operand 0, single buffered']
    #allocation4 [shape = 's32[1]{0}', space=sflag, size = 0x4, scoped, tag = 'scoped memory for mcsat_forward_pallas.1']
    %64 = vsyncpa [#allocation4], 0
    // Predicated region
    $region2: #{mcsat_forward_pallas.1} parent=1 // pred_check
      _
    $region3: #{mcsat_forward_pallas.1} parent=1 // pred_check_branch
      %66 = sbr.rel (0) target = $region5
    $region4: #{mcsat_forward_pallas.1} parent=1 // pred_region
      _
    $region5: #{mcsat_forward_pallas.1} parent=1 // pred_fallthru
      _
    // Predicated region
    $region6: #{mcsat_forward_pallas.1} parent=1 // pred_check
      _
    $region7: #{mcsat_forward_pallas.1} parent=1 // pred_check_branch
      %68 = sbr.rel (0) target = $region9
    $region8: #{mcsat_forward_pallas.1} parent=1 // pred_region
      _
    $region9: #{mcsat_forward_pallas.1} parent=1 // pred_fallthru
      _
    // Predicated region
    $region10: #{mcsat_forward_pallas.1} parent=1 // pred_check
      _
    $region11: #{mcsat_forward_pallas.1} parent=1 // pred_check_branch
      %70 = sbr.rel (0) target = $region13
    $region12: #{mcsat_forward_pallas.1} parent=1 // pred_region
      _
    $region13: #{mcsat_forward_pallas.1} parent=1 // pred_fallthru
      _
    // Predicated region
    $region14: #{mcsat_forward_pallas.1} parent=1 // pred_check
      _
    $region15: #{mcsat_forward_pallas.1} parent=1 // pred_check_branch
      %72 = sbr.rel (0) target = $region17
    $region16: #{mcsat_forward_pallas.1} parent=1 // pred_region
      _
    $region17: #{mcsat_forward_pallas.1} parent=1 // pred_fallthru
      _
    // Predicated region
    $region18: #{mcsat_forward_pallas.1} parent=1 // pred_check
      _
    $region19: #{mcsat_forward_pallas.1} parent=1 // pred_check_branch
      %74 = sbr.rel (0) target = $region21
    $region20: #{mcsat_forward_pallas.1} parent=1 // pred_region
      _
    $region21: #{mcsat_forward_pallas.1} parent=1 // pred_fallthru
      _
    // Predicated region
    $region22: #{mcsat_forward_pallas.1} parent=1 // pred_check
      _
    $region23: #{mcsat_forward_pallas.1} parent=1 // pred_check_branch
      %76 = sbr.rel (0) target = $region25
    $region24: #{mcsat_forward_pallas.1} parent=1 // pred_region
      _
    $region25: #{mcsat_forward_pallas.1} parent=1 // pred_fallthru
      _
    // Predicated region
    $region26: #{mcsat_forward_pallas.1} parent=1 // pred_check
      _
    $region27: #{mcsat_forward_pallas.1} parent=1 // pred_check_branch
      %78 = sbr.rel (0) target = $region29
    $region28: #{mcsat_forward_pallas.1} parent=1 // pred_region
      _
    $region29: #{mcsat_forward_pallas.1} parent=1 // pred_fallthru
      _
    // Predicated region
    $region30: #{mcsat_forward_pallas.1} parent=1 // pred_check
      _
    $region31: #{mcsat_forward_pallas.1} parent=1 // pred_check_branch
      %80 = sbr.rel (0) target = $region33
    $region32: #{mcsat_forward_pallas.1} parent=1 // pred_region
      _
    $region33: #{mcsat_forward_pallas.1} parent=1 // pred_fallthru
      _
    // Predicated region
    $region34: #{mcsat_forward_pallas.1} parent=1 // pred_check
      _
    $region35: #{mcsat_forward_pallas.1} parent=1 // pred_check_branch
      %82 = sbr.rel (0) target = $region37
    $region36: #{mcsat_forward_pallas.1} parent=1 // pred_region
      _
    $region37: #{mcsat_forward_pallas.1} parent=1 // pred_fallthru
      _
    // Predicated region
    $region38: #{mcsat_forward_pallas.1} parent=1 // pred_check
      _
    $region39: #{mcsat_forward_pallas.1} parent=1 // pred_check_branch
      %84 = sbr.rel (0) target = $region41
    $region40: #{mcsat_forward_pallas.1} parent=1 // pred_region
      _
    $region41: #{mcsat_forward_pallas.1} parent=1 // pred_fallthru
      _
    // Predicated region
    $region42: #{mcsat_forward_pallas.1} parent=1 // pred_check
      _
    $region43: #{mcsat_forward_pallas.1} parent=1 // pred_check_branch
      %86 = sbr.rel (0) target = $region45
    $region44: #{mcsat_forward_pallas.1} parent=1 // pred_region
      _
    $region45: #{mcsat_forward_pallas.1} parent=1 // pred_fallthru
      _
    // Predicated region
    $region46: #{mcsat_forward_pallas.1} parent=1 // pred_check
      _
    $region47: #{mcsat_forward_pallas.1} parent=1 // pred_check_branch
      %88 = sbr.rel (0) target = $region49
    $region48: #{mcsat_forward_pallas.1} parent=1 // pred_region
      _
    $region49: #{mcsat_forward_pallas.1} parent=1 // pred_fallthru
      _
    // Predicated region
    $region50: #{mcsat_forward_pallas.1} parent=1 // pred_check
      _
    $region51: #{mcsat_forward_pallas.1} parent=1 // pred_check_branch
      %90 = sbr.rel (0) target = $region53
    $region52: #{mcsat_forward_pallas.1} parent=1 // pred_region
      _
    $region53: #{mcsat_forward_pallas.1} parent=1 // pred_fallthru
      _
    // Predicated region
    $region54: #{mcsat_forward_pallas.1} parent=1 // pred_check
      _
    $region55: #{mcsat_forward_pallas.1} parent=1 // pred_check_branch
      %92 = sbr.rel (0) target = $region57
    $region56: #{mcsat_forward_pallas.1} parent=1 // pred_region
      _
    $region57: #{mcsat_forward_pallas.1} parent=1 // pred_fallthru
      _
    // Predicated region
    $region58: #{mcsat_forward_pallas.1} parent=1 // pred_check
      _
    $region59: #{mcsat_forward_pallas.1} parent=1 // pred_check_branch
      %94 = sbr.rel (0) target = $region61
    $region60: #{mcsat_forward_pallas.1} parent=1 // pred_region
      _
    $region61: #{mcsat_forward_pallas.1} parent=1 // pred_fallthru
      _
    // Predicated region
    $region62: #{mcsat_forward_pallas.1} parent=1 // pred_check
      _
    $region63: #{mcsat_forward_pallas.1} parent=1 // pred_check_branch
      %96 = sbr.rel (0) target = $region65
    $region64: #{mcsat_forward_pallas.1} parent=1 // pred_region
      _
    $region65: #{mcsat_forward_pallas.1} parent=1 // pred_fallthru
      _
    // Predicated region
    $region66: #{mcsat_forward_pallas.1} parent=1 // pred_check
      _
    $region67: #{mcsat_forward_pallas.1} parent=1 // pred_check_branch
      %98 = sbr.rel (0) target = $region69
    $region68: #{mcsat_forward_pallas.1} parent=1 // pred_region
      _
    $region69: #{mcsat_forward_pallas.1} parent=1 // pred_fallthru
      _
    // Predicated region
    $region70: #{mcsat_forward_pallas.1} parent=1 // pred_check
      _
    $region71: #{mcsat_forward_pallas.1} parent=1 // pred_check_branch
      %100 = sbr.rel (0) target = $region73
    $region72: #{mcsat_forward_pallas.1} parent=1 // pred_region
      _
    $region73: #{mcsat_forward_pallas.1} parent=1 // pred_fallthru
      _
    // Predicated region
    $region74: #{mcsat_forward_pallas.1} parent=1 // pred_check
      _
    $region75: #{mcsat_forward_pallas.1} parent=1 // pred_check_branch
      %102 = sbr.rel (0) target = $region77
    $region76: #{mcsat_forward_pallas.1} parent=1 // pred_region
      _
    $region77: #{mcsat_forward_pallas.1} parent=1 // pred_fallthru
      _
    // Predicated region
    $region78: #{mcsat_forward_pallas.1} parent=1 // pred_check
      _
    $region79: #{mcsat_forward_pallas.1} parent=1 // pred_check_branch
      %104 = sbr.rel (0) target = $region81
    $region80: #{mcsat_forward_pallas.1} parent=1 // pred_region
      _
    $region81: #{mcsat_forward_pallas.1} parent=1 // pred_fallthru
      _
    // Predicated region
    $region82: #{mcsat_forward_pallas.1} parent=1 // pred_check
      _
    $region83: #{mcsat_forward_pallas.1} parent=1 // pred_check_branch
      %106 = sbr.rel (0) target = $region85
    $region84: #{mcsat_forward_pallas.1} parent=1 // pred_region
      _
    $region85: #{mcsat_forward_pallas.1} parent=1 // pred_fallthru
      _
    // Predicated region
    $region86: #{mcsat_forward_pallas.1} parent=1 // pred_check
      _
    $region87: #{mcsat_forward_pallas.1} parent=1 // pred_check_branch
      %108 = sbr.rel (0) target = $region89
    $region88: #{mcsat_forward_pallas.1} parent=1 // pred_region
      _
    $region89: #{mcsat_forward_pallas.1} parent=1 // pred_fallthru
      _
    // Predicated region
    $region90: #{mcsat_forward_pallas.1} parent=1 // pred_check
      _
    $region91: #{mcsat_forward_pallas.1} parent=1 // pred_check_branch
      %110 = sbr.rel (0) target = $region93
    $region92: #{mcsat_forward_pallas.1} parent=1 // pred_region
      _
    $region93: #{mcsat_forward_pallas.1} parent=1 // pred_fallthru
      _
    // Predicated region
    $region94: #{mcsat_forward_pallas.1} parent=1 // pred_check
      _
    $region95: #{mcsat_forward_pallas.1} parent=1 // pred_check_branch
      %112 = sbr.rel (0) target = $region97
    $region96: #{mcsat_forward_pallas.1} parent=1 // pred_region
      _
    $region97: #{mcsat_forward_pallas.1} parent=1 // pred_fallthru
      _
    // Predicated region
    $region98: #{mcsat_forward_pallas.1} parent=1 // pred_check
      _
    $region99: #{mcsat_forward_pallas.1} parent=1 // pred_check_branch
      %114 = sbr.rel (0) target = $region101
    $region100: #{mcsat_forward_pallas.1} parent=1 // pred_region
      _
    $region101: #{mcsat_forward_pallas.1} parent=1 // pred_fallthru
      _
    // Predicated region
    $region102: #{mcsat_forward_pallas.1} parent=1 // pred_check
      _
    $region103: #{mcsat_forward_pallas.1} parent=1 // pred_check_branch
      %116 = sbr.rel (0) target = $region105
    $region104: #{mcsat_forward_pallas.1} parent=1 // pred_region
      _
    $region105: #{mcsat_forward_pallas.1} parent=1 // pred_fallthru
      _
    // Predicated region
    $region106: #{mcsat_forward_pallas.1} parent=1 // pred_check
      _
    $region107: #{mcsat_forward_pallas.1} parent=1 // pred_check_branch
      %118 = sbr.rel (0) target = $region109
    $region108: #{mcsat_forward_pallas.1} parent=1 // pred_region
      _
    $region109: #{mcsat_forward_pallas.1} parent=1 // pred_fallthru
      _
    // Predicated region
    $region110: #{mcsat_forward_pallas.1} parent=1 // pred_check
      _
    $region111: #{mcsat_forward_pallas.1} parent=1 // pred_check_branch
      %120 = sbr.rel (0) target = $region113
    $region112: #{mcsat_forward_pallas.1} parent=1 // pred_region
      _
    $region113: #{mcsat_forward_pallas.1} parent=1 // pred_fallthru
      _
    // Predicated region
    $region114: #{mcsat_forward_pallas.1} parent=1 // pred_check
      _
    $region115: #{mcsat_forward_pallas.1} parent=1 // pred_check_branch
      %122 = sbr.rel (0) target = $region117
    $region116: #{mcsat_forward_pallas.1} parent=1 // pred_region
      _
    $region117: #{mcsat_forward_pallas.1} parent=1 // pred_fallthru
      _
    %vm123 = vcmask 261120
    %124 = vst.msk [vmem:[#allocation2] sm:$0xff] %vm123, 0.0
    %125 = vst.msk [vmem:[#allocation2 + $0x8] sm:$0xff] %vm123, 0.0
    %126 = vst.msk [vmem:[#allocation2 + $0x10] sm:$0xff] %vm123, 0.0
    %127 = vst.msk [vmem:[#allocation2 + $0x18] sm:$0xff] %vm123, 0.0
    %128 = vst.msk [vmem:[#allocation2 + $0x20] sm:$0xff] %vm123, 0.0
    %129 = vst.msk [vmem:[#allocation2 + $0x28] sm:$0xff] %vm123, 0.0
    %130 = vst.msk [vmem:[#allocation2 + $0x30] sm:$0xff] %vm123, 0.0
    %131 = vst.msk [vmem:[#allocation2 + $0x38] sm:$0xff] %vm123, 0.0
    %132 = vst.msk [vmem:[#allocation2 + $0x40] sm:$0xff] %vm123, 0.0
    %133 = vst.msk [vmem:[#allocation2 + $0x48] sm:$0xff] %vm123, 0.0
    %134 = vst.msk [vmem:[#allocation2 + $0x50] sm:$0xff] %vm123, 0.0
    %135 = vst.msk [vmem:[#allocation2 + $0x58] sm:$0xff] %vm123, 0.0
    %136 = vst.msk [vmem:[#allocation2 + $0x60] sm:$0xff] %vm123, 0.0
    %137 = vst.msk [vmem:[#allocation2 + $0x68] sm:$0xff] %vm123, 0.0
    %138 = vst.msk [vmem:[#allocation2 + $0x70] sm:$0xff] %vm123, 0.0
    %139 = vst.msk [vmem:[#allocation2 + $0x78] sm:$0xff] %vm123, 0.0
    %vm140 = vcmask 259072
    %141 = vst.msk [vmem:[#allocation2 + $0x80] sm:$0x3f] %vm140, 0.0
    %v142 = vld [vmem:[%s1] sm:$0xff]
    %v143 = vld [vmem:[%s1 + $0x8] sm:$0xff]
    %v144 = vld [vmem:[%s1 + $0x10] sm:$0xff]
    %v145 = vld [vmem:[%s1 + $0x18] sm:$0xff]
    %v146 = vld [vmem:[%s1 + $0x20] sm:$0xff]
    %v147 = vld [vmem:[%s1 + $0x28] sm:$0xff]
    %v148 = vld [vmem:[%s1 + $0x30] sm:$0xff]
    %v149 = vld [vmem:[%s1 + $0x38] sm:$0xff]
    %150 = vst.msk [vmem:[#allocation2 + $0x2] sm:$0xff] %vm123, %v142
    %151 = vst.msk [vmem:[#allocation2 + $0xa] sm:$0xff] %vm123, %v143
    %152 = vst.msk [vmem:[#allocation2 + $0x12] sm:$0xff] %vm123, %v144
    %153 = vst.msk [vmem:[#allocation2 + $0x1a] sm:$0xff] %vm123, %v145
    %154 = vst.msk [vmem:[#allocation2 + $0x22] sm:$0xff] %vm123, %v146
    %155 = vst.msk [vmem:[#allocation2 + $0x2a] sm:$0xff] %vm123, %v147
    %156 = vst.msk [vmem:[#allocation2 + $0x32] sm:$0xff] %vm123, %v148
    %157 = vst.msk [vmem:[#allocation2 + $0x3a] sm:$0xff] %vm123, %v149
    %s158 = scalar_lea.vmem %s1, 64
    %v159 = vld [vmem:[%s158] sm:$0xff]
    %v160 = vld [vmem:[%s158 + $0x8] sm:$0xff]
    %v161 = vld [vmem:[%s158 + $0x10] sm:$0xff]
    %v162 = vld [vmem:[%s158 + $0x18] sm:$0xff]
    %v163 = vld [vmem:[%s158 + $0x20] sm:$0xff]
    %v164 = vld [vmem:[%s158 + $0x28] sm:$0xff]
    %v165 = vld [vmem:[%s158 + $0x30] sm:$0xff]
    %v166 = vld [vmem:[%s158 + $0x38] sm:$0xff]
    %167 = vst.msk [vmem:[#allocation2 + $0x44] sm:$0xff] %vm123, %v159
    %168 = vst.msk [vmem:[#allocation2 + $0x4c] sm:$0xff] %vm123, %v160
    %169 = vst.msk [vmem:[#allocation2 + $0x54] sm:$0xff] %vm123, %v161
    %170 = vst.msk [vmem:[#allocation2 + $0x5c] sm:$0xff] %vm123, %v162
    %171 = vst.msk [vmem:[#allocation2 + $0x64] sm:$0xff] %vm123, %v163
    %172 = vst.msk [vmem:[#allocation2 + $0x6c] sm:$0xff] %vm123, %v164
    %173 = vst.msk [vmem:[#allocation2 + $0x74] sm:$0xff] %vm123, %v165
    %174 = vst.msk [vmem:[#allocation2 + $0x7c] sm:$0xff] %vm123, %v166
    %v175 = vld [vmem:[%s7] sm:$0xff]
    %v176 = vld [vmem:[%s7 + $0x8] sm:$0xff]
    %v177 = vld [vmem:[%s7 + $0x10] sm:$0xff]
    %v178 = vld [vmem:[%s7 + $0x18] sm:$0xff]
    %v179 = vld [vmem:[%s7 + $0x20] sm:$0xff]
    %v180 = vld [vmem:[%s7 + $0x28] sm:$0xff]
    %v181 = vld [vmem:[%s7 + $0x30] sm:$0xff]
    %v182 = vld [vmem:[%s7 + $0x38] sm:$0xff]
    %v183 = vld [vmem:[%s7 + $0x40] sm:$0xff]
    %v184 = vld [vmem:[%s7 + $0x48] sm:$0xff]
    %v185 = vld [vmem:[%s7 + $0x50] sm:$0xff]
    %v186 = vld [vmem:[%s7 + $0x58] sm:$0xff]
    %v187 = vld [vmem:[%s7 + $0x60] sm:$0xff]
    %v188 = vld [vmem:[%s7 + $0x68] sm:$0xff]
    %v189 = vld [vmem:[%s7 + $0x70] sm:$0xff]
    %v190 = vld [vmem:[%s7 + $0x78] sm:$0xff]
    %v191 = vld [vmem:[%s7 + $0x80] sm:$0xf]
    %v192 = vld [vmem:[#allocation2] sm:$0xff]
    %v193 = vld [vmem:[#allocation2 + $0x8] sm:$0xff]
    %v194 = vld [vmem:[#allocation2 + $0x10] sm:$0xff]
    %v195 = vld [vmem:[#allocation2 + $0x18] sm:$0xff]
    %v196 = vld [vmem:[#allocation2 + $0x20] sm:$0xff]
    %v197 = vld [vmem:[#allocation2 + $0x28] sm:$0xff]
    %v198 = vld [vmem:[#allocation2 + $0x30] sm:$0xff]
    %v199 = vld [vmem:[#allocation2 + $0x38] sm:$0xff]
    %v200 = vld [vmem:[#allocation2 + $0x40] sm:$0xff]
    %v201 = vld [vmem:[#allocation2 + $0x48] sm:$0xff]
    %v202 = vld [vmem:[#allocation2 + $0x50] sm:$0xff]
    %v203 = vld [vmem:[#allocation2 + $0x58] sm:$0xff]
    %v204 = vld [vmem:[#allocation2 + $0x60] sm:$0xff]
    %v205 = vld [vmem:[#allocation2 + $0x68] sm:$0xff]
    %v206 = vld [vmem:[#allocation2 + $0x70] sm:$0xff]
    %v207 = vld [vmem:[#allocation2 + $0x78] sm:$0xff]
    %v208 = vld [vmem:[#allocation2 + $0x80] sm:$0xf]
    %v209 = vld [vmem:[%s3] sm:$0xff]
    %v210 = vld [vmem:[%s3 + $0x8] sm:$0xff]
    %v211 = vld [vmem:[%s3 + $0x10] sm:$0xff]
    %v212 = vld [vmem:[%s3 + $0x18] sm:$0xff]
    %v213 = vld [vmem:[#allocation2 + $0x1] sm:$0xff]
    %v214 = vld [vmem:[#allocation2 + $0x9] sm:$0xff]
    %v215 = vld [vmem:[#allocation2 + $0x11] sm:$0xff]
    %v216 = vld [vmem:[#allocation2 + $0x19] sm:$0xff]
    %v217 = vld [vmem:[#allocation2 + $0x21] sm:$0xff]
    %v218 = vld [vmem:[#allocation2 + $0x29] sm:$0xff]
    %v219 = vld [vmem:[#allocation2 + $0x31] sm:$0xff]
    %v220 = vld [vmem:[#allocation2 + $0x39] sm:$0xff]
    %v221 = vld [vmem:[#allocation2 + $0x41] sm:$0xff]
    %v222 = vld [vmem:[#allocation2 + $0x49] sm:$0xff]
    %v223 = vld [vmem:[#allocation2 + $0x51] sm:$0xff]
    %v224 = vld [vmem:[#allocation2 + $0x59] sm:$0xff]
    %v225 = vld [vmem:[#allocation2 + $0x61] sm:$0xff]
    %v226 = vld [vmem:[#allocation2 + $0x69] sm:$0xff]
    %v227 = vld [vmem:[#allocation2 + $0x71] sm:$0xff]
    %v228 = vld [vmem:[#allocation2 + $0x79] sm:$0xff]
    %v229 = vld [vmem:[#allocation2 + $0x81] sm:$0xf]
    %s230 = scalar_lea.vmem %s3, 32
    %v231 = vld [vmem:[%s230] sm:$0xff]
    %v232 = vld [vmem:[%s230 + $0x8] sm:$0xff]
    %v233 = vld [vmem:[%s230 + $0x10] sm:$0xff]
    %v234 = vld [vmem:[%s230 + $0x18] sm:$0xff]
    %v236 = vsel %vm123, %v213, 0
    %v239 = vsel %vm123, %v214, 0
    %v242 = vsel %vm123, %v215, 0
    %v245 = vsel %vm123, %v216, 0
    %v248 = vsel %vm123, %v217, 0
    %v251 = vsel %vm123, %v218, 0
    %v254 = vsel %vm123, %v219, 0
    %v257 = vsel %vm123, %v220, 0
    %v260 = vsel %vm123, %v221, 0
    %v263 = vsel %vm123, %v222, 0
    %v266 = vsel %vm123, %v223, 0
    %v269 = vsel %vm123, %v224, 0
    %v272 = vsel %vm123, %v225, 0
    %v275 = vsel %vm123, %v226, 0
    %v278 = vsel %vm123, %v227, 0
    %v281 = vsel %vm123, %v228, 0
    %v284 = vsel %vm123, %v229, 0
    %286 = vmatprep.subr.mxu0 0.0
    %287 = vmatpush1.msra.mxu0 %v231
    %288 = vmatprep.subr.mxu0 0.0
    %289 = vmatpush1.msra.mxu0 %v232
    %290 = vmatprep.subr.mxu0 0.0
    %291 = vmatpush1.msra.mxu0 %v233
    %292 = vmatprep.subr.mxu0 0.0
    %293 = vmatpush1.msra.mxu0 %v234
    %294 = vmatprep.subr.mxu0 0.0
    %295 = vmatpush1.msra.mxu0 0.0
    %296 = vmatprep.subr.mxu0 0.0
    %297 = vmatpush1.msra.mxu0 0.0
    %298 = vmatprep.subr.mxu0 0.0
    %299 = vmatpush1.msra.mxu0 0.0
    %300 = vmatprep.subr.mxu0 0.0
    %301 = vmatpush1.msra.mxu0 0.0
    %302 = vmatprep.subr.mxu0 0.0
    %303 = vmatpush1.msra.mxu0 0.0
    %304 = vmatprep.subr.mxu0 0.0
    %305 = vmatpush1.msra.mxu0 0.0
    %306 = vmatprep.subr.mxu0 0.0
    %307 = vmatpush1.msra.mxu0 0.0
    %308 = vmatprep.subr.mxu0 0.0
    %309 = vmatpush1.msra.mxu0 0.0
    %310 = vmatprep.subr.mxu0 0.0
    %311 = vmatpush1.msra.mxu0 0.0
    %312 = vmatprep.subr.mxu0 0.0
    %313 = vmatpush1.msra.mxu0 0.0
    %314 = vmatprep.subr.mxu0 0.0
    %315 = vmatpush1.msra.mxu0 0.0
    %316 = vmatprep.subr.mxu0 0.0
    %317 = vmatpush1.msra.mxu0 0.0
    %318 = vmatprep.subr.mxu0 0.0
    %319 = vmatpush1.msra.mxu0 0.0
    %320 = vmatprep.subr.mxu0 0.0
    %321 = vmatpush1.msra.mxu0 0.0
    %322 = vmatprep.subr.mxu0 0.0
    %323 = vmatpush1.msra.mxu0 0.0
    %324 = vmatprep.subr.mxu0 0.0
    %325 = vmatpush1.msra.mxu0 0.0
    %326 = vmatprep.subr.mxu0 0.0
    %327 = vmatpush1.msra.mxu0 0.0
    %328 = vmatprep.subr.mxu0 0.0
    %329 = vmatpush1.msra.mxu0 0.0
    %330 = vmatprep.subr.mxu0 0.0
    %331 = vmatpush1.msra.mxu0 0.0
    %332 = vmatprep.subr.mxu0 0.0
    %333 = vmatpush1.msra.mxu0 0.0
    %334 = vmatprep.subr.mxu0 0.0
    %335 = vmatpush1.msra.mxu0 0.0
    %336 = vmatprep.subr.mxu0 0.0
    %337 = vmatpush1.msra.mxu0 0.0
    %338 = vmatprep.subr.mxu0 0.0
    %339 = vmatpush1.msra.mxu0 0.0
    %340 = vmatprep.subr.mxu0 0.0
    %341 = vmatpush1.msra.mxu0 0.0
    %342 = vmatprep.subr.mxu0 0.0
    %343 = vmatpush1.msra.mxu0 0.0
    %344 = vmatprep.subr.mxu0 0.0
    %345 = vmatpush1.msra.mxu0 0.0
    %346 = vmatprep.subr.mxu0 0.0
    %347 = vmatpush1.msra.mxu0 0.0
    %348 = vmatprep.subr.mxu0 0.0
    %349 = vmatpush1.msra.mxu0 0.0
    %350 = vmatprep.mubr.f32.mxu0 0.0
    %351 = vmatmul.mubr.f32.gmra.mrb[0].mxu0 %v236
    %v352 = vpop.f32.mrb[0].mxu0
    %v353 = vadd.f32 0.0, %v352
    %v354 = vpop.f32.mrb[0].mxu0
    %355 = vmatprep.mubr.f32.mxu0 0.0
    %356 = vmatmul.mubr.f32.gmra.mrb[0].mxu0 %v239
    %v357 = vpop.f32.mrb[0].mxu0
    %v358 = vadd.f32 0.0, %v357
    %v359 = vpop.f32.mrb[0].mxu0
    %360 = vmatprep.mubr.f32.mxu0 0.0
    %361 = vmatmul.mubr.f32.gmra.mrb[0].mxu0 %v242
    %v362 = vpop.f32.mrb[0].mxu0
    %v363 = vadd.f32 0.0, %v362
    %v364 = vpop.f32.mrb[0].mxu0
    %365 = vmatprep.mubr.f32.mxu0 0.0
    %366 = vmatmul.mubr.f32.gmra.mrb[0].mxu0 %v245
    %v367 = vpop.f32.mrb[0].mxu0
    %v368 = vadd.f32 0.0, %v367
    %v369 = vpop.f32.mrb[0].mxu0
    %370 = vmatprep.mubr.f32.mxu0 0.0
    %371 = vmatmul.mubr.f32.gmra.mrb[0].mxu0 %v248
    %v372 = vpop.f32.mrb[0].mxu0
    %v373 = vadd.f32 0.0, %v372
    %v374 = vpop.f32.mrb[0].mxu0
    %375 = vmatprep.mubr.f32.mxu0 0.0
    %376 = vmatmul.mubr.f32.gmra.mrb[0].mxu0 %v251
    %v377 = vpop.f32.mrb[0].mxu0
    %v378 = vadd.f32 0.0, %v377
    %v379 = vpop.f32.mrb[0].mxu0
    %380 = vmatprep.mubr.f32.mxu0 0.0
    %381 = vmatmul.mubr.f32.gmra.mrb[0].mxu0 %v254
    %v382 = vpop.f32.mrb[0].mxu0
    %v383 = vadd.f32 0.0, %v382
    %v384 = vpop.f32.mrb[0].mxu0
    %385 = vmatprep.mubr.f32.mxu0 0.0
    %386 = vmatmul.mubr.f32.gmra.mrb[0].mxu0 %v257
    %v387 = vpop.f32.mrb[0].mxu0
    %v388 = vadd.f32 0.0, %v387
    %v389 = vpop.f32.mrb[0].mxu0
    %390 = vmatprep.mubr.f32.mxu0 0.0
    %391 = vmatmul.mubr.f32.gmra.mrb[0].mxu0 %v260
    %v392 = vpop.f32.mrb[0].mxu0
    %v393 = vadd.f32 0.0, %v392
    %v394 = vpop.f32.mrb[0].mxu0
    %395 = vmatprep.mubr.f32.mxu0 0.0
    %396 = vmatmul.mubr.f32.gmra.mrb[0].mxu0 %v263
    %v397 = vpop.f32.mrb[0].mxu0
    %v398 = vadd.f32 0.0, %v397
    %v399 = vpop.f32.mrb[0].mxu0
    %400 = vmatprep.mubr.f32.mxu0 0.0
    %401 = vmatmul.mubr.f32.gmra.mrb[0].mxu0 %v266
    %v402 = vpop.f32.mrb[0].mxu0
    %v403 = vadd.f32 0.0, %v402
    %v404 = vpop.f32.mrb[0].mxu0
    %405 = vmatprep.mubr.f32.mxu0 0.0
    %406 = vmatmul.mubr.f32.gmra.mrb[0].mxu0 %v269
    %v407 = vpop.f32.mrb[0].mxu0
    %v408 = vadd.f32 0.0, %v407
    %v409 = vpop.f32.mrb[0].mxu0
    %410 = vmatprep.mubr.f32.mxu0 0.0
    %411 = vmatmul.mubr.f32.gmra.mrb[0].mxu0 %v272
    %v412 = vpop.f32.mrb[0].mxu0
    %v413 = vadd.f32 0.0, %v412
    %v414 = vpop.f32.mrb[0].mxu0
    %415 = vmatprep.mubr.f32.mxu0 0.0
    %416 = vmatmul.mubr.f32.gmra.mrb[0].mxu0 %v275
    %v417 = vpop.f32.mrb[0].mxu0
    %v418 = vadd.f32 0.0, %v417
    %v419 = vpop.f32.mrb[0].mxu0
    %420 = vmatprep.mubr.f32.mxu0 0.0
    %421 = vmatmul.mubr.f32.gmra.mrb[0].mxu0 %v278
    %v422 = vpop.f32.mrb[0].mxu0
    %v423 = vadd.f32 0.0, %v422
    %v424 = vpop.f32.mrb[0].mxu0
    %425 = vmatprep.mubr.f32.mxu0 0.0
    %426 = vmatmul.mubr.f32.gmra.mrb[0].mxu0 %v281
    %v427 = vpop.f32.mrb[0].mxu0
    %v428 = vadd.f32 0.0, %v427
    %v429 = vpop.f32.mrb[0].mxu0
    %430 = vmatprep.mubr.f32.mxu0 0.0
    %431 = vmatmul.mubr.f32.gmra.mrb[0].mxu0 %v284
    %v432 = vpop.f32.mrb[0].mxu0
    %v433 = vadd.f32 0.0, %v432
    %v434 = vpop.f32.mrb[0].mxu0
    %435 = vdwg.mxu0
    %v437 = vsel %vm123, %v192, 0
    %v440 = vsel %vm123, %v193, 0
    %v443 = vsel %vm123, %v194, 0
    %v446 = vsel %vm123, %v195, 0
    %v449 = vsel %vm123, %v196, 0
    %v452 = vsel %vm123, %v197, 0
    %v455 = vsel %vm123, %v198, 0
    %v458 = vsel %vm123, %v199, 0
    %v461 = vsel %vm123, %v200, 0
    %v464 = vsel %vm123, %v201, 0
    %v467 = vsel %vm123, %v202, 0
    %v470 = vsel %vm123, %v203, 0
    %v473 = vsel %vm123, %v204, 0
    %v476 = vsel %vm123, %v205, 0
    %v479 = vsel %vm123, %v206, 0
    %v482 = vsel %vm123, %v207, 0
    %v485 = vsel %vm123, %v208, 0
    %487 = vmatprep.subr.mxu0 0.0
    %488 = vmatpush1.msra.mxu0 %v209
    %489 = vmatprep.subr.mxu0 0.0
    %490 = vmatpush1.msra.mxu0 %v210
    %491 = vmatprep.subr.mxu0 0.0
    %492 = vmatpush1.msra.mxu0 %v211
    %493 = vmatprep.subr.mxu0 0.0
    %494 = vmatpush1.msra.mxu0 %v212
    %495 = vmatprep.subr.mxu0 0.0
    %496 = vmatpush1.msra.mxu0 0.0
    %497 = vmatprep.subr.mxu0 0.0
    %498 = vmatpush1.msra.mxu0 0.0
    %499 = vmatprep.subr.mxu0 0.0
    %500 = vmatpush1.msra.mxu0 0.0
    %501 = vmatprep.subr.mxu0 0.0
    %502 = vmatpush1.msra.mxu0 0.0
    %503 = vmatprep.subr.mxu0 0.0
    %504 = vmatpush1.msra.mxu0 0.0
    %505 = vmatprep.subr.mxu0 0.0
    %506 = vmatpush1.msra.mxu0 0.0
    %507 = vmatprep.subr.mxu0 0.0
    %508 = vmatpush1.msra.mxu0 0.0
    %509 = vmatprep.subr.mxu0 0.0
    %510 = vmatpush1.msra.mxu0 0.0
    %511 = vmatprep.subr.mxu0 0.0
    %512 = vmatpush1.msra.mxu0 0.0
    %513 = vmatprep.subr.mxu0 0.0
    %514 = vmatpush1.msra.mxu0 0.0
    %515 = vmatprep.subr.mxu0 0.0
    %516 = vmatpush1.msra.mxu0 0.0
    %517 = vmatprep.subr.mxu0 0.0
    %518 = vmatpush1.msra.mxu0 0.0
    %519 = vmatprep.subr.mxu0 0.0
    %520 = vmatpush1.msra.mxu0 0.0
    %521 = vmatprep.subr.mxu0 0.0
    %522 = vmatpush1.msra.mxu0 0.0
    %523 = vmatprep.subr.mxu0 0.0
    %524 = vmatpush1.msra.mxu0 0.0
    %525 = vmatprep.subr.mxu0 0.0
    %526 = vmatpush1.msra.mxu0 0.0
    %527 = vmatprep.subr.mxu0 0.0
    %528 = vmatpush1.msra.mxu0 0.0
    %529 = vmatprep.subr.mxu0 0.0
    %530 = vmatpush1.msra.mxu0 0.0
    %531 = vmatprep.subr.mxu0 0.0
    %532 = vmatpush1.msra.mxu0 0.0
    %533 = vmatprep.subr.mxu0 0.0
    %534 = vmatpush1.msra.mxu0 0.0
    %535 = vmatprep.subr.mxu0 0.0
    %536 = vmatpush1.msra.mxu0 0.0
    %537 = vmatprep.subr.mxu0 0.0
    %538 = vmatpush1.msra.mxu0 0.0
    %539 = vmatprep.subr.mxu0 0.0
    %540 = vmatpush1.msra.mxu0 0.0
    %541 = vmatprep.subr.mxu0 0.0
    %542 = vmatpush1.msra.mxu0 0.0
    %543 = vmatprep.subr.mxu0 0.0
    %544 = vmatpush1.msra.mxu0 0.0
    %545 = vmatprep.subr.mxu0 0.0
    %546 = vmatpush1.msra.mxu0 0.0
    %547 = vmatprep.subr.mxu0 0.0
    %548 = vmatpush1.msra.mxu0 0.0
    %549 = vmatprep.subr.mxu0 0.0
    %550 = vmatpush1.msra.mxu0 0.0
    %551 = vmatprep.mubr.f32.mxu0 0.0
    %552 = vmatmul.mubr.f32.gmra.mrb[0].mxu0 %v437
    %v553 = vpop.f32.mrb[0].mxu0
    %v554 = vadd.f32 %v353, %v553
    %v555 = vpop.f32.mrb[0].mxu0
    %556 = vmatprep.mubr.f32.mxu0 0.0
    %557 = vmatmul.mubr.f32.gmra.mrb[0].mxu0 %v440
    %v558 = vpop.f32.mrb[0].mxu0
    %v559 = vadd.f32 %v358, %v558
    %v560 = vpop.f32.mrb[0].mxu0
    %561 = vmatprep.mubr.f32.mxu0 0.0
    %562 = vmatmul.mubr.f32.gmra.mrb[0].mxu0 %v443
    %v563 = vpop.f32.mrb[0].mxu0
    %v564 = vadd.f32 %v363, %v563
    %v565 = vpop.f32.mrb[0].mxu0
    %566 = vmatprep.mubr.f32.mxu0 0.0
    %567 = vmatmul.mubr.f32.gmra.mrb[0].mxu0 %v446
    %v568 = vpop.f32.mrb[0].mxu0
    %v569 = vadd.f32 %v368, %v568
    %v570 = vpop.f32.mrb[0].mxu0
    %571 = vmatprep.mubr.f32.mxu0 0.0
    %572 = vmatmul.mubr.f32.gmra.mrb[0].mxu0 %v449
    %v573 = vpop.f32.mrb[0].mxu0
    %v574 = vadd.f32 %v373, %v573
    %v575 = vpop.f32.mrb[0].mxu0
    %576 = vmatprep.mubr.f32.mxu0 0.0
    %577 = vmatmul.mubr.f32.gmra.mrb[0].mxu0 %v452
    %v578 = vpop.f32.mrb[0].mxu0
    %v579 = vadd.f32 %v378, %v578
    %v580 = vpop.f32.mrb[0].mxu0
    %581 = vmatprep.mubr.f32.mxu0 0.0
    %582 = vmatmul.mubr.f32.gmra.mrb[0].mxu0 %v455
    %v583 = vpop.f32.mrb[0].mxu0
    %v584 = vadd.f32 %v383, %v583
    %v585 = vpop.f32.mrb[0].mxu0
    %586 = vmatprep.mubr.f32.mxu0 0.0
    %587 = vmatmul.mubr.f32.gmra.mrb[0].mxu0 %v458
    %v588 = vpop.f32.mrb[0].mxu0
    %v589 = vadd.f32 %v388, %v588
    %v590 = vpop.f32.mrb[0].mxu0
    %591 = vmatprep.mubr.f32.mxu0 0.0
    %592 = vmatmul.mubr.f32.gmra.mrb[0].mxu0 %v461
    %v593 = vpop.f32.mrb[0].mxu0
    %v594 = vadd.f32 %v393, %v593
    %v595 = vpop.f32.mrb[0].mxu0
    %596 = vmatprep.mubr.f32.mxu0 0.0
    %597 = vmatmul.mubr.f32.gmra.mrb[0].mxu0 %v464
    %v598 = vpop.f32.mrb[0].mxu0
    %v599 = vadd.f32 %v398, %v598
    %v600 = vpop.f32.mrb[0].mxu0
    %601 = vmatprep.mubr.f32.mxu0 0.0
    %602 = vmatmul.mubr.f32.gmra.mrb[0].mxu0 %v467
    %v603 = vpop.f32.mrb[0].mxu0
    %v604 = vadd.f32 %v403, %v603
    %v605 = vpop.f32.mrb[0].mxu0
    %606 = vmatprep.mubr.f32.mxu0 0.0
    %607 = vmatmul.mubr.f32.gmra.mrb[0].mxu0 %v470
    %v608 = vpop.f32.mrb[0].mxu0
    %v609 = vadd.f32 %v408, %v608
    %v610 = vpop.f32.mrb[0].mxu0
    %611 = vmatprep.mubr.f32.mxu0 0.0
    %612 = vmatmul.mubr.f32.gmra.mrb[0].mxu0 %v473
    %v613 = vpop.f32.mrb[0].mxu0
    %v614 = vadd.f32 %v413, %v613
    %v615 = vpop.f32.mrb[0].mxu0
    %616 = vmatprep.mubr.f32.mxu0 0.0
    %617 = vmatmul.mubr.f32.gmra.mrb[0].mxu0 %v476
    %v618 = vpop.f32.mrb[0].mxu0
    %v619 = vadd.f32 %v418, %v618
    %v620 = vpop.f32.mrb[0].mxu0
    %621 = vmatprep.mubr.f32.mxu0 0.0
    %622 = vmatmul.mubr.f32.gmra.mrb[0].mxu0 %v479
    %v623 = vpop.f32.mrb[0].mxu0
    %v624 = vadd.f32 %v423, %v623
    %v625 = vpop.f32.mrb[0].mxu0
    %626 = vmatprep.mubr.f32.mxu0 0.0
    %627 = vmatmul.mubr.f32.gmra.mrb[0].mxu0 %v482
    %v628 = vpop.f32.mrb[0].mxu0
    %v629 = vadd.f32 %v428, %v628
    %v630 = vpop.f32.mrb[0].mxu0
    %631 = vmatprep.mubr.f32.mxu0 0.0
    %632 = vmatmul.mubr.f32.gmra.mrb[0].mxu0 %v485
    %v633 = vpop.f32.mrb[0].mxu0
    %v634 = vadd.f32 %v433, %v633
    %v635 = vpop.f32.mrb[0].mxu0
    %636 = vdwg.mxu0
    %v637 = vld [vmem:[#allocation2 + $0x2] sm:$0xff]
    %v638 = vld [vmem:[#allocation2 + $0xa] sm:$0xff]
    %v639 = vld [vmem:[#allocation2 + $0x12] sm:$0xff]
    %v640 = vld [vmem:[#allocation2 + $0x1a] sm:$0xff]
    %v641 = vld [vmem:[#allocation2 + $0x22] sm:$0xff]
    %v642 = vld [vmem:[#allocation2 + $0x2a] sm:$0xff]
    %v643 = vld [vmem:[#allocation2 + $0x32] sm:$0xff]
    %v644 = vld [vmem:[#allocation2 + $0x3a] sm:$0xff]
    %v645 = vld [vmem:[#allocation2 + $0x42] sm:$0xff]
    %v646 = vld [vmem:[#allocation2 + $0x4a] sm:$0xff]
    %v647 = vld [vmem:[#allocation2 + $0x52] sm:$0xff]
    %v648 = vld [vmem:[#allocation2 + $0x5a] sm:$0xff]
    %v649 = vld [vmem:[#allocation2 + $0x62] sm:$0xff]
    %v650 = vld [vmem:[#allocation2 + $0x6a] sm:$0xff]
    %v651 = vld [vmem:[#allocation2 + $0x72] sm:$0xff]
    %v652 = vld [vmem:[#allocation2 + $0x7a] sm:$0xff]
    %v653 = vld [vmem:[#allocation2 + $0x82] sm:$0xf]
    %s654 = scalar_lea.vmem %s3, 64
    %v655 = vld [vmem:[%s654] sm:$0xff]
    %v656 = vld [vmem:[%s654 + $0x8] sm:$0xff]
    %v657 = vld [vmem:[%s654 + $0x10] sm:$0xff]
    %v658 = vld [vmem:[%s654 + $0x18] sm:$0xff]
    %v660 = vsel %vm123, %v637, 0
    %v663 = vsel %vm123, %v638, 0
    %v666 = vsel %vm123, %v639, 0
    %v669 = vsel %vm123, %v640, 0
    %v672 = vsel %vm123, %v641, 0
    %v675 = vsel %vm123, %v642, 0
    %v678 = vsel %vm123, %v643, 0
    %v681 = vsel %vm123, %v644, 0
    %v684 = vsel %vm123, %v645, 0
    %v687 = vsel %vm123, %v646, 0
    %v690 = vsel %vm123, %v647, 0
    %v693 = vsel %vm123, %v648, 0
    %v696 = vsel %vm123, %v649, 0
    %v699 = vsel %vm123, %v650, 0
    %v702 = vsel %vm123, %v651, 0
    %v705 = vsel %vm123, %v652, 0
    %v708 = vsel %vm123, %v653, 0
    %710 = vmatprep.subr.mxu0 0.0
    %711 = vmatpush1.msra.mxu0 %v655
    %712 = vmatprep.subr.mxu0 0.0
    %713 = vmatpush1.msra.mxu0 %v656
    %714 = vmatprep.subr.mxu0 0.0
    %715 = vmatpush1.msra.mxu0 %v657
    %716 = vmatprep.subr.mxu0 0.0
    %717 = vmatpush1.msra.mxu0 %v658
    %718 = vmatprep.subr.mxu0 0.0
    %719 = vmatpush1.msra.mxu0 0.0
    %720 = vmatprep.subr.mxu0 0.0
    %721 = vmatpush1.msra.mxu0 0.0
    %722 = vmatprep.subr.mxu0 0.0
    %723 = vmatpush1.msra.mxu0 0.0
    %724 = vmatprep.subr.mxu0 0.0
    %725 = vmatpush1.msra.mxu0 0.0
    %726 = vmatprep.subr.mxu0 0.0
    %727 = vmatpush1.msra.mxu0 0.0
    %728 = vmatprep.subr.mxu0 0.0
    %729 = vmatpush1.msra.mxu0 0.0
    %730 = vmatprep.subr.mxu0 0.0
    %731 = vmatpush1.msra.mxu0 0.0
    %732 = vmatprep.subr.mxu0 0.0
    %733 = vmatpush1.msra.mxu0 0.0
    %734 = vmatprep.subr.mxu0 0.0
    %735 = vmatpush1.msra.mxu0 0.0
    %736 = vmatprep.subr.mxu0 0.0
    %737 = vmatpush1.msra.mxu0 0.0
    %738 = vmatprep.subr.mxu0 0.0
    %739 = vmatpush1.msra.mxu0 0.0
    %740 = vmatprep.subr.mxu0 0.0
    %741 = vmatpush1.msra.mxu0 0.0
    %742 = vmatprep.subr.mxu0 0.0
    %743 = vmatpush1.msra.mxu0 0.0
    %744 = vmatprep.subr.mxu0 0.0
    %745 = vmatpush1.msra.mxu0 0.0
    %746 = vmatprep.subr.mxu0 0.0
    %747 = vmatpush1.msra.mxu0 0.0
    %748 = vmatprep.subr.mxu0 0.0
    %749 = vmatpush1.msra.mxu0 0.0
    %750 = vmatprep.subr.mxu0 0.0
    %751 = vmatpush1.msra.mxu0 0.0
    %752 = vmatprep.subr.mxu0 0.0
    %753 = vmatpush1.msra.mxu0 0.0
    %754 = vmatprep.subr.mxu0 0.0
    %755 = vmatpush1.msra.mxu0 0.0
    %756 = vmatprep.subr.mxu0 0.0
    %757 = vmatpush1.msra.mxu0 0.0
    %758 = vmatprep.subr.mxu0 0.0
    %759 = vmatpush1.msra.mxu0 0.0
    %760 = vmatprep.subr.mxu0 0.0
    %761 = vmatpush1.msra.mxu0 0.0
    %762 = vmatprep.subr.mxu0 0.0
    %763 = vmatpush1.msra.mxu0 0.0
    %764 = vmatprep.subr.mxu0 0.0
    %765 = vmatpush1.msra.mxu0 0.0
    %766 = vmatprep.subr.mxu0 0.0
    %767 = vmatpush1.msra.mxu0 0.0
    %768 = vmatprep.subr.mxu0 0.0
    %769 = vmatpush1.msra.mxu0 0.0
    %770 = vmatprep.subr.mxu0 0.0
    %771 = vmatpush1.msra.mxu0 0.0
    %772 = vmatprep.subr.mxu0 0.0
    %773 = vmatpush1.msra.mxu0 0.0
    %774 = vmatprep.mubr.f32.mxu0 0.0
    %775 = vmatmul.mubr.f32.gmra.mrb[0].mxu0 %v660
    %v776 = vpop.f32.mrb[0].mxu0
    %v777 = vadd.f32 0.0, %v776
    %v778 = vpop.f32.mrb[0].mxu0
    %779 = vmatprep.mubr.f32.mxu0 0.0
    %780 = vmatmul.mubr.f32.gmra.mrb[0].mxu0 %v663
    %v781 = vpop.f32.mrb[0].mxu0
    %v782 = vadd.f32 0.0, %v781
    %v783 = vpop.f32.mrb[0].mxu0
    %784 = vmatprep.mubr.f32.mxu0 0.0
    %785 = vmatmul.mubr.f32.gmra.mrb[0].mxu0 %v666
    %v786 = vpop.f32.mrb[0].mxu0
    %v787 = vadd.f32 0.0, %v786
    %v788 = vpop.f32.mrb[0].mxu0
    %789 = vmatprep.mubr.f32.mxu0 0.0
    %790 = vmatmul.mubr.f32.gmra.mrb[0].mxu0 %v669
    %v791 = vpop.f32.mrb[0].mxu0
    %v792 = vadd.f32 0.0, %v791
    %v793 = vpop.f32.mrb[0].mxu0
    %794 = vmatprep.mubr.f32.mxu0 0.0
    %795 = vmatmul.mubr.f32.gmra.mrb[0].mxu0 %v672
    %v796 = vpop.f32.mrb[0].mxu0
    %v797 = vadd.f32 0.0, %v796
    %v798 = vpop.f32.mrb[0].mxu0
    %799 = vmatprep.mubr.f32.mxu0 0.0
    %800 = vmatmul.mubr.f32.gmra.mrb[0].mxu0 %v675
    %v801 = vpop.f32.mrb[0].mxu0
    %v802 = vadd.f32 0.0, %v801
    %v803 = vpop.f32.mrb[0].mxu0
    %804 = vmatprep.mubr.f32.mxu0 0.0
    %805 = vmatmul.mubr.f32.gmra.mrb[0].mxu0 %v678
    %v806 = vpop.f32.mrb[0].mxu0
    %v807 = vadd.f32 0.0, %v806
    %v808 = vpop.f32.mrb[0].mxu0
    %809 = vmatprep.mubr.f32.mxu0 0.0
    %810 = vmatmul.mubr.f32.gmra.mrb[0].mxu0 %v681
    %v811 = vpop.f32.mrb[0].mxu0
    %v812 = vadd.f32 0.0, %v811
    %v813 = vpop.f32.mrb[0].mxu0
    %814 = vmatprep.mubr.f32.mxu0 0.0
    %815 = vmatmul.mubr.f32.gmra.mrb[0].mxu0 %v684
    %v816 = vpop.f32.mrb[0].mxu0
    %v817 = vadd.f32 0.0, %v816
    %v818 = vpop.f32.mrb[0].mxu0
    %819 = vmatprep.mubr.f32.mxu0 0.0
    %820 = vmatmul.mubr.f32.gmra.mrb[0].mxu0 %v687
    %v821 = vpop.f32.mrb[0].mxu0
    %v822 = vadd.f32 0.0, %v821
    %v823 = vpop.f32.mrb[0].mxu0
    %824 = vmatprep.mubr.f32.mxu0 0.0
    %825 = vmatmul.mubr.f32.gmra.mrb[0].mxu0 %v690
    %v826 = vpop.f32.mrb[0].mxu0
    %v827 = vadd.f32 0.0, %v826
    %v828 = vpop.f32.mrb[0].mxu0
    %829 = vmatprep.mubr.f32.mxu0 0.0
    %830 = vmatmul.mubr.f32.gmra.mrb[0].mxu0 %v693
    %v831 = vpop.f32.mrb[0].mxu0
    %v832 = vadd.f32 0.0, %v831
    %v833 = vpop.f32.mrb[0].mxu0
    %834 = vmatprep.mubr.f32.mxu0 0.0
    %835 = vmatmul.mubr.f32.gmra.mrb[0].mxu0 %v696
    %v836 = vpop.f32.mrb[0].mxu0
    %v837 = vadd.f32 0.0, %v836
    %v838 = vpop.f32.mrb[0].mxu0
    %839 = vmatprep.mubr.f32.mxu0 0.0
    %840 = vmatmul.mubr.f32.gmra.mrb[0].mxu0 %v699
    %v841 = vpop.f32.mrb[0].mxu0
    %v842 = vadd.f32 0.0, %v841
    %v843 = vpop.f32.mrb[0].mxu0
    %844 = vmatprep.mubr.f32.mxu0 0.0
    %845 = vmatmul.mubr.f32.gmra.mrb[0].mxu0 %v702
    %v846 = vpop.f32.mrb[0].mxu0
    %v847 = vadd.f32 0.0, %v846
    %v848 = vpop.f32.mrb[0].mxu0
    %849 = vmatprep.mubr.f32.mxu0 0.0
    %850 = vmatmul.mubr.f32.gmra.mrb[0].mxu0 %v705
    %v851 = vpop.f32.mrb[0].mxu0
    %v852 = vadd.f32 0.0, %v851
    %v853 = vpop.f32.mrb[0].mxu0
    %854 = vmatprep.mubr.f32.mxu0 0.0
    %855 = vmatmul.mubr.f32.gmra.mrb[0].mxu0 %v708
    %v856 = vpop.f32.mrb[0].mxu0
    %v857 = vadd.f32 0.0, %v856
    %v858 = vpop.f32.mrb[0].mxu0
    %859 = vdwg.mxu0
    %v860 = vadd.f32 %v554, %v777
    %v861 = vadd.f32 %v559, %v782
    %v862 = vadd.f32 %v564, %v787
    %v863 = vadd.f32 %v569, %v792
    %v864 = vadd.f32 %v574, %v797
    %v865 = vadd.f32 %v579, %v802
    %v866 = vadd.f32 %v584, %v807
    %v867 = vadd.f32 %v589, %v812
    %v868 = vadd.f32 %v594, %v817
    %v869 = vadd.f32 %v599, %v822
    %v870 = vadd.f32 %v604, %v827
    %v871 = vadd.f32 %v609, %v832
    %v872 = vadd.f32 %v614, %v837
    %v873 = vadd.f32 %v619, %v842
    %v874 = vadd.f32 %v624, %v847
    %v875 = vadd.f32 %v629, %v852
    %v876 = vadd.f32 %v634, %v857
    %v877 = vld [vmem:[%s5] sm:$0x1]
    %v879 = vlaneseq
    %v880 = vshrl.u32 %v879, 7
    %v881 = vsub.s32 0, %v880
    %v882 = vrot.slane %v877, %v881
    %v884 = vadd.f32 %v860, %v882
    %v885 = vadd.f32 %v861, %v882
    %v886 = vadd.f32 %v862, %v882
    %v887 = vadd.f32 %v863, %v882
    %v888 = vadd.f32 %v864, %v882
    %v889 = vadd.f32 %v865, %v882
    %v890 = vadd.f32 %v866, %v882
    %v891 = vadd.f32 %v867, %v882
    %v892 = vadd.f32 %v868, %v882
    %v893 = vadd.f32 %v869, %v882
    %v894 = vadd.f32 %v870, %v882
    %v895 = vadd.f32 %v871, %v882
    %v896 = vadd.f32 %v872, %v882
    %v897 = vadd.f32 %v873, %v882
    %v898 = vadd.f32 %v874, %v882
    %v899 = vadd.f32 %v875, %v882
    %v900 = vadd.f32 %v876, %v882
    %v901 = vmul.f32 %v884, 0.999995
    %v902 = vmul.f32 %v885, 0.999995
    %v903 = vmul.f32 %v886, 0.999995
    %v904 = vmul.f32 %v887, 0.999995
    %v905 = vmul.f32 %v888, 0.999995
    %v906 = vmul.f32 %v889, 0.999995
    %v907 = vmul.f32 %v890, 0.999995
    %v908 = vmul.f32 %v891, 0.999995
    %v909 = vmul.f32 %v892, 0.999995
    %v910 = vmul.f32 %v893, 0.999995
    %v911 = vmul.f32 %v894, 0.999995
    %v912 = vmul.f32 %v895, 0.999995
    %v913 = vmul.f32 %v896, 0.999995
    %v914 = vmul.f32 %v897, 0.999995
    %v915 = vmul.f32 %v898, 0.999995
    %v916 = vmul.f32 %v899, 0.999995
    %v917 = vmul.f32 %v900, 0.999995
    %v918 = vmax.f32 %v901, 0.0
    %v919 = vmax.f32 %v902, 0.0
    %v920 = vmax.f32 %v903, 0.0
    %v921 = vmax.f32 %v904, 0.0
    %v922 = vmax.f32 %v905, 0.0
    %v923 = vmax.f32 %v906, 0.0
    %v924 = vmax.f32 %v907, 0.0
    %v925 = vmax.f32 %v908, 0.0
    %v926 = vmax.f32 %v909, 0.0
    %v927 = vmax.f32 %v910, 0.0
    %v928 = vmax.f32 %v911, 0.0
    %v929 = vmax.f32 %v912, 0.0
    %v930 = vmax.f32 %v913, 0.0
    %v931 = vmax.f32 %v914, 0.0
    %v932 = vmax.f32 %v915, 0.0
    %v933 = vmax.f32 %v916, 0.0
    %v934 = vmax.f32 %v917, 0.0
    %936 = vset.pattern.permute.xlu0 0
    %937 = vperm.xlu0 %936, %v175
    %v938 = vpop.permute.xlu0 %937
    %941 = vset.pattern.permute.xlu0 0
    %942 = vperm.xlu0 %941, %v176
    %v943 = vpop.permute.xlu0 %942
    %946 = vset.pattern.permute.xlu0 0
    %947 = vperm.xlu0 %946, %v177
    %v948 = vpop.permute.xlu0 %947
    %951 = vset.pattern.permute.xlu0 0
    %952 = vperm.xlu0 %951, %v178
    %v953 = vpop.permute.xlu0 %952
    %956 = vset.pattern.permute.xlu0 0
    %957 = vperm.xlu0 %956, %v179
    %v958 = vpop.permute.xlu0 %957
    %961 = vset.pattern.permute.xlu0 0
    %962 = vperm.xlu0 %961, %v180
    %v963 = vpop.permute.xlu0 %962
    %966 = vset.pattern.permute.xlu0 0
    %967 = vperm.xlu0 %966, %v181
    %v968 = vpop.permute.xlu0 %967
    %971 = vset.pattern.permute.xlu0 0
    %972 = vperm.xlu0 %971, %v182
    %v973 = vpop.permute.xlu0 %972
    %976 = vset.pattern.permute.xlu0 0
    %977 = vperm.xlu0 %976, %v183
    %v978 = vpop.permute.xlu0 %977
    %981 = vset.pattern.permute.xlu0 0
    %982 = vperm.xlu0 %981, %v184
    %v983 = vpop.permute.xlu0 %982
    %986 = vset.pattern.permute.xlu0 0
    %987 = vperm.xlu0 %986, %v185
    %v988 = vpop.permute.xlu0 %987
    %991 = vset.pattern.permute.xlu0 0
    %992 = vperm.xlu0 %991, %v186
    %v993 = vpop.permute.xlu0 %992
    %996 = vset.pattern.permute.xlu0 0
    %997 = vperm.xlu0 %996, %v187
    %v998 = vpop.permute.xlu0 %997
    %1001 = vset.pattern.permute.xlu0 0
    %1002 = vperm.xlu0 %1001, %v188
    %v1003 = vpop.permute.xlu0 %1002
    %1006 = vset.pattern.permute.xlu0 0
    %1007 = vperm.xlu0 %1006, %v189
    %v1008 = vpop.permute.xlu0 %1007
    %1011 = vset.pattern.permute.xlu0 0
    %1012 = vperm.xlu0 %1011, %v190
    %v1013 = vpop.permute.xlu0 %1012
    %1016 = vset.pattern.permute.xlu0 0
    %1017 = vperm.xlu0 %1016, %v191
    %v1018 = vpop.permute.xlu0 %1017
    %v1020 = vmul.f32 %v918, %v938
    %v1021 = vmul.f32 %v919, %v943
    %v1022 = vmul.f32 %v920, %v948
    %v1023 = vmul.f32 %v921, %v953
    %v1024 = vmul.f32 %v922, %v958
    %v1025 = vmul.f32 %v923, %v963
    %v1026 = vmul.f32 %v924, %v968
    %v1027 = vmul.f32 %v925, %v973
    %v1028 = vmul.f32 %v926, %v978
    %v1029 = vmul.f32 %v927, %v983
    %v1030 = vmul.f32 %v928, %v988
    %v1031 = vmul.f32 %v929, %v993
    %v1032 = vmul.f32 %v930, %v998
    %v1033 = vmul.f32 %v931, %v1003
    %v1034 = vmul.f32 %v932, %v1008
    %v1035 = vmul.f32 %v933, %v1013
    %v1036 = vmul.f32 %v934, %v1018
    %1037 = vst.msk [vmem:[#allocation2 + $0x1] sm:$0xff] %vm123, %v1020
    %1038 = vst.msk [vmem:[#allocation2 + $0x9] sm:$0xff] %vm123, %v1021
    %1039 = vst.msk [vmem:[#allocation2 + $0x11] sm:$0xff] %vm123, %v1022
    %1040 = vst.msk [vmem:[#allocation2 + $0x19] sm:$0xff] %vm123, %v1023
    %1041 = vst.msk [vmem:[#allocation2 + $0x21] sm:$0xff] %vm123, %v1024
    %1042 = vst.msk [vmem:[#allocation2 + $0x29] sm:$0xff] %vm123, %v1025
    %1043 = vst.msk [vmem:[#allocation2 + $0x31] sm:$0xff] %vm123, %v1026
    %1044 = vst.msk [vmem:[#allocation2 + $0x39] sm:$0xff] %vm123, %v1027
    %1045 = vst.msk [vmem:[#allocation2 + $0x41] sm:$0xff] %vm123, %v1028
    %1046 = vst.msk [vmem:[#allocation2 + $0x49] sm:$0xff] %vm123, %v1029
    %1047 = vst.msk [vmem:[#allocation2 + $0x51] sm:$0xff] %vm123, %v1030
    %1048 = vst.msk [vmem:[#allocation2 + $0x59] sm:$0xff] %vm123, %v1031
    %1049 = vst.msk [vmem:[#allocation2 + $0x61] sm:$0xff] %vm123, %v1032
    %1050 = vst.msk [vmem:[#allocation2 + $0x69] sm:$0xff] %vm123, %v1033
    %1051 = vst.msk [vmem:[#allocation2 + $0x71] sm:$0xff] %vm123, %v1034
    %1052 = vst.msk [vmem:[#allocation2 + $0x79] sm:$0xff] %vm123, %v1035
    %vm1053 = vcmask 257024
    %1054 = vst.msk [vmem:[#allocation2 + $0x81] sm:$0xf] %vm1053, %v1036
    %v1055 = vld [vmem:[#allocation2] sm:$0xff]
    %v1056 = vld [vmem:[#allocation2 + $0x8] sm:$0xff]
    %v1057 = vld [vmem:[#allocation2 + $0x10] sm:$0xff]
    %v1058 = vld [vmem:[#allocation2 + $0x18] sm:$0xff]
    %v1059 = vld [vmem:[#allocation2 + $0x20] sm:$0xff]
    %v1060 = vld [vmem:[#allocation2 + $0x28] sm:$0xff]
    %v1061 = vld [vmem:[#allocation2 + $0x30] sm:$0xff]
    %v1062 = vld [vmem:[#allocation2 + $0x38] sm:$0xff]
    %v1063 = vld [vmem:[#allocation2 + $0x40] sm:$0xff]
    %v1064 = vld [vmem:[#allocation2 + $0x48] sm:$0xff]
    %v1065 = vld [vmem:[#allocation2 + $0x50] sm:$0xff]
    %v1066 = vld [vmem:[#allocation2 + $0x58] sm:$0xff]
    %v1067 = vld [vmem:[#allocation2 + $0x60] sm:$0xff]
    %v1068 = vld [vmem:[#allocation2 + $0x68] sm:$0xff]
    %v1069 = vld [vmem:[#allocation2 + $0x70] sm:$0xff]
    %v1070 = vld [vmem:[#allocation2 + $0x78] sm:$0xff]
    %v1071 = vld [vmem:[#allocation2 + $0x80] sm:$0xf]
    %s1072 = scalar_lea.vmem %s3, 96
    %v1073 = vld [vmem:[%s1072] sm:$0xff]
    %v1074 = vld [vmem:[%s1072 + $0x8] sm:$0xff]
    %v1075 = vld [vmem:[%s1072 + $0x10] sm:$0xff]
    %v1076 = vld [vmem:[%s1072 + $0x18] sm:$0xff]
    %v1077 = vld [vmem:[#allocation2 + $0x1] sm:$0xff]
    %v1078 = vld [vmem:[#allocation2 + $0x9] sm:$0xff]
    %v1079 = vld [vmem:[#allocation2 + $0x11] sm:$0xff]
    %v1080 = vld [vmem:[#allocation2 + $0x19] sm:$0xff]
    %v1081 = vld [vmem:[#allocation2 + $0x21] sm:$0xff]
    %v1082 = vld [vmem:[#allocation2 + $0x29] sm:$0xff]
    %v1083 = vld [vmem:[#allocation2 + $0x31] sm:$0xff]
    %v1084 = vld [vmem:[#allocation2 + $0x39] sm:$0xff]
    %v1085 = vld [vmem:[#allocation2 + $0x41] sm:$0xff]
    %v1086 = vld [vmem:[#allocation2 + $0x49] sm:$0xff]
    %v1087 = vld [vmem:[#allocation2 + $0x51] sm:$0xff]
    %v1088 = vld [vmem:[#allocation2 + $0x59] sm:$0xff]
    %v1089 = vld [vmem:[#allocation2 + $0x61] sm:$0xff]
    %v1090 = vld [vmem:[#allocation2 + $0x69] sm:$0xff]
    %v1091 = vld [vmem:[#allocation2 + $0x71] sm:$0xff]
    %v1092 = vld [vmem:[#allocation2 + $0x79] sm:$0xff]
    %v1093 = vld [vmem:[#allocation2 + $0x81] sm:$0xf]
    %s1094 = scalar_lea.vmem %s3, 128
    %v1095 = vld [vmem:[%s1094] sm:$0xff]
    %v1096 = vld [vmem:[%s1094 + $0x8] sm:$0xff]
    %v1097 = vld [vmem:[%s1094 + $0x10] sm:$0xff]
    %v1098 = vld [vmem:[%s1094 + $0x18] sm:$0xff]
    %v1100 = vsel %vm123, %v1077, 0
    %v1103 = vsel %vm123, %v1078, 0
    %v1106 = vsel %vm123, %v1079, 0
    %v1109 = vsel %vm123, %v1080, 0
    %v1112 = vsel %vm123, %v1081, 0
    %v1115 = vsel %vm123, %v1082, 0
    %v1118 = vsel %vm123, %v1083, 0
    %v1121 = vsel %vm123, %v1084, 0
    %v1124 = vsel %vm123, %v1085, 0
    %v1127 = vsel %vm123, %v1086, 0
    %v1130 = vsel %vm123, %v1087, 0
    %v1133 = vsel %vm123, %v1088, 0
    %v1136 = vsel %vm123, %v1089, 0
    %v1139 = vsel %vm123, %v1090, 0
    %v1142 = vsel %vm123, %v1091, 0
    %v1145 = vsel %vm123, %v1092, 0
    %v1148 = vsel %vm123, %v1093, 0
    %1150 = vmatprep.subr.mxu0 0.0
    %1151 = vmatpush1.msra.mxu0 %v1095
    %1152 = vmatprep.subr.mxu0 0.0
    %1153 = vmatpush1.msra.mxu0 %v1096
    %1154 = vmatprep.subr.mxu0 0.0
    %1155 = vmatpush1.msra.mxu0 %v1097
    %1156 = vmatprep.subr.mxu0 0.0
    %1157 = vmatpush1.msra.mxu0 %v1098
    %1158 = vmatprep.subr.mxu0 0.0
    %1159 = vmatpush1.msra.mxu0 0.0
    %1160 = vmatprep.subr.mxu0 0.0
    %1161 = vmatpush1.msra.mxu0 0.0
    %1162 = vmatprep.subr.mxu0 0.0
    %1163 = vmatpush1.msra.mxu0 0.0
    %1164 = vmatprep.subr.mxu0 0.0
    %1165 = vmatpush1.msra.mxu0 0.0
    %1166 = vmatprep.subr.mxu0 0.0
    %1167 = vmatpush1.msra.mxu0 0.0
    %1168 = vmatprep.subr.mxu0 0.0
    %1169 = vmatpush1.msra.mxu0 0.0
    %1170 = vmatprep.subr.mxu0 0.0
    %1171 = vmatpush1.msra.mxu0 0.0
    %1172 = vmatprep.subr.mxu0 0.0
    %1173 = vmatpush1.msra.mxu0 0.0
    %1174 = vmatprep.subr.mxu0 0.0
    %1175 = vmatpush1.msra.mxu0 0.0
    %1176 = vmatprep.subr.mxu0 0.0
    %1177 = vmatpush1.msra.mxu0 0.0
    %1178 = vmatprep.subr.mxu0 0.0
    %1179 = vmatpush1.msra.mxu0 0.0
    %1180 = vmatprep.subr.mxu0 0.0
    %1181 = vmatpush1.msra.mxu0 0.0
    %1182 = vmatprep.subr.mxu0 0.0
    %1183 = vmatpush1.msra.mxu0 0.0
    %1184 = vmatprep.subr.mxu0 0.0
    %1185 = vmatpush1.msra.mxu0 0.0
    %1186 = vmatprep.subr.mxu0 0.0
    %1187 = vmatpush1.msra.mxu0 0.0
    %1188 = vmatprep.subr.mxu0 0.0
    %1189 = vmatpush1.msra.mxu0 0.0
    %1190 = vmatprep.subr.mxu0 0.0
    %1191 = vmatpush1.msra.mxu0 0.0
    %1192 = vmatprep.subr.mxu0 0.0
    %1193 = vmatpush1.msra.mxu0 0.0
    %1194 = vmatprep.subr.mxu0 0.0
    %1195 = vmatpush1.msra.mxu0 0.0
    %1196 = vmatprep.subr.mxu0 0.0
    %1197 = vmatpush1.msra.mxu0 0.0
    %1198 = vmatprep.subr.mxu0 0.0
    %1199 = vmatpush1.msra.mxu0 0.0
    %1200 = vmatprep.subr.mxu0 0.0
    %1201 = vmatpush1.msra.mxu0 0.0
    %1202 = vmatprep.subr.mxu0 0.0
    %1203 = vmatpush1.msra.mxu0 0.0
    %1204 = vmatprep.subr.mxu0 0.0
    %1205 = vmatpush1.msra.mxu0 0.0
    %1206 = vmatprep.subr.mxu0 0.0
    %1207 = vmatpush1.msra.mxu0 0.0
    %1208 = vmatprep.subr.mxu0 0.0
    %1209 = vmatpush1.msra.mxu0 0.0
    %1210 = vmatprep.subr.mxu0 0.0
    %1211 = vmatpush1.msra.mxu0 0.0
    %1212 = vmatprep.subr.mxu0 0.0
    %1213 = vmatpush1.msra.mxu0 0.0
    %1214 = vmatprep.mubr.f32.mxu0 0.0
    %1215 = vmatmul.mubr.f32.gmra.mrb[0].mxu0 %v1100
    %v1216 = vpop.f32.mrb[0].mxu0
    %v1217 = vadd.f32 0.0, %v1216
    %v1218 = vpop.f32.mrb[0].mxu0
    %1219 = vmatprep.mubr.f32.mxu0 0.0
    %1220 = vmatmul.mubr.f32.gmra.mrb[0].mxu0 %v1103
    %v1221 = vpop.f32.mrb[0].mxu0
    %v1222 = vadd.f32 0.0, %v1221
    %v1223 = vpop.f32.mrb[0].mxu0
    %1224 = vmatprep.mubr.f32.mxu0 0.0
    %1225 = vmatmul.mubr.f32.gmra.mrb[0].mxu0 %v1106
    %v1226 = vpop.f32.mrb[0].mxu0
    %v1227 = vadd.f32 0.0, %v1226
    %v1228 = vpop.f32.mrb[0].mxu0
    %1229 = vmatprep.mubr.f32.mxu0 0.0
    %1230 = vmatmul.mubr.f32.gmra.mrb[0].mxu0 %v1109
    %v1231 = vpop.f32.mrb[0].mxu0
    %v1232 = vadd.f32 0.0, %v1231
    %v1233 = vpop.f32.mrb[0].mxu0
    %1234 = vmatprep.mubr.f32.mxu0 0.0
    %1235 = vmatmul.mubr.f32.gmra.mrb[0].mxu0 %v1112
    %v1236 = vpop.f32.mrb[0].mxu0
    %v1237 = vadd.f32 0.0, %v1236
    %v1238 = vpop.f32.mrb[0].mxu0
    %1239 = vmatprep.mubr.f32.mxu0 0.0
    %1240 = vmatmul.mubr.f32.gmra.mrb[0].mxu0 %v1115
    %v1241 = vpop.f32.mrb[0].mxu0
    %v1242 = vadd.f32 0.0, %v1241
    %v1243 = vpop.f32.mrb[0].mxu0
    %1244 = vmatprep.mubr.f32.mxu0 0.0
    %1245 = vmatmul.mubr.f32.gmra.mrb[0].mxu0 %v1118
    %v1246 = vpop.f32.mrb[0].mxu0
    %v1247 = vadd.f32 0.0, %v1246
    %v1248 = vpop.f32.mrb[0].mxu0
    %1249 = vmatprep.mubr.f32.mxu0 0.0
    %1250 = vmatmul.mubr.f32.gmra.mrb[0].mxu0 %v1121
    %v1251 = vpop.f32.mrb[0].mxu0
    %v1252 = vadd.f32 0.0, %v1251
    %v1253 = vpop.f32.mrb[0].mxu0
    %1254 = vmatprep.mubr.f32.mxu0 0.0
    %1255 = vmatmul.mubr.f32.gmra.mrb[0].mxu0 %v1124
    %v1256 = vpop.f32.mrb[0].mxu0
    %v1257 = vadd.f32 0.0, %v1256
    %v1258 = vpop.f32.mrb[0].mxu0
    %1259 = vmatprep.mubr.f32.mxu0 0.0
    %1260 = vmatmul.mubr.f32.gmra.mrb[0].mxu0 %v1127
    %v1261 = vpop.f32.mrb[0].mxu0
    %v1262 = vadd.f32 0.0, %v1261
    %v1263 = vpop.f32.mrb[0].mxu0
    %1264 = vmatprep.mubr.f32.mxu0 0.0
    %1265 = vmatmul.mubr.f32.gmra.mrb[0].mxu0 %v1130
    %v1266 = vpop.f32.mrb[0].mxu0
    %v1267 = vadd.f32 0.0, %v1266
    %v1268 = vpop.f32.mrb[0].mxu0
    %1269 = vmatprep.mubr.f32.mxu0 0.0
    %1270 = vmatmul.mubr.f32.gmra.mrb[0].mxu0 %v1133
    %v1271 = vpop.f32.mrb[0].mxu0
    %v1272 = vadd.f32 0.0, %v1271
    %v1273 = vpop.f32.mrb[0].mxu0
    %1274 = vmatprep.mubr.f32.mxu0 0.0
    %1275 = vmatmul.mubr.f32.gmra.mrb[0].mxu0 %v1136
    %v1276 = vpop.f32.mrb[0].mxu0
    %v1277 = vadd.f32 0.0, %v1276
    %v1278 = vpop.f32.mrb[0].mxu0
    %1279 = vmatprep.mubr.f32.mxu0 0.0
    %1280 = vmatmul.mubr.f32.gmra.mrb[0].mxu0 %v1139
    %v1281 = vpop.f32.mrb[0].mxu0
    %v1282 = vadd.f32 0.0, %v1281
    %v1283 = vpop.f32.mrb[0].mxu0
    %1284 = vmatprep.mubr.f32.mxu0 0.0
    %1285 = vmatmul.mubr.f32.gmra.mrb[0].mxu0 %v1142
    %v1286 = vpop.f32.mrb[0].mxu0
    %v1287 = vadd.f32 0.0, %v1286
    %v1288 = vpop.f32.mrb[0].mxu0
    %1289 = vmatprep.mubr.f32.mxu0 0.0
    %1290 = vmatmul.mubr.f32.gmra.mrb[0].mxu0 %v1145
    %v1291 = vpop.f32.mrb[0].mxu0
    %v1292 = vadd.f32 0.0, %v1291
    %v1293 = vpop.f32.mrb[0].mxu0
    %1294 = vmatprep.mubr.f32.mxu0 0.0
    %1295 = vmatmul.mubr.f32.gmra.mrb[0].mxu0 %v1148
    %v1296 = vpop.f32.mrb[0].mxu0
    %v1297 = vadd.f32 0.0, %v1296
    %v1298 = vpop.f32.mrb[0].mxu0
    %1299 = vdwg.mxu0
    %v1301 = vsel %vm123, %v1055, 0
    %v1304 = vsel %vm123, %v1056, 0
    %v1307 = vsel %vm123, %v1057, 0
    %v1310 = vsel %vm123, %v1058, 0
    %v1313 = vsel %vm123, %v1059, 0
    %v1316 = vsel %vm123, %v1060, 0
    %v1319 = vsel %vm123, %v1061, 0
    %v1322 = vsel %vm123, %v1062, 0
    %v1325 = vsel %vm123, %v1063, 0
    %v1328 = vsel %vm123, %v1064, 0
    %v1331 = vsel %vm123, %v1065, 0
    %v1334 = vsel %vm123, %v1066, 0
    %v1337 = vsel %vm123, %v1067, 0
    %v1340 = vsel %vm123, %v1068, 0
    %v1343 = vsel %vm123, %v1069, 0
    %v1346 = vsel %vm123, %v1070, 0
    %v1349 = vsel %vm123, %v1071, 0
    %1351 = vmatprep.subr.mxu0 0.0
    %1352 = vmatpush1.msra.mxu0 %v1073
    %1353 = vmatprep.subr.mxu0 0.0
    %1354 = vmatpush1.msra.mxu0 %v1074
    %1355 = vmatprep.subr.mxu0 0.0
    %1356 = vmatpush1.msra.mxu0 %v1075
    %1357 = vmatprep.subr.mxu0 0.0
    %1358 = vmatpush1.msra.mxu0 %v1076
    %1359 = vmatprep.subr.mxu0 0.0
    %1360 = vmatpush1.msra.mxu0 0.0
    %1361 = vmatprep.subr.mxu0 0.0
    %1362 = vmatpush1.msra.mxu0 0.0
    %1363 = vmatprep.subr.mxu0 0.0
    %1364 = vmatpush1.msra.mxu0 0.0
    %1365 = vmatprep.subr.mxu0 0.0
    %1366 = vmatpush1.msra.mxu0 0.0
    %1367 = vmatprep.subr.mxu0 0.0
    %1368 = vmatpush1.msra.mxu0 0.0
    %1369 = vmatprep.subr.mxu0 0.0
    %1370 = vmatpush1.msra.mxu0 0.0
    %1371 = vmatprep.subr.mxu0 0.0
    %1372 = vmatpush1.msra.mxu0 0.0
    %1373 = vmatprep.subr.mxu0 0.0
    %1374 = vmatpush1.msra.mxu0 0.0
    %1375 = vmatprep.subr.mxu0 0.0
    %1376 = vmatpush1.msra.mxu0 0.0
    %1377 = vmatprep.subr.mxu0 0.0
    %1378 = vmatpush1.msra.mxu0 0.0
    %1379 = vmatprep.subr.mxu0 0.0
    %1380 = vmatpush1.msra.mxu0 0.0
    %1381 = vmatprep.subr.mxu0 0.0
    %1382 = vmatpush1.msra.mxu0 0.0
    %1383 = vmatprep.subr.mxu0 0.0
    %1384 = vmatpush1.msra.mxu0 0.0
    %1385 = vmatprep.subr.mxu0 0.0
    %1386 = vmatpush1.msra.mxu0 0.0
    %1387 = vmatprep.subr.mxu0 0.0
    %1388 = vmatpush1.msra.mxu0 0.0
    %1389 = vmatprep.subr.mxu0 0.0
    %1390 = vmatpush1.msra.mxu0 0.0
    %1391 = vmatprep.subr.mxu0 0.0
    %1392 = vmatpush1.msra.mxu0 0.0
    %1393 = vmatprep.subr.mxu0 0.0
    %1394 = vmatpush1.msra.mxu0 0.0
    %1395 = vmatprep.subr.mxu0 0.0
    %1396 = vmatpush1.msra.mxu0 0.0
    %1397 = vmatprep.subr.mxu0 0.0
    %1398 = vmatpush1.msra.mxu0 0.0
    %1399 = vmatprep.subr.mxu0 0.0
    %1400 = vmatpush1.msra.mxu0 0.0
    %1401 = vmatprep.subr.mxu0 0.0
    %1402 = vmatpush1.msra.mxu0 0.0
    %1403 = vmatprep.subr.mxu0 0.0
    %1404 = vmatpush1.msra.mxu0 0.0
    %1405 = vmatprep.subr.mxu0 0.0
    %1406 = vmatpush1.msra.mxu0 0.0
    %1407 = vmatprep.subr.mxu0 0.0
    %1408 = vmatpush1.msra.mxu0 0.0
    %1409 = vmatprep.subr.mxu0 0.0
    %1410 = vmatpush1.msra.mxu0 0.0
    %1411 = vmatprep.subr.mxu0 0.0
    %1412 = vmatpush1.msra.mxu0 0.0
    %1413 = vmatprep.subr.mxu0 0.0
    %1414 = vmatpush1.msra.mxu0 0.0
    %1415 = vmatprep.mubr.f32.mxu0 0.0
    %1416 = vmatmul.mubr.f32.gmra.mrb[0].mxu0 %v1301
    %v1417 = vpop.f32.mrb[0].mxu0
    %v1418 = vadd.f32 %v1217, %v1417
    %v1419 = vpop.f32.mrb[0].mxu0
    %1420 = vmatprep.mubr.f32.mxu0 0.0
    %1421 = vmatmul.mubr.f32.gmra.mrb[0].mxu0 %v1304
    %v1422 = vpop.f32.mrb[0].mxu0
    %v1423 = vadd.f32 %v1222, %v1422
    %v1424 = vpop.f32.mrb[0].mxu0
    %1425 = vmatprep.mubr.f32.mxu0 0.0
    %1426 = vmatmul.mubr.f32.gmra.mrb[0].mxu0 %v1307
    %v1427 = vpop.f32.mrb[0].mxu0
    %v1428 = vadd.f32 %v1227, %v1427
    %v1429 = vpop.f32.mrb[0].mxu0
    %1430 = vmatprep.mubr.f32.mxu0 0.0
    %1431 = vmatmul.mubr.f32.gmra.mrb[0].mxu0 %v1310
    %v1432 = vpop.f32.mrb[0].mxu0
    %v1433 = vadd.f32 %v1232, %v1432
    %v1434 = vpop.f32.mrb[0].mxu0
    %1435 = vmatprep.mubr.f32.mxu0 0.0
    %1436 = vmatmul.mubr.f32.gmra.mrb[0].mxu0 %v1313
    %v1437 = vpop.f32.mrb[0].mxu0
    %v1438 = vadd.f32 %v1237, %v1437
    %v1439 = vpop.f32.mrb[0].mxu0
    %1440 = vmatprep.mubr.f32.mxu0 0.0
    %1441 = vmatmul.mubr.f32.gmra.mrb[0].mxu0 %v1316
    %v1442 = vpop.f32.mrb[0].mxu0
    %v1443 = vadd.f32 %v1242, %v1442
    %v1444 = vpop.f32.mrb[0].mxu0
    %1445 = vmatprep.mubr.f32.mxu0 0.0
    %1446 = vmatmul.mubr.f32.gmra.mrb[0].mxu0 %v1319
    %v1447 = vpop.f32.mrb[0].mxu0
    %v1448 = vadd.f32 %v1247, %v1447
    %v1449 = vpop.f32.mrb[0].mxu0
    %1450 = vmatprep.mubr.f32.mxu0 0.0
    %1451 = vmatmul.mubr.f32.gmra.mrb[0].mxu0 %v1322
    %v1452 = vpop.f32.mrb[0].mxu0
    %v1453 = vadd.f32 %v1252, %v1452
    %v1454 = vpop.f32.mrb[0].mxu0
    %1455 = vmatprep.mubr.f32.mxu0 0.0
    %1456 = vmatmul.mubr.f32.gmra.mrb[0].mxu0 %v1325
    %v1457 = vpop.f32.mrb[0].mxu0
    %v1458 = vadd.f32 %v1257, %v1457
    %v1459 = vpop.f32.mrb[0].mxu0
    %1460 = vmatprep.mubr.f32.mxu0 0.0
    %1461 = vmatmul.mubr.f32.gmra.mrb[0].mxu0 %v1328
    %v1462 = vpop.f32.mrb[0].mxu0
    %v1463 = vadd.f32 %v1262, %v1462
    %v1464 = vpop.f32.mrb[0].mxu0
    %1465 = vmatprep.mubr.f32.mxu0 0.0
    %1466 = vmatmul.mubr.f32.gmra.mrb[0].mxu0 %v1331
    %v1467 = vpop.f32.mrb[0].mxu0
    %v1468 = vadd.f32 %v1267, %v1467
    %v1469 = vpop.f32.mrb[0].mxu0
    %1470 = vmatprep.mubr.f32.mxu0 0.0
    %1471 = vmatmul.mubr.f32.gmra.mrb[0].mxu0 %v1334
    %v1472 = vpop.f32.mrb[0].mxu0
    %v1473 = vadd.f32 %v1272, %v1472
    %v1474 = vpop.f32.mrb[0].mxu0
    %1475 = vmatprep.mubr.f32.mxu0 0.0
    %1476 = vmatmul.mubr.f32.gmra.mrb[0].mxu0 %v1337
    %v1477 = vpop.f32.mrb[0].mxu0
    %v1478 = vadd.f32 %v1277, %v1477
    %v1479 = vpop.f32.mrb[0].mxu0
    %1480 = vmatprep.mubr.f32.mxu0 0.0
    %1481 = vmatmul.mubr.f32.gmra.mrb[0].mxu0 %v1340
    %v1482 = vpop.f32.mrb[0].mxu0
    %v1483 = vadd.f32 %v1282, %v1482
    %v1484 = vpop.f32.mrb[0].mxu0
    %1485 = vmatprep.mubr.f32.mxu0 0.0
    %1486 = vmatmul.mubr.f32.gmra.mrb[0].mxu0 %v1343
    %v1487 = vpop.f32.mrb[0].mxu0
    %v1488 = vadd.f32 %v1287, %v1487
    %v1489 = vpop.f32.mrb[0].mxu0
    %1490 = vmatprep.mubr.f32.mxu0 0.0
    %1491 = vmatmul.mubr.f32.gmra.mrb[0].mxu0 %v1346
    %v1492 = vpop.f32.mrb[0].mxu0
    %v1493 = vadd.f32 %v1292, %v1492
    %v1494 = vpop.f32.mrb[0].mxu0
    %1495 = vmatprep.mubr.f32.mxu0 0.0
    %1496 = vmatmul.mubr.f32.gmra.mrb[0].mxu0 %v1349
    %v1497 = vpop.f32.mrb[0].mxu0
    %v1498 = vadd.f32 %v1297, %v1497
    %v1499 = vpop.f32.mrb[0].mxu0
    %1500 = vdwg.mxu0
    %v1501 = vld [vmem:[#allocation2 + $0x2] sm:$0xff]
    %v1502 = vld [vmem:[#allocation2 + $0xa] sm:$0xff]
    %v1503 = vld [vmem:[#allocation2 + $0x12] sm:$0xff]
    %v1504 = vld [vmem:[#allocation2 + $0x1a] sm:$0xff]
    %v1505 = vld [vmem:[#allocation2 + $0x22] sm:$0xff]
    %v1506 = vld [vmem:[#allocation2 + $0x2a] sm:$0xff]
    %v1507 = vld [vmem:[#allocation2 + $0x32] sm:$0xff]
    %v1508 = vld [vmem:[#allocation2 + $0x3a] sm:$0xff]
    %v1509 = vld [vmem:[#allocation2 + $0x42] sm:$0xff]
    %v1510 = vld [vmem:[#allocation2 + $0x4a] sm:$0xff]
    %v1511 = vld [vmem:[#allocation2 + $0x52] sm:$0xff]
    %v1512 = vld [vmem:[#allocation2 + $0x5a] sm:$0xff]
    %v1513 = vld [vmem:[#allocation2 + $0x62] sm:$0xff]
    %v1514 = vld [vmem:[#allocation2 + $0x6a] sm:$0xff]
    %v1515 = vld [vmem:[#allocation2 + $0x72] sm:$0xff]
    %v1516 = vld [vmem:[#allocation2 + $0x7a] sm:$0xff]
    %v1517 = vld [vmem:[#allocation2 + $0x82] sm:$0xf]
    %s1518 = scalar_lea.vmem %s3, 160
    %v1519 = vld [vmem:[%s1518] sm:$0xff]
    %v1520 = vld [vmem:[%s1518 + $0x8] sm:$0xff]
    %v1521 = vld [vmem:[%s1518 + $0x10] sm:$0xff]
    %v1522 = vld [vmem:[%s1518 + $0x18] sm:$0xff]
    %v1524 = vsel %vm123, %v1501, 0
    %v1527 = vsel %vm123, %v1502, 0
    %v1530 = vsel %vm123, %v1503, 0
    %v1533 = vsel %vm123, %v1504, 0
    %v1536 = vsel %vm123, %v1505, 0
    %v1539 = vsel %vm123, %v1506, 0
    %v1542 = vsel %vm123, %v1507, 0
    %v1545 = vsel %vm123, %v1508, 0
    %v1548 = vsel %vm123, %v1509, 0
    %v1551 = vsel %vm123, %v1510, 0
    %v1554 = vsel %vm123, %v1511, 0
    %v1557 = vsel %vm123, %v1512, 0
    %v1560 = vsel %vm123, %v1513, 0
    %v1563 = vsel %vm123, %v1514, 0
    %v1566 = vsel %vm123, %v1515, 0
    %v1569 = vsel %vm123, %v1516, 0
    %v1572 = vsel %vm123, %v1517, 0
    %1574 = vmatprep.subr.mxu0 0.0
    %1575 = vmatpush1.msra.mxu0 %v1519
    %1576 = vmatprep.subr.mxu0 0.0
    %1577 = vmatpush1.msra.mxu0 %v1520
    %1578 = vmatprep.subr.mxu0 0.0
    %1579 = vmatpush1.msra.mxu0 %v1521
    %1580 = vmatprep.subr.mxu0 0.0
    %1581 = vmatpush1.msra.mxu0 %v1522
    %1582 = vmatprep.subr.mxu0 0.0
    %1583 = vmatpush1.msra.mxu0 0.0
    %1584 = vmatprep.subr.mxu0 0.0
    %1585 = vmatpush1.msra.mxu0 0.0
    %1586 = vmatprep.subr.mxu0 0.0
    %1587 = vmatpush1.msra.mxu0 0.0
    %1588 = vmatprep.subr.mxu0 0.0
    %1589 = vmatpush1.msra.mxu0 0.0
    %1590 = vmatprep.subr.mxu0 0.0
    %1591 = vmatpush1.msra.mxu0 0.0
    %1592 = vmatprep.subr.mxu0 0.0
    %1593 = vmatpush1.msra.mxu0 0.0
    %1594 = vmatprep.subr.mxu0 0.0
    %1595 = vmatpush1.msra.mxu0 0.0
    %1596 = vmatprep.subr.mxu0 0.0
    %1597 = vmatpush1.msra.mxu0 0.0
    %1598 = vmatprep.subr.mxu0 0.0
    %1599 = vmatpush1.msra.mxu0 0.0
    %1600 = vmatprep.subr.mxu0 0.0
    %1601 = vmatpush1.msra.mxu0 0.0
    %1602 = vmatprep.subr.mxu0 0.0
    %1603 = vmatpush1.msra.mxu0 0.0
    %1604 = vmatprep.subr.mxu0 0.0
    %1605 = vmatpush1.msra.mxu0 0.0
    %1606 = vmatprep.subr.mxu0 0.0
    %1607 = vmatpush1.msra.mxu0 0.0
    %1608 = vmatprep.subr.mxu0 0.0
    %1609 = vmatpush1.msra.mxu0 0.0
    %1610 = vmatprep.subr.mxu0 0.0
    %1611 = vmatpush1.msra.mxu0 0.0
    %1612 = vmatprep.subr.mxu0 0.0
    %1613 = vmatpush1.msra.mxu0 0.0
    %1614 = vmatprep.subr.mxu0 0.0
    %1615 = vmatpush1.msra.mxu0 0.0
    %1616 = vmatprep.subr.mxu0 0.0
    %1617 = vmatpush1.msra.mxu0 0.0
    %1618 = vmatprep.subr.mxu0 0.0
    %1619 = vmatpush1.msra.mxu0 0.0
    %1620 = vmatprep.subr.mxu0 0.0
    %1621 = vmatpush1.msra.mxu0 0.0
    %1622 = vmatprep.subr.mxu0 0.0
    %1623 = vmatpush1.msra.mxu0 0.0
    %1624 = vmatprep.subr.mxu0 0.0
    %1625 = vmatpush1.msra.mxu0 0.0
    %1626 = vmatprep.subr.mxu0 0.0
    %1627 = vmatpush1.msra.mxu0 0.0
    %1628 = vmatprep.subr.mxu0 0.0
    %1629 = vmatpush1.msra.mxu0 0.0
    %1630 = vmatprep.subr.mxu0 0.0
    %1631 = vmatpush1.msra.mxu0 0.0
    %1632 = vmatprep.subr.mxu0 0.0
    %1633 = vmatpush1.msra.mxu0 0.0
    %1634 = vmatprep.subr.mxu0 0.0
    %1635 = vmatpush1.msra.mxu0 0.0
    %1636 = vmatprep.subr.mxu0 0.0
    %1637 = vmatpush1.msra.mxu0 0.0
    %1638 = vmatprep.mubr.f32.mxu0 0.0
    %1639 = vmatmul.mubr.f32.gmra.mrb[0].mxu0 %v1524
    %v1640 = vpop.f32.mrb[0].mxu0
    %v1641 = vadd.f32 0.0, %v1640
    %v1642 = vpop.f32.mrb[0].mxu0
    %1643 = vmatprep.mubr.f32.mxu0 0.0
    %1644 = vmatmul.mubr.f32.gmra.mrb[0].mxu0 %v1527
    %v1645 = vpop.f32.mrb[0].mxu0
    %v1646 = vadd.f32 0.0, %v1645
    %v1647 = vpop.f32.mrb[0].mxu0
    %1648 = vmatprep.mubr.f32.mxu0 0.0
    %1649 = vmatmul.mubr.f32.gmra.mrb[0].mxu0 %v1530
    %v1650 = vpop.f32.mrb[0].mxu0
    %v1651 = vadd.f32 0.0, %v1650
    %v1652 = vpop.f32.mrb[0].mxu0
    %1653 = vmatprep.mubr.f32.mxu0 0.0
    %1654 = vmatmul.mubr.f32.gmra.mrb[0].mxu0 %v1533
    %v1655 = vpop.f32.mrb[0].mxu0
    %v1656 = vadd.f32 0.0, %v1655
    %v1657 = vpop.f32.mrb[0].mxu0
    %1658 = vmatprep.mubr.f32.mxu0 0.0
    %1659 = vmatmul.mubr.f32.gmra.mrb[0].mxu0 %v1536
    %v1660 = vpop.f32.mrb[0].mxu0
    %v1661 = vadd.f32 0.0, %v1660
    %v1662 = vpop.f32.mrb[0].mxu0
    %1663 = vmatprep.mubr.f32.mxu0 0.0
    %1664 = vmatmul.mubr.f32.gmra.mrb[0].mxu0 %v1539
    %v1665 = vpop.f32.mrb[0].mxu0
    %v1666 = vadd.f32 0.0, %v1665
    %v1667 = vpop.f32.mrb[0].mxu0
    %1668 = vmatprep.mubr.f32.mxu0 0.0
    %1669 = vmatmul.mubr.f32.gmra.mrb[0].mxu0 %v1542
    %v1670 = vpop.f32.mrb[0].mxu0
    %v1671 = vadd.f32 0.0, %v1670
    %v1672 = vpop.f32.mrb[0].mxu0
    %1673 = vmatprep.mubr.f32.mxu0 0.0
    %1674 = vmatmul.mubr.f32.gmra.mrb[0].mxu0 %v1545
    %v1675 = vpop.f32.mrb[0].mxu0
    %v1676 = vadd.f32 0.0, %v1675
    %v1677 = vpop.f32.mrb[0].mxu0
    %1678 = vmatprep.mubr.f32.mxu0 0.0
    %1679 = vmatmul.mubr.f32.gmra.mrb[0].mxu0 %v1548
    %v1680 = vpop.f32.mrb[0].mxu0
    %v1681 = vadd.f32 0.0, %v1680
    %v1682 = vpop.f32.mrb[0].mxu0
    %1683 = vmatprep.mubr.f32.mxu0 0.0
    %1684 = vmatmul.mubr.f32.gmra.mrb[0].mxu0 %v1551
    %v1685 = vpop.f32.mrb[0].mxu0
    %v1686 = vadd.f32 0.0, %v1685
    %v1687 = vpop.f32.mrb[0].mxu0
    %1688 = vmatprep.mubr.f32.mxu0 0.0
    %1689 = vmatmul.mubr.f32.gmra.mrb[0].mxu0 %v1554
    %v1690 = vpop.f32.mrb[0].mxu0
    %v1691 = vadd.f32 0.0, %v1690
    %v1692 = vpop.f32.mrb[0].mxu0
    %1693 = vmatprep.mubr.f32.mxu0 0.0
    %1694 = vmatmul.mubr.f32.gmra.mrb[0].mxu0 %v1557
    %v1695 = vpop.f32.mrb[0].mxu0
    %v1696 = vadd.f32 0.0, %v1695
    %v1697 = vpop.f32.mrb[0].mxu0
    %1698 = vmatprep.mubr.f32.mxu0 0.0
    %1699 = vmatmul.mubr.f32.gmra.mrb[0].mxu0 %v1560
    %v1700 = vpop.f32.mrb[0].mxu0
    %v1701 = vadd.f32 0.0, %v1700
    %v1702 = vpop.f32.mrb[0].mxu0
    %1703 = vmatprep.mubr.f32.mxu0 0.0
    %1704 = vmatmul.mubr.f32.gmra.mrb[0].mxu0 %v1563
    %v1705 = vpop.f32.mrb[0].mxu0
    %v1706 = vadd.f32 0.0, %v1705
    %v1707 = vpop.f32.mrb[0].mxu0
    %1708 = vmatprep.mubr.f32.mxu0 0.0
    %1709 = vmatmul.mubr.f32.gmra.mrb[0].mxu0 %v1566
    %v1710 = vpop.f32.mrb[0].mxu0
    %v1711 = vadd.f32 0.0, %v1710
    %v1712 = vpop.f32.mrb[0].mxu0
    %1713 = vmatprep.mubr.f32.mxu0 0.0
    %1714 = vmatmul.mubr.f32.gmra.mrb[0].mxu0 %v1569
    %v1715 = vpop.f32.mrb[0].mxu0
    %v1716 = vadd.f32 0.0, %v1715
    %v1717 = vpop.f32.mrb[0].mxu0
    %1718 = vmatprep.mubr.f32.mxu0 0.0
    %1719 = vmatmul.mubr.f32.gmra.mrb[0].mxu0 %v1572
    %v1720 = vpop.f32.mrb[0].mxu0
    %v1721 = vadd.f32 0.0, %v1720
    %v1722 = vpop.f32.mrb[0].mxu0
    %1723 = vdwg.mxu0
    %v1724 = vadd.f32 %v1418, %v1641
    %v1725 = vadd.f32 %v1423, %v1646
    %v1726 = vadd.f32 %v1428, %v1651
    %v1727 = vadd.f32 %v1433, %v1656
    %v1728 = vadd.f32 %v1438, %v1661
    %v1729 = vadd.f32 %v1443, %v1666
    %v1730 = vadd.f32 %v1448, %v1671
    %v1731 = vadd.f32 %v1453, %v1676
    %v1732 = vadd.f32 %v1458, %v1681
    %v1733 = vadd.f32 %v1463, %v1686
    %v1734 = vadd.f32 %v1468, %v1691
    %v1735 = vadd.f32 %v1473, %v1696
    %v1736 = vadd.f32 %v1478, %v1701
    %v1737 = vadd.f32 %v1483, %v1706
    %v1738 = vadd.f32 %v1488, %v1711
    %v1739 = vadd.f32 %v1493, %v1716
    %v1740 = vadd.f32 %v1498, %v1721
    %s1741 = scalar_lea.vmem %s5, 1
    %v1742 = vld [vmem:[%s1741] sm:$0x1]
    %v1744 = vlaneseq
    %v1745 = vshrl.u32 %v1744, 7
    %v1746 = vsub.s32 0, %v1745
    %v1747 = vrot.slane %v1742, %v1746
    %v1749 = vadd.f32 %v1724, %v1747
    %v1750 = vadd.f32 %v1725, %v1747
    %v1751 = vadd.f32 %v1726, %v1747
    %v1752 = vadd.f32 %v1727, %v1747
    %v1753 = vadd.f32 %v1728, %v1747
    %v1754 = vadd.f32 %v1729, %v1747
    %v1755 = vadd.f32 %v1730, %v1747
    %v1756 = vadd.f32 %v1731, %v1747
    %v1757 = vadd.f32 %v1732, %v1747
    %v1758 = vadd.f32 %v1733, %v1747
    %v1759 = vadd.f32 %v1734, %v1747
    %v1760 = vadd.f32 %v1735, %v1747
    %v1761 = vadd.f32 %v1736, %v1747
    %v1762 = vadd.f32 %v1737, %v1747
    %v1763 = vadd.f32 %v1738, %v1747
    %v1764 = vadd.f32 %v1739, %v1747
    %v1765 = vadd.f32 %v1740, %v1747
    %v1766 = vmul.f32 %v1749, 0.999995
    %v1767 = vmul.f32 %v1750, 0.999995
    %v1768 = vmul.f32 %v1751, 0.999995
    %v1769 = vmul.f32 %v1752, 0.999995
    %v1770 = vmul.f32 %v1753, 0.999995
    %v1771 = vmul.f32 %v1754, 0.999995
    %v1772 = vmul.f32 %v1755, 0.999995
    %v1773 = vmul.f32 %v1756, 0.999995
    %v1774 = vmul.f32 %v1757, 0.999995
    %v1775 = vmul.f32 %v1758, 0.999995
    %v1776 = vmul.f32 %v1759, 0.999995
    %v1777 = vmul.f32 %v1760, 0.999995
    %v1778 = vmul.f32 %v1761, 0.999995
    %v1779 = vmul.f32 %v1762, 0.999995
    %v1780 = vmul.f32 %v1763, 0.999995
    %v1781 = vmul.f32 %v1764, 0.999995
    %v1782 = vmul.f32 %v1765, 0.999995
    %v1783 = vmax.f32 %v1766, 0.0
    %v1784 = vmax.f32 %v1767, 0.0
    %v1785 = vmax.f32 %v1768, 0.0
    %v1786 = vmax.f32 %v1769, 0.0
    %v1787 = vmax.f32 %v1770, 0.0
    %v1788 = vmax.f32 %v1771, 0.0
    %v1789 = vmax.f32 %v1772, 0.0
    %v1790 = vmax.f32 %v1773, 0.0
    %v1791 = vmax.f32 %v1774, 0.0
    %v1792 = vmax.f32 %v1775, 0.0
    %v1793 = vmax.f32 %v1776, 0.0
    %v1794 = vmax.f32 %v1777, 0.0
    %v1795 = vmax.f32 %v1778, 0.0
    %v1796 = vmax.f32 %v1779, 0.0
    %v1797 = vmax.f32 %v1780, 0.0
    %v1798 = vmax.f32 %v1781, 0.0
    %v1799 = vmax.f32 %v1782, 0.0
    %v1800 = vmul.f32 %v1783, %v938
    %v1801 = vmul.f32 %v1784, %v943
    %v1802 = vmul.f32 %v1785, %v948
    %v1803 = vmul.f32 %v1786, %v953
    %v1804 = vmul.f32 %v1787, %v958
    %v1805 = vmul.f32 %v1788, %v963
    %v1806 = vmul.f32 %v1789, %v968
    %v1807 = vmul.f32 %v1790, %v973
    %v1808 = vmul.f32 %v1791, %v978
    %v1809 = vmul.f32 %v1792, %v983
    %v1810 = vmul.f32 %v1793, %v988
    %v1811 = vmul.f32 %v1794, %v993
    %v1812 = vmul.f32 %v1795, %v998
    %v1813 = vmul.f32 %v1796, %v1003
    %v1814 = vmul.f32 %v1797, %v1008
    %v1815 = vmul.f32 %v1798, %v1013
    %v1816 = vmul.f32 %v1799, %v1018
    %1817 = vst.msk [vmem:[#allocation2 + $0x1] sm:$0xff] %vm123, %v1800
    %1818 = vst.msk [vmem:[#allocation2 + $0x9] sm:$0xff] %vm123, %v1801
    %1819 = vst.msk [vmem:[#allocation2 + $0x11] sm:$0xff] %vm123, %v1802
    %1820 = vst.msk [vmem:[#allocation2 + $0x19] sm:$0xff] %vm123, %v1803
    %1821 = vst.msk [vmem:[#allocation2 + $0x21] sm:$0xff] %vm123, %v1804
    %1822 = vst.msk [vmem:[#allocation2 + $0x29] sm:$0xff] %vm123, %v1805
    %1823 = vst.msk [vmem:[#allocation2 + $0x31] sm:$0xff] %vm123, %v1806
    %1824 = vst.msk [vmem:[#allocation2 + $0x39] sm:$0xff] %vm123, %v1807
    %1825 = vst.msk [vmem:[#allocation2 + $0x41] sm:$0xff] %vm123, %v1808
    %1826 = vst.msk [vmem:[#allocation2 + $0x49] sm:$0xff] %vm123, %v1809
    %1827 = vst.msk [vmem:[#allocation2 + $0x51] sm:$0xff] %vm123, %v1810
    %1828 = vst.msk [vmem:[#allocation2 + $0x59] sm:$0xff] %vm123, %v1811
    %1829 = vst.msk [vmem:[#allocation2 + $0x61] sm:$0xff] %vm123, %v1812
    %1830 = vst.msk [vmem:[#allocation2 + $0x69] sm:$0xff] %vm123, %v1813
    %1831 = vst.msk [vmem:[#allocation2 + $0x71] sm:$0xff] %vm123, %v1814
    %1832 = vst.msk [vmem:[#allocation2 + $0x79] sm:$0xff] %vm123, %v1815
    %1833 = vst.msk [vmem:[#allocation2 + $0x81] sm:$0xf] %vm1053, %v1816
    %v1834 = vld [vmem:[#allocation2] sm:$0xff]
    %v1835 = vld [vmem:[#allocation2 + $0x8] sm:$0xff]
    %v1836 = vld [vmem:[#allocation2 + $0x10] sm:$0xff]
    %v1837 = vld [vmem:[#allocation2 + $0x18] sm:$0xff]
    %v1838 = vld [vmem:[#allocation2 + $0x20] sm:$0xff]
    %v1839 = vld [vmem:[#allocation2 + $0x28] sm:$0xff]
    %v1840 = vld [vmem:[#allocation2 + $0x30] sm:$0xff]
    %v1841 = vld [vmem:[#allocation2 + $0x38] sm:$0xff]
    %v1842 = vld [vmem:[#allocation2 + $0x40] sm:$0xff]
    %v1843 = vld [vmem:[#allocation2 + $0x48] sm:$0xff]
    %v1844 = vld [vmem:[#allocation2 + $0x50] sm:$0xff]
    %v1845 = vld [vmem:[#allocation2 + $0x58] sm:$0xff]
    %v1846 = vld [vmem:[#allocation2 + $0x60] sm:$0xff]
    %v1847 = vld [vmem:[#allocation2 + $0x68] sm:$0xff]
    %v1848 = vld [vmem:[#allocation2 + $0x70] sm:$0xff]
    %v1849 = vld [vmem:[#allocation2 + $0x78] sm:$0xff]
    %v1850 = vld [vmem:[#allocation2 + $0x80] sm:$0xf]
    %s1851 = scalar_lea.vmem %s3, 192
    %v1852 = vld [vmem:[%s1851] sm:$0xff]
    %v1853 = vld [vmem:[%s1851 + $0x8] sm:$0xff]
    %v1854 = vld [vmem:[%s1851 + $0x10] sm:$0xff]
    %v1855 = vld [vmem:[%s1851 + $0x18] sm:$0xff]
    %v1856 = vld [vmem:[#allocation2 + $0x1] sm:$0xff]
    %v1857 = vld [vmem:[#allocation2 + $0x9] sm:$0xff]
    %v1858 = vld [vmem:[#allocation2 + $0x11] sm:$0xff]
    %v1859 = vld [vmem:[#allocation2 + $0x19] sm:$0xff]
    %v1860 = vld [vmem:[#allocation2 + $0x21] sm:$0xff]
    %v1861 = vld [vmem:[#allocation2 + $0x29] sm:$0xff]
    %v1862 = vld [vmem:[#allocation2 + $0x31] sm:$0xff]
    %v1863 = vld [vmem:[#allocation2 + $0x39] sm:$0xff]
    %v1864 = vld [vmem:[#allocation2 + $0x41] sm:$0xff]
    %v1865 = vld [vmem:[#allocation2 + $0x49] sm:$0xff]
    %v1866 = vld [vmem:[#allocation2 + $0x51] sm:$0xff]
    %v1867 = vld [vmem:[#allocation2 + $0x59] sm:$0xff]
    %v1868 = vld [vmem:[#allocation2 + $0x61] sm:$0xff]
    %v1869 = vld [vmem:[#allocation2 + $0x69] sm:$0xff]
    %v1870 = vld [vmem:[#allocation2 + $0x71] sm:$0xff]
    %v1871 = vld [vmem:[#allocation2 + $0x79] sm:$0xff]
    %v1872 = vld [vmem:[#allocation2 + $0x81] sm:$0xf]
    %s1873 = scalar_lea.vmem %s3, 224
    %v1874 = vld [vmem:[%s1873] sm:$0xff]
    %v1875 = vld [vmem:[%s1873 + $0x8] sm:$0xff]
    %v1876 = vld [vmem:[%s1873 + $0x10] sm:$0xff]
    %v1877 = vld [vmem:[%s1873 + $0x18] sm:$0xff]
    %v1879 = vsel %vm123, %v1856, 0
    %v1882 = vsel %vm123, %v1857, 0
    %v1885 = vsel %vm123, %v1858, 0
    %v1888 = vsel %vm123, %v1859, 0
    %v1891 = vsel %vm123, %v1860, 0
    %v1894 = vsel %vm123, %v1861, 0
    %v1897 = vsel %vm123, %v1862, 0
    %v1900 = vsel %vm123, %v1863, 0
    %v1903 = vsel %vm123, %v1864, 0
    %v1906 = vsel %vm123, %v1865, 0
    %v1909 = vsel %vm123, %v1866, 0
    %v1912 = vsel %vm123, %v1867, 0
    %v1915 = vsel %vm123, %v1868, 0
    %v1918 = vsel %vm123, %v1869, 0
    %v1921 = vsel %vm123, %v1870, 0
    %v1924 = vsel %vm123, %v1871, 0
    %v1927 = vsel %vm123, %v1872, 0
    %1929 = vmatprep.subr.mxu0 0.0
    %1930 = vmatpush1.msra.mxu0 %v1874
    %1931 = vmatprep.subr.mxu0 0.0
    %1932 = vmatpush1.msra.mxu0 %v1875
    %1933 = vmatprep.subr.mxu0 0.0
    %1934 = vmatpush1.msra.mxu0 %v1876
    %1935 = vmatprep.subr.mxu0 0.0
    %1936 = vmatpush1.msra.mxu0 %v1877
    %1937 = vmatprep.subr.mxu0 0.0
    %1938 = vmatpush1.msra.mxu0 0.0
    %1939 = vmatprep.subr.mxu0 0.0
    %1940 = vmatpush1.msra.mxu0 0.0
    %1941 = vmatprep.subr.mxu0 0.0
    %1942 = vmatpush1.msra.mxu0 0.0
    %1943 = vmatprep.subr.mxu0 0.0
    %1944 = vmatpush1.msra.mxu0 0.0
    %1945 = vmatprep.subr.mxu0 0.0
    %1946 = vmatpush1.msra.mxu0 0.0
    %1947 = vmatprep.subr.mxu0 0.0
    %1948 = vmatpush1.msra.mxu0 0.0
    %1949 = vmatprep.subr.mxu0 0.0
    %1950 = vmatpush1.msra.mxu0 0.0
    %1951 = vmatprep.subr.mxu0 0.0
    %1952 = vmatpush1.msra.mxu0 0.0
    %1953 = vmatprep.subr.mxu0 0.0
    %1954 = vmatpush1.msra.mxu0 0.0
    %1955 = vmatprep.subr.mxu0 0.0
    %1956 = vmatpush1.msra.mxu0 0.0
    %1957 = vmatprep.subr.mxu0 0.0
    %1958 = vmatpush1.msra.mxu0 0.0
    %1959 = vmatprep.subr.mxu0 0.0
    %1960 = vmatpush1.msra.mxu0 0.0
    %1961 = vmatprep.subr.mxu0 0.0
    %1962 = vmatpush1.msra.mxu0 0.0
    %1963 = vmatprep.subr.mxu0 0.0
    %1964 = vmatpush1.msra.mxu0 0.0
    %1965 = vmatprep.subr.mxu0 0.0
    %1966 = vmatpush1.msra.mxu0 0.0
    %1967 = vmatprep.subr.mxu0 0.0
    %1968 = vmatpush1.msra.mxu0 0.0
    %1969 = vmatprep.subr.mxu0 0.0
    %1970 = vmatpush1.msra.mxu0 0.0
    %1971 = vmatprep.subr.mxu0 0.0
    %1972 = vmatpush1.msra.mxu0 0.0
    %1973 = vmatprep.subr.mxu0 0.0
    %1974 = vmatpush1.msra.mxu0 0.0
    %1975 = vmatprep.subr.mxu0 0.0
    %1976 = vmatpush1.msra.mxu0 0.0
    %1977 = vmatprep.subr.mxu0 0.0
    %1978 = vmatpush1.msra.mxu0 0.0
    %1979 = vmatprep.subr.mxu0 0.0
    %1980 = vmatpush1.msra.mxu0 0.0
    %1981 = vmatprep.subr.mxu0 0.0
    %1982 = vmatpush1.msra.mxu0 0.0
    %1983 = vmatprep.subr.mxu0 0.0
    %1984 = vmatpush1.msra.mxu0 0.0
    %1985 = vmatprep.subr.mxu0 0.0
    %1986 = vmatpush1.msra.mxu0 0.0
    %1987 = vmatprep.subr.mxu0 0.0
    %1988 = vmatpush1.msra.mxu0 0.0
    %1989 = vmatprep.subr.mxu0 0.0
    %1990 = vmatpush1.msra.mxu0 0.0
    %1991 = vmatprep.subr.mxu0 0.0
    %1992 = vmatpush1.msra.mxu0 0.0
    %1993 = vmatprep.mubr.f32.mxu0 0.0
    %1994 = vmatmul.mubr.f32.gmra.mrb[0].mxu0 %v1879
    %v1995 = vpop.f32.mrb[0].mxu0
    %v1996 = vadd.f32 0.0, %v1995
    %v1997 = vpop.f32.mrb[0].mxu0
    %1998 = vmatprep.mubr.f32.mxu0 0.0
    %1999 = vmatmul.mubr.f32.gmra.mrb[0].mxu0 %v1882
    %v2000 = vpop.f32.mrb[0].mxu0
    %v2001 = vadd.f32 0.0, %v2000
    %v2002 = vpop.f32.mrb[0].mxu0
    %2003 = vmatprep.mubr.f32.mxu0 0.0
    %2004 = vmatmul.mubr.f32.gmra.mrb[0].mxu0 %v1885
    %v2005 = vpop.f32.mrb[0].mxu0
    %v2006 = vadd.f32 0.0, %v2005
    %v2007 = vpop.f32.mrb[0].mxu0
    %2008 = vmatprep.mubr.f32.mxu0 0.0
    %2009 = vmatmul.mubr.f32.gmra.mrb[0].mxu0 %v1888
    %v2010 = vpop.f32.mrb[0].mxu0
    %v2011 = vadd.f32 0.0, %v2010
    %v2012 = vpop.f32.mrb[0].mxu0
    %2013 = vmatprep.mubr.f32.mxu0 0.0
    %2014 = vmatmul.mubr.f32.gmra.mrb[0].mxu0 %v1891
    %v2015 = vpop.f32.mrb[0].mxu0
    %v2016 = vadd.f32 0.0, %v2015
    %v2017 = vpop.f32.mrb[0].mxu0
    %2018 = vmatprep.mubr.f32.mxu0 0.0
    %2019 = vmatmul.mubr.f32.gmra.mrb[0].mxu0 %v1894
    %v2020 = vpop.f32.mrb[0].mxu0
    %v2021 = vadd.f32 0.0, %v2020
    %v2022 = vpop.f32.mrb[0].mxu0
    %2023 = vmatprep.mubr.f32.mxu0 0.0
    %2024 = vmatmul.mubr.f32.gmra.mrb[0].mxu0 %v1897
    %v2025 = vpop.f32.mrb[0].mxu0
    %v2026 = vadd.f32 0.0, %v2025
    %v2027 = vpop.f32.mrb[0].mxu0
    %2028 = vmatprep.mubr.f32.mxu0 0.0
    %2029 = vmatmul.mubr.f32.gmra.mrb[0].mxu0 %v1900
    %v2030 = vpop.f32.mrb[0].mxu0
    %v2031 = vadd.f32 0.0, %v2030
    %v2032 = vpop.f32.mrb[0].mxu0
    %2033 = vmatprep.mubr.f32.mxu0 0.0
    %2034 = vmatmul.mubr.f32.gmra.mrb[0].mxu0 %v1903
    %v2035 = vpop.f32.mrb[0].mxu0
    %v2036 = vadd.f32 0.0, %v2035
    %v2037 = vpop.f32.mrb[0].mxu0
    %2038 = vmatprep.mubr.f32.mxu0 0.0
    %2039 = vmatmul.mubr.f32.gmra.mrb[0].mxu0 %v1906
    %v2040 = vpop.f32.mrb[0].mxu0
    %v2041 = vadd.f32 0.0, %v2040
    %v2042 = vpop.f32.mrb[0].mxu0
    %2043 = vmatprep.mubr.f32.mxu0 0.0
    %2044 = vmatmul.mubr.f32.gmra.mrb[0].mxu0 %v1909
    %v2045 = vpop.f32.mrb[0].mxu0
    %v2046 = vadd.f32 0.0, %v2045
    %v2047 = vpop.f32.mrb[0].mxu0
    %2048 = vmatprep.mubr.f32.mxu0 0.0
    %2049 = vmatmul.mubr.f32.gmra.mrb[0].mxu0 %v1912
    %v2050 = vpop.f32.mrb[0].mxu0
    %v2051 = vadd.f32 0.0, %v2050
    %v2052 = vpop.f32.mrb[0].mxu0
    %2053 = vmatprep.mubr.f32.mxu0 0.0
    %2054 = vmatmul.mubr.f32.gmra.mrb[0].mxu0 %v1915
    %v2055 = vpop.f32.mrb[0].mxu0
    %v2056 = vadd.f32 0.0, %v2055
    %v2057 = vpop.f32.mrb[0].mxu0
    %2058 = vmatprep.mubr.f32.mxu0 0.0
    %2059 = vmatmul.mubr.f32.gmra.mrb[0].mxu0 %v1918
    %v2060 = vpop.f32.mrb[0].mxu0
    %v2061 = vadd.f32 0.0, %v2060
    %v2062 = vpop.f32.mrb[0].mxu0
    %2063 = vmatprep.mubr.f32.mxu0 0.0
    %2064 = vmatmul.mubr.f32.gmra.mrb[0].mxu0 %v1921
    %v2065 = vpop.f32.mrb[0].mxu0
    %v2066 = vadd.f32 0.0, %v2065
    %v2067 = vpop.f32.mrb[0].mxu0
    %2068 = vmatprep.mubr.f32.mxu0 0.0
    %2069 = vmatmul.mubr.f32.gmra.mrb[0].mxu0 %v1924
    %v2070 = vpop.f32.mrb[0].mxu0
    %v2071 = vadd.f32 0.0, %v2070
    %v2072 = vpop.f32.mrb[0].mxu0
    %2073 = vmatprep.mubr.f32.mxu0 0.0
    %2074 = vmatmul.mubr.f32.gmra.mrb[0].mxu0 %v1927
    %v2075 = vpop.f32.mrb[0].mxu0
    %v2076 = vadd.f32 0.0, %v2075
    %v2077 = vpop.f32.mrb[0].mxu0
    %2078 = vdwg.mxu0
    %v2080 = vsel %vm123, %v1834, 0
    %v2083 = vsel %vm123, %v1835, 0
    %v2086 = vsel %vm123, %v1836, 0
    %v2089 = vsel %vm123, %v1837, 0
    %v2092 = vsel %vm123, %v1838, 0
    %v2095 = vsel %vm123, %v1839, 0
    %v2098 = vsel %vm123, %v1840, 0
    %v2101 = vsel %vm123, %v1841, 0
    %v2104 = vsel %vm123, %v1842, 0
    %v2107 = vsel %vm123, %v1843, 0
    %v2110 = vsel %vm123, %v1844, 0
    %v2113 = vsel %vm123, %v1845, 0
    %v2116 = vsel %vm123, %v1846, 0
    %v2119 = vsel %vm123, %v1847, 0
    %v2122 = vsel %vm123, %v1848, 0
    %v2125 = vsel %vm123, %v1849, 0
    %v2128 = vsel %vm123, %v1850, 0
    %2130 = vmatprep.subr.mxu0 0.0
    %2131 = vmatpush1.msra.mxu0 %v1852
    %2132 = vmatprep.subr.mxu0 0.0
    %2133 = vmatpush1.msra.mxu0 %v1853
    %2134 = vmatprep.subr.mxu0 0.0
    %2135 = vmatpush1.msra.mxu0 %v1854
    %2136 = vmatprep.subr.mxu0 0.0
    %2137 = vmatpush1.msra.mxu0 %v1855
    %2138 = vmatprep.subr.mxu0 0.0
    %2139 = vmatpush1.msra.mxu0 0.0
    %2140 = vmatprep.subr.mxu0 0.0
    %2141 = vmatpush1.msra.mxu0 0.0
    %2142 = vmatprep.subr.mxu0 0.0
    %2143 = vmatpush1.msra.mxu0 0.0
    %2144 = vmatprep.subr.mxu0 0.0
    %2145 = vmatpush1.msra.mxu0 0.0
    %2146 = vmatprep.subr.mxu0 0.0
    %2147 = vmatpush1.msra.mxu0 0.0
    %2148 = vmatprep.subr.mxu0 0.0
    %2149 = vmatpush1.msra.mxu0 0.0
    %2150 = vmatprep.subr.mxu0 0.0
    %2151 = vmatpush1.msra.mxu0 0.0
    %2152 = vmatprep.subr.mxu0 0.0
    %2153 = vmatpush1.msra.mxu0 0.0
    %2154 = vmatprep.subr.mxu0 0.0
    %2155 = vmatpush1.msra.mxu0 0.0
    %2156 = vmatprep.subr.mxu0 0.0
    %2157 = vmatpush1.msra.mxu0 0.0
    %2158 = vmatprep.subr.mxu0 0.0
    %2159 = vmatpush1.msra.mxu0 0.0
    %2160 = vmatprep.subr.mxu0 0.0
    %2161 = vmatpush1.msra.mxu0 0.0
    %2162 = vmatprep.subr.mxu0 0.0
    %2163 = vmatpush1.msra.mxu0 0.0
    %2164 = vmatprep.subr.mxu0 0.0
    %2165 = vmatpush1.msra.mxu0 0.0
    %2166 = vmatprep.subr.mxu0 0.0
    %2167 = vmatpush1.msra.mxu0 0.0
    %2168 = vmatprep.subr.mxu0 0.0
    %2169 = vmatpush1.msra.mxu0 0.0
    %2170 = vmatprep.subr.mxu0 0.0
    %2171 = vmatpush1.msra.mxu0 0.0
    %2172 = vmatprep.subr.mxu0 0.0
    %2173 = vmatpush1.msra.mxu0 0.0
    %2174 = vmatprep.subr.mxu0 0.0
    %2175 = vmatpush1.msra.mxu0 0.0
    %2176 = vmatprep.subr.mxu0 0.0
    %2177 = vmatpush1.msra.mxu0 0.0
    %2178 = vmatprep.subr.mxu0 0.0
    %2179 = vmatpush1.msra.mxu0 0.0
    %2180 = vmatprep.subr.mxu0 0.0
    %2181 = vmatpush1.msra.mxu0 0.0
    %2182 = vmatprep.subr.mxu0 0.0
    %2183 = vmatpush1.msra.mxu0 0.0
    %2184 = vmatprep.subr.mxu0 0.0
    %2185 = vmatpush1.msra.mxu0 0.0
    %2186 = vmatprep.subr.mxu0 0.0
    %2187 = vmatpush1.msra.mxu0 0.0
    %2188 = vmatprep.subr.mxu0 0.0
    %2189 = vmatpush1.msra.mxu0 0.0
    %2190 = vmatprep.subr.mxu0 0.0
    %2191 = vmatpush1.msra.mxu0 0.0
    %2192 = vmatprep.subr.mxu0 0.0
    %2193 = vmatpush1.msra.mxu0 0.0
    %2194 = vmatprep.mubr.f32.mxu0 0.0
    %2195 = vmatmul.mubr.f32.gmra.mrb[0].mxu0 %v2080
    %v2196 = vpop.f32.mrb[0].mxu0
    %v2197 = vadd.f32 %v1996, %v2196
    %v2198 = vpop.f32.mrb[0].mxu0
    %2199 = vmatprep.mubr.f32.mxu0 0.0
    %2200 = vmatmul.mubr.f32.gmra.mrb[0].mxu0 %v2083
    %v2201 = vpop.f32.mrb[0].mxu0
    %v2202 = vadd.f32 %v2001, %v2201
    %v2203 = vpop.f32.mrb[0].mxu0
    %2204 = vmatprep.mubr.f32.mxu0 0.0
    %2205 = vmatmul.mubr.f32.gmra.mrb[0].mxu0 %v2086
    %v2206 = vpop.f32.mrb[0].mxu0
    %v2207 = vadd.f32 %v2006, %v2206
    %v2208 = vpop.f32.mrb[0].mxu0
    %2209 = vmatprep.mubr.f32.mxu0 0.0
    %2210 = vmatmul.mubr.f32.gmra.mrb[0].mxu0 %v2089
    %v2211 = vpop.f32.mrb[0].mxu0
    %v2212 = vadd.f32 %v2011, %v2211
    %v2213 = vpop.f32.mrb[0].mxu0
    %2214 = vmatprep.mubr.f32.mxu0 0.0
    %2215 = vmatmul.mubr.f32.gmra.mrb[0].mxu0 %v2092
    %v2216 = vpop.f32.mrb[0].mxu0
    %v2217 = vadd.f32 %v2016, %v2216
    %v2218 = vpop.f32.mrb[0].mxu0
    %2219 = vmatprep.mubr.f32.mxu0 0.0
    %2220 = vmatmul.mubr.f32.gmra.mrb[0].mxu0 %v2095
    %v2221 = vpop.f32.mrb[0].mxu0
    %v2222 = vadd.f32 %v2021, %v2221
    %v2223 = vpop.f32.mrb[0].mxu0
    %2224 = vmatprep.mubr.f32.mxu0 0.0
    %2225 = vmatmul.mubr.f32.gmra.mrb[0].mxu0 %v2098
    %v2226 = vpop.f32.mrb[0].mxu0
    %v2227 = vadd.f32 %v2026, %v2226
    %v2228 = vpop.f32.mrb[0].mxu0
    %2229 = vmatprep.mubr.f32.mxu0 0.0
    %2230 = vmatmul.mubr.f32.gmra.mrb[0].mxu0 %v2101
    %v2231 = vpop.f32.mrb[0].mxu0
    %v2232 = vadd.f32 %v2031, %v2231
    %v2233 = vpop.f32.mrb[0].mxu0
    %2234 = vmatprep.mubr.f32.mxu0 0.0
    %2235 = vmatmul.mubr.f32.gmra.mrb[0].mxu0 %v2104
    %v2236 = vpop.f32.mrb[0].mxu0
    %v2237 = vadd.f32 %v2036, %v2236
    %v2238 = vpop.f32.mrb[0].mxu0
    %2239 = vmatprep.mubr.f32.mxu0 0.0
    %2240 = vmatmul.mubr.f32.gmra.mrb[0].mxu0 %v2107
    %v2241 = vpop.f32.mrb[0].mxu0
    %v2242 = vadd.f32 %v2041, %v2241
    %v2243 = vpop.f32.mrb[0].mxu0
    %2244 = vmatprep.mubr.f32.mxu0 0.0
    %2245 = vmatmul.mubr.f32.gmra.mrb[0].mxu0 %v2110
    %v2246 = vpop.f32.mrb[0].mxu0
    %v2247 = vadd.f32 %v2046, %v2246
    %v2248 = vpop.f32.mrb[0].mxu0
    %2249 = vmatprep.mubr.f32.mxu0 0.0
    %2250 = vmatmul.mubr.f32.gmra.mrb[0].mxu0 %v2113
    %v2251 = vpop.f32.mrb[0].mxu0
    %v2252 = vadd.f32 %v2051, %v2251
    %v2253 = vpop.f32.mrb[0].mxu0
    %2254 = vmatprep.mubr.f32.mxu0 0.0
    %2255 = vmatmul.mubr.f32.gmra.mrb[0].mxu0 %v2116
    %v2256 = vpop.f32.mrb[0].mxu0
    %v2257 = vadd.f32 %v2056, %v2256
    %v2258 = vpop.f32.mrb[0].mxu0
    %2259 = vmatprep.mubr.f32.mxu0 0.0
    %2260 = vmatmul.mubr.f32.gmra.mrb[0].mxu0 %v2119
    %v2261 = vpop.f32.mrb[0].mxu0
    %v2262 = vadd.f32 %v2061, %v2261
    %v2263 = vpop.f32.mrb[0].mxu0
    %2264 = vmatprep.mubr.f32.mxu0 0.0
    %2265 = vmatmul.mubr.f32.gmra.mrb[0].mxu0 %v2122
    %v2266 = vpop.f32.mrb[0].mxu0
    %v2267 = vadd.f32 %v2066, %v2266
    %v2268 = vpop.f32.mrb[0].mxu0
    %2269 = vmatprep.mubr.f32.mxu0 0.0
    %2270 = vmatmul.mubr.f32.gmra.mrb[0].mxu0 %v2125
    %v2271 = vpop.f32.mrb[0].mxu0
    %v2272 = vadd.f32 %v2071, %v2271
    %v2273 = vpop.f32.mrb[0].mxu0
    %2274 = vmatprep.mubr.f32.mxu0 0.0
    %2275 = vmatmul.mubr.f32.gmra.mrb[0].mxu0 %v2128
    %v2276 = vpop.f32.mrb[0].mxu0
    %v2277 = vadd.f32 %v2076, %v2276
    %v2278 = vpop.f32.mrb[0].mxu0
    %2279 = vdwg.mxu0
    %v2280 = vld [vmem:[#allocation2 + $0x2] sm:$0xff]
    %v2281 = vld [vmem:[#allocation2 + $0xa] sm:$0xff]
    %v2282 = vld [vmem:[#allocation2 + $0x12] sm:$0xff]
    %v2283 = vld [vmem:[#allocation2 + $0x1a] sm:$0xff]
    %v2284 = vld [vmem:[#allocation2 + $0x22] sm:$0xff]
    %v2285 = vld [vmem:[#allocation2 + $0x2a] sm:$0xff]
    %v2286 = vld [vmem:[#allocation2 + $0x32] sm:$0xff]
    %v2287 = vld [vmem:[#allocation2 + $0x3a] sm:$0xff]
    %v2288 = vld [vmem:[#allocation2 + $0x42] sm:$0xff]
    %v2289 = vld [vmem:[#allocation2 + $0x4a] sm:$0xff]
    %v2290 = vld [vmem:[#allocation2 + $0x52] sm:$0xff]
    %v2291 = vld [vmem:[#allocation2 + $0x5a] sm:$0xff]
    %v2292 = vld [vmem:[#allocation2 + $0x62] sm:$0xff]
    %v2293 = vld [vmem:[#allocation2 + $0x6a] sm:$0xff]
    %v2294 = vld [vmem:[#allocation2 + $0x72] sm:$0xff]
    %v2295 = vld [vmem:[#allocation2 + $0x7a] sm:$0xff]
    %v2296 = vld [vmem:[#allocation2 + $0x82] sm:$0xf]
    %s2297 = scalar_lea.vmem %s3, 256
    %v2298 = vld [vmem:[%s2297] sm:$0xff]
    %v2299 = vld [vmem:[%s2297 + $0x8] sm:$0xff]
    %v2300 = vld [vmem:[%s2297 + $0x10] sm:$0xff]
    %v2301 = vld [vmem:[%s2297 + $0x18] sm:$0xff]
    %v2303 = vsel %vm123, %v2280, 0
    %v2306 = vsel %vm123, %v2281, 0
    %v2309 = vsel %vm123, %v2282, 0
    %v2312 = vsel %vm123, %v2283, 0
    %v2315 = vsel %vm123, %v2284, 0
    %v2318 = vsel %vm123, %v2285, 0
    %v2321 = vsel %vm123, %v2286, 0
    %v2324 = vsel %vm123, %v2287, 0
    %v2327 = vsel %vm123, %v2288, 0
    %v2330 = vsel %vm123, %v2289, 0
    %v2333 = vsel %vm123, %v2290, 0
    %v2336 = vsel %vm123, %v2291, 0
    %v2339 = vsel %vm123, %v2292, 0
    %v2342 = vsel %vm123, %v2293, 0
    %v2345 = vsel %vm123, %v2294, 0
    %v2348 = vsel %vm123, %v2295, 0
    %v2351 = vsel %vm123, %v2296, 0
    %2353 = vmatprep.subr.mxu0 0.0
    %2354 = vmatpush1.msra.mxu0 %v2298
    %2355 = vmatprep.subr.mxu0 0.0
    %2356 = vmatpush1.msra.mxu0 %v2299
    %2357 = vmatprep.subr.mxu0 0.0
    %2358 = vmatpush1.msra.mxu0 %v2300
    %2359 = vmatprep.subr.mxu0 0.0
    %2360 = vmatpush1.msra.mxu0 %v2301
    %2361 = vmatprep.subr.mxu0 0.0
    %2362 = vmatpush1.msra.mxu0 0.0
    %2363 = vmatprep.subr.mxu0 0.0
    %2364 = vmatpush1.msra.mxu0 0.0
    %2365 = vmatprep.subr.mxu0 0.0
    %2366 = vmatpush1.msra.mxu0 0.0
    %2367 = vmatprep.subr.mxu0 0.0
    %2368 = vmatpush1.msra.mxu0 0.0
    %2369 = vmatprep.subr.mxu0 0.0
    %2370 = vmatpush1.msra.mxu0 0.0
    %2371 = vmatprep.subr.mxu0 0.0
    %2372 = vmatpush1.msra.mxu0 0.0
    %2373 = vmatprep.subr.mxu0 0.0
    %2374 = vmatpush1.msra.mxu0 0.0
    %2375 = vmatprep.subr.mxu0 0.0
    %2376 = vmatpush1.msra.mxu0 0.0
    %2377 = vmatprep.subr.mxu0 0.0
    %2378 = vmatpush1.msra.mxu0 0.0
    %2379 = vmatprep.subr.mxu0 0.0
    %2380 = vmatpush1.msra.mxu0 0.0
    %2381 = vmatprep.subr.mxu0 0.0
    %2382 = vmatpush1.msra.mxu0 0.0
    %2383 = vmatprep.subr.mxu0 0.0
    %2384 = vmatpush1.msra.mxu0 0.0
    %2385 = vmatprep.subr.mxu0 0.0
    %2386 = vmatpush1.msra.mxu0 0.0
    %2387 = vmatprep.subr.mxu0 0.0
    %2388 = vmatpush1.msra.mxu0 0.0
    %2389 = vmatprep.subr.mxu0 0.0
    %2390 = vmatpush1.msra.mxu0 0.0
    %2391 = vmatprep.subr.mxu0 0.0
    %2392 = vmatpush1.msra.mxu0 0.0
    %2393 = vmatprep.subr.mxu0 0.0
    %2394 = vmatpush1.msra.mxu0 0.0
    %2395 = vmatprep.subr.mxu0 0.0
    %2396 = vmatpush1.msra.mxu0 0.0
    %2397 = vmatprep.subr.mxu0 0.0
    %2398 = vmatpush1.msra.mxu0 0.0
    %2399 = vmatprep.subr.mxu0 0.0
    %2400 = vmatpush1.msra.mxu0 0.0
    %2401 = vmatprep.subr.mxu0 0.0
    %2402 = vmatpush1.msra.mxu0 0.0
    %2403 = vmatprep.subr.mxu0 0.0
    %2404 = vmatpush1.msra.mxu0 0.0
    %2405 = vmatprep.subr.mxu0 0.0
    %2406 = vmatpush1.msra.mxu0 0.0
    %2407 = vmatprep.subr.mxu0 0.0
    %2408 = vmatpush1.msra.mxu0 0.0
    %2409 = vmatprep.subr.mxu0 0.0
    %2410 = vmatpush1.msra.mxu0 0.0
    %2411 = vmatprep.subr.mxu0 0.0
    %2412 = vmatpush1.msra.mxu0 0.0
    %2413 = vmatprep.subr.mxu0 0.0
    %2414 = vmatpush1.msra.mxu0 0.0
    %2415 = vmatprep.subr.mxu0 0.0
    %2416 = vmatpush1.msra.mxu0 0.0
    %2417 = vmatprep.mubr.f32.mxu0 0.0
    %2418 = vmatmul.mubr.f32.gmra.mrb[0].mxu0 %v2303
    %v2419 = vpop.f32.mrb[0].mxu0
    %v2420 = vadd.f32 0.0, %v2419
    %v2421 = vpop.f32.mrb[0].mxu0
    %2422 = vmatprep.mubr.f32.mxu0 0.0
    %2423 = vmatmul.mubr.f32.gmra.mrb[0].mxu0 %v2306
    %v2424 = vpop.f32.mrb[0].mxu0
    %v2425 = vadd.f32 0.0, %v2424
    %v2426 = vpop.f32.mrb[0].mxu0
    %2427 = vmatprep.mubr.f32.mxu0 0.0
    %2428 = vmatmul.mubr.f32.gmra.mrb[0].mxu0 %v2309
    %v2429 = vpop.f32.mrb[0].mxu0
    %v2430 = vadd.f32 0.0, %v2429
    %v2431 = vpop.f32.mrb[0].mxu0
    %2432 = vmatprep.mubr.f32.mxu0 0.0
    %2433 = vmatmul.mubr.f32.gmra.mrb[0].mxu0 %v2312
    %v2434 = vpop.f32.mrb[0].mxu0
    %v2435 = vadd.f32 0.0, %v2434
    %v2436 = vpop.f32.mrb[0].mxu0
    %2437 = vmatprep.mubr.f32.mxu0 0.0
    %2438 = vmatmul.mubr.f32.gmra.mrb[0].mxu0 %v2315
    %v2439 = vpop.f32.mrb[0].mxu0
    %v2440 = vadd.f32 0.0, %v2439
    %v2441 = vpop.f32.mrb[0].mxu0
    %2442 = vmatprep.mubr.f32.mxu0 0.0
    %2443 = vmatmul.mubr.f32.gmra.mrb[0].mxu0 %v2318
    %v2444 = vpop.f32.mrb[0].mxu0
    %v2445 = vadd.f32 0.0, %v2444
    %v2446 = vpop.f32.mrb[0].mxu0
    %2447 = vmatprep.mubr.f32.mxu0 0.0
    %2448 = vmatmul.mubr.f32.gmra.mrb[0].mxu0 %v2321
    %v2449 = vpop.f32.mrb[0].mxu0
    %v2450 = vadd.f32 0.0, %v2449
    %v2451 = vpop.f32.mrb[0].mxu0
    %2452 = vmatprep.mubr.f32.mxu0 0.0
    %2453 = vmatmul.mubr.f32.gmra.mrb[0].mxu0 %v2324
    %v2454 = vpop.f32.mrb[0].mxu0
    %v2455 = vadd.f32 0.0, %v2454
    %v2456 = vpop.f32.mrb[0].mxu0
    %2457 = vmatprep.mubr.f32.mxu0 0.0
    %2458 = vmatmul.mubr.f32.gmra.mrb[0].mxu0 %v2327
    %v2459 = vpop.f32.mrb[0].mxu0
    %v2460 = vadd.f32 0.0, %v2459
    %v2461 = vpop.f32.mrb[0].mxu0
    %2462 = vmatprep.mubr.f32.mxu0 0.0
    %2463 = vmatmul.mubr.f32.gmra.mrb[0].mxu0 %v2330
    %v2464 = vpop.f32.mrb[0].mxu0
    %v2465 = vadd.f32 0.0, %v2464
    %v2466 = vpop.f32.mrb[0].mxu0
    %2467 = vmatprep.mubr.f32.mxu0 0.0
    %2468 = vmatmul.mubr.f32.gmra.mrb[0].mxu0 %v2333
    %v2469 = vpop.f32.mrb[0].mxu0
    %v2470 = vadd.f32 0.0, %v2469
    %v2471 = vpop.f32.mrb[0].mxu0
    %2472 = vmatprep.mubr.f32.mxu0 0.0
    %2473 = vmatmul.mubr.f32.gmra.mrb[0].mxu0 %v2336
    %v2474 = vpop.f32.mrb[0].mxu0
    %v2475 = vadd.f32 0.0, %v2474
    %v2476 = vpop.f32.mrb[0].mxu0
    %2477 = vmatprep.mubr.f32.mxu0 0.0
    %2478 = vmatmul.mubr.f32.gmra.mrb[0].mxu0 %v2339
    %v2479 = vpop.f32.mrb[0].mxu0
    %v2480 = vadd.f32 0.0, %v2479
    %v2481 = vpop.f32.mrb[0].mxu0
    %2482 = vmatprep.mubr.f32.mxu0 0.0
    %2483 = vmatmul.mubr.f32.gmra.mrb[0].mxu0 %v2342
    %v2484 = vpop.f32.mrb[0].mxu0
    %v2485 = vadd.f32 0.0, %v2484
    %v2486 = vpop.f32.mrb[0].mxu0
    %2487 = vmatprep.mubr.f32.mxu0 0.0
    %2488 = vmatmul.mubr.f32.gmra.mrb[0].mxu0 %v2345
    %v2489 = vpop.f32.mrb[0].mxu0
    %v2490 = vadd.f32 0.0, %v2489
    %v2491 = vpop.f32.mrb[0].mxu0
    %2492 = vmatprep.mubr.f32.mxu0 0.0
    %2493 = vmatmul.mubr.f32.gmra.mrb[0].mxu0 %v2348
    %v2494 = vpop.f32.mrb[0].mxu0
    %v2495 = vadd.f32 0.0, %v2494
    %v2496 = vpop.f32.mrb[0].mxu0
    %2497 = vmatprep.mubr.f32.mxu0 0.0
    %2498 = vmatmul.mubr.f32.gmra.mrb[0].mxu0 %v2351
    %v2499 = vpop.f32.mrb[0].mxu0
    %v2500 = vadd.f32 0.0, %v2499
    %v2501 = vpop.f32.mrb[0].mxu0
    %2502 = vdwg.mxu0
    %v2503 = vadd.f32 %v2197, %v2420
    %v2504 = vadd.f32 %v2202, %v2425
    %v2505 = vadd.f32 %v2207, %v2430
    %v2506 = vadd.f32 %v2212, %v2435
    %v2507 = vadd.f32 %v2217, %v2440
    %v2508 = vadd.f32 %v2222, %v2445
    %v2509 = vadd.f32 %v2227, %v2450
    %v2510 = vadd.f32 %v2232, %v2455
    %v2511 = vadd.f32 %v2237, %v2460
    %v2512 = vadd.f32 %v2242, %v2465
    %v2513 = vadd.f32 %v2247, %v2470
    %v2514 = vadd.f32 %v2252, %v2475
    %v2515 = vadd.f32 %v2257, %v2480
    %v2516 = vadd.f32 %v2262, %v2485
    %v2517 = vadd.f32 %v2267, %v2490
    %v2518 = vadd.f32 %v2272, %v2495
    %v2519 = vadd.f32 %v2277, %v2500
    %s2520 = scalar_lea.vmem %s5, 2
    %v2521 = vld [vmem:[%s2520] sm:$0x1]
    %v2523 = vlaneseq
    %v2524 = vshrl.u32 %v2523, 7
    %v2525 = vsub.s32 0, %v2524
    %v2526 = vrot.slane %v2521, %v2525
    %v2528 = vadd.f32 %v2503, %v2526
    %v2529 = vadd.f32 %v2504, %v2526
    %v2530 = vadd.f32 %v2505, %v2526
    %v2531 = vadd.f32 %v2506, %v2526
    %v2532 = vadd.f32 %v2507, %v2526
    %v2533 = vadd.f32 %v2508, %v2526
    %v2534 = vadd.f32 %v2509, %v2526
    %v2535 = vadd.f32 %v2510, %v2526
    %v2536 = vadd.f32 %v2511, %v2526
    %v2537 = vadd.f32 %v2512, %v2526
    %v2538 = vadd.f32 %v2513, %v2526
    %v2539 = vadd.f32 %v2514, %v2526
    %v2540 = vadd.f32 %v2515, %v2526
    %v2541 = vadd.f32 %v2516, %v2526
    %v2542 = vadd.f32 %v2517, %v2526
    %v2543 = vadd.f32 %v2518, %v2526
    %v2544 = vadd.f32 %v2519, %v2526
    %v2545 = vmul.f32 %v2528, 0.999995
    %v2546 = vmul.f32 %v2529, 0.999995
    %v2547 = vmul.f32 %v2530, 0.999995
    %v2548 = vmul.f32 %v2531, 0.999995
    %v2549 = vmul.f32 %v2532, 0.999995
    %v2550 = vmul.f32 %v2533, 0.999995
    %v2551 = vmul.f32 %v2534, 0.999995
    %v2552 = vmul.f32 %v2535, 0.999995
    %v2553 = vmul.f32 %v2536, 0.999995
    %v2554 = vmul.f32 %v2537, 0.999995
    %v2555 = vmul.f32 %v2538, 0.999995
    %v2556 = vmul.f32 %v2539, 0.999995
    %v2557 = vmul.f32 %v2540, 0.999995
    %v2558 = vmul.f32 %v2541, 0.999995
    %v2559 = vmul.f32 %v2542, 0.999995
    %v2560 = vmul.f32 %v2543, 0.999995
    %v2561 = vmul.f32 %v2544, 0.999995
    %v2562 = vmax.f32 %v2545, 0.0
    %v2563 = vmax.f32 %v2546, 0.0
    %v2564 = vmax.f32 %v2547, 0.0
    %v2565 = vmax.f32 %v2548, 0.0
    %v2566 = vmax.f32 %v2549, 0.0
    %v2567 = vmax.f32 %v2550, 0.0
    %v2568 = vmax.f32 %v2551, 0.0
    %v2569 = vmax.f32 %v2552, 0.0
    %v2570 = vmax.f32 %v2553, 0.0
    %v2571 = vmax.f32 %v2554, 0.0
    %v2572 = vmax.f32 %v2555, 0.0
    %v2573 = vmax.f32 %v2556, 0.0
    %v2574 = vmax.f32 %v2557, 0.0
    %v2575 = vmax.f32 %v2558, 0.0
    %v2576 = vmax.f32 %v2559, 0.0
    %v2577 = vmax.f32 %v2560, 0.0
    %v2578 = vmax.f32 %v2561, 0.0
    %v2579 = vmul.f32 %v2562, %v938
    %v2580 = vmul.f32 %v2563, %v943
    %v2581 = vmul.f32 %v2564, %v948
    %v2582 = vmul.f32 %v2565, %v953
    %v2583 = vmul.f32 %v2566, %v958
    %v2584 = vmul.f32 %v2567, %v963
    %v2585 = vmul.f32 %v2568, %v968
    %v2586 = vmul.f32 %v2569, %v973
    %v2587 = vmul.f32 %v2570, %v978
    %v2588 = vmul.f32 %v2571, %v983
    %v2589 = vmul.f32 %v2572, %v988
    %v2590 = vmul.f32 %v2573, %v993
    %v2591 = vmul.f32 %v2574, %v998
    %v2592 = vmul.f32 %v2575, %v1003
    %v2593 = vmul.f32 %v2576, %v1008
    %v2594 = vmul.f32 %v2577, %v1013
    %v2595 = vmul.f32 %v2578, %v1018
    %2596 = vst.msk [vmem:[#allocation2 + $0x1] sm:$0xff] %vm123, %v2579
    %2597 = vst.msk [vmem:[#allocation2 + $0x9] sm:$0xff] %vm123, %v2580
    %2598 = vst.msk [vmem:[#allocation2 + $0x11] sm:$0xff] %vm123, %v2581
    %2599 = vst.msk [vmem:[#allocation2 + $0x19] sm:$0xff] %vm123, %v2582
    %2600 = vst.msk [vmem:[#allocation2 + $0x21] sm:$0xff] %vm123, %v2583
    %2601 = vst.msk [vmem:[#allocation2 + $0x29] sm:$0xff] %vm123, %v2584
    %2602 = vst.msk [vmem:[#allocation2 + $0x31] sm:$0xff] %vm123, %v2585
    %2603 = vst.msk [vmem:[#allocation2 + $0x39] sm:$0xff] %vm123, %v2586
    %2604 = vst.msk [vmem:[#allocation2 + $0x41] sm:$0xff] %vm123, %v2587
    %2605 = vst.msk [vmem:[#allocation2 + $0x49] sm:$0xff] %vm123, %v2588
    %2606 = vst.msk [vmem:[#allocation2 + $0x51] sm:$0xff] %vm123, %v2589
    %2607 = vst.msk [vmem:[#allocation2 + $0x59] sm:$0xff] %vm123, %v2590
    %2608 = vst.msk [vmem:[#allocation2 + $0x61] sm:$0xff] %vm123, %v2591
    %2609 = vst.msk [vmem:[#allocation2 + $0x69] sm:$0xff] %vm123, %v2592
    %2610 = vst.msk [vmem:[#allocation2 + $0x71] sm:$0xff] %vm123, %v2593
    %2611 = vst.msk [vmem:[#allocation2 + $0x79] sm:$0xff] %vm123, %v2594
    %2612 = vst.msk [vmem:[#allocation2 + $0x81] sm:$0xf] %vm1053, %v2595
    %v2613 = vld [vmem:[%s9] sm:$0xff]
    %v2614 = vld [vmem:[%s9 + $0x8] sm:$0xff]
    %v2615 = vld [vmem:[%s9 + $0x10] sm:$0xff]
    %v2616 = vld [vmem:[%s9 + $0x18] sm:$0xff]
    %v2618 = vsel %vm123, %v884, 0
    %v2621 = vsel %vm123, %v885, 0
    %v2624 = vsel %vm123, %v886, 0
    %v2627 = vsel %vm123, %v887, 0
    %v2630 = vsel %vm123, %v888, 0
    %v2633 = vsel %vm123, %v889, 0
    %v2636 = vsel %vm123, %v890, 0
    %v2639 = vsel %vm123, %v891, 0
    %v2642 = vsel %vm123, %v892, 0
    %v2645 = vsel %vm123, %v893, 0
    %v2648 = vsel %vm123, %v894, 0
    %v2651 = vsel %vm123, %v895, 0
    %v2654 = vsel %vm123, %v896, 0
    %v2657 = vsel %vm123, %v897, 0
    %v2660 = vsel %vm123, %v898, 0
    %v2663 = vsel %vm123, %v899, 0
    %v2666 = vsel %vm123, %v900, 0
    %2668 = vmatprep.subr.mxu0 0.0
    %2669 = vmatpush1.msra.mxu0 %v2613
    %2670 = vmatprep.subr.mxu0 0.0
    %2671 = vmatpush1.msra.mxu0 %v2614
    %2672 = vmatprep.subr.mxu0 0.0
    %2673 = vmatpush1.msra.mxu0 %v2615
    %2674 = vmatprep.subr.mxu0 0.0
    %2675 = vmatpush1.msra.mxu0 %v2616
    %2676 = vmatprep.subr.mxu0 0.0
    %2677 = vmatpush1.msra.mxu0 0.0
    %2678 = vmatprep.subr.mxu0 0.0
    %2679 = vmatpush1.msra.mxu0 0.0
    %2680 = vmatprep.subr.mxu0 0.0
    %2681 = vmatpush1.msra.mxu0 0.0
    %2682 = vmatprep.subr.mxu0 0.0
    %2683 = vmatpush1.msra.mxu0 0.0
    %2684 = vmatprep.subr.mxu0 0.0
    %2685 = vmatpush1.msra.mxu0 0.0
    %2686 = vmatprep.subr.mxu0 0.0
    %2687 = vmatpush1.msra.mxu0 0.0
    %2688 = vmatprep.subr.mxu0 0.0
    %2689 = vmatpush1.msra.mxu0 0.0
    %2690 = vmatprep.subr.mxu0 0.0
    %2691 = vmatpush1.msra.mxu0 0.0
    %2692 = vmatprep.subr.mxu0 0.0
    %2693 = vmatpush1.msra.mxu0 0.0
    %2694 = vmatprep.subr.mxu0 0.0
    %2695 = vmatpush1.msra.mxu0 0.0
    %2696 = vmatprep.subr.mxu0 0.0
    %2697 = vmatpush1.msra.mxu0 0.0
    %2698 = vmatprep.subr.mxu0 0.0
    %2699 = vmatpush1.msra.mxu0 0.0
    %2700 = vmatprep.subr.mxu0 0.0
    %2701 = vmatpush1.msra.mxu0 0.0
    %2702 = vmatprep.subr.mxu0 0.0
    %2703 = vmatpush1.msra.mxu0 0.0
    %2704 = vmatprep.subr.mxu0 0.0
    %2705 = vmatpush1.msra.mxu0 0.0
    %2706 = vmatprep.subr.mxu0 0.0
    %2707 = vmatpush1.msra.mxu0 0.0
    %2708 = vmatprep.subr.mxu0 0.0
    %2709 = vmatpush1.msra.mxu0 0.0
    %2710 = vmatprep.subr.mxu0 0.0
    %2711 = vmatpush1.msra.mxu0 0.0
    %2712 = vmatprep.subr.mxu0 0.0
    %2713 = vmatpush1.msra.mxu0 0.0
    %2714 = vmatprep.subr.mxu0 0.0
    %2715 = vmatpush1.msra.mxu0 0.0
    %2716 = vmatprep.subr.mxu0 0.0
    %2717 = vmatpush1.msra.mxu0 0.0
    %2718 = vmatprep.subr.mxu0 0.0
    %2719 = vmatpush1.msra.mxu0 0.0
    %2720 = vmatprep.subr.mxu0 0.0
    %2721 = vmatpush1.msra.mxu0 0.0
    %2722 = vmatprep.subr.mxu0 0.0
    %2723 = vmatpush1.msra.mxu0 0.0
    %2724 = vmatprep.subr.mxu0 0.0
    %2725 = vmatpush1.msra.mxu0 0.0
    %2726 = vmatprep.subr.mxu0 0.0
    %2727 = vmatpush1.msra.mxu0 0.0
    %2728 = vmatprep.subr.mxu0 0.0
    %2729 = vmatpush1.msra.mxu0 0.0
    %2730 = vmatprep.subr.mxu0 0.0
    %2731 = vmatpush1.msra.mxu0 0.0
    %2732 = vmatprep.mubr.f32.mxu0 0.0
    %2733 = vmatmul.mubr.f32.gmra.mrb[0].mxu0 %v2618
    %v2734 = vpop.f32.mrb[0].mxu0
    %v2735 = vadd.f32 0.0, %v2734
    %v2736 = vpop.f32.mrb[0].mxu0
    %2737 = vmatprep.mubr.f32.mxu0 0.0
    %2738 = vmatmul.mubr.f32.gmra.mrb[0].mxu0 %v2621
    %v2739 = vpop.f32.mrb[0].mxu0
    %v2740 = vadd.f32 0.0, %v2739
    %v2741 = vpop.f32.mrb[0].mxu0
    %2742 = vmatprep.mubr.f32.mxu0 0.0
    %2743 = vmatmul.mubr.f32.gmra.mrb[0].mxu0 %v2624
    %v2744 = vpop.f32.mrb[0].mxu0
    %v2745 = vadd.f32 0.0, %v2744
    %v2746 = vpop.f32.mrb[0].mxu0
    %2747 = vmatprep.mubr.f32.mxu0 0.0
    %2748 = vmatmul.mubr.f32.gmra.mrb[0].mxu0 %v2627
    %v2749 = vpop.f32.mrb[0].mxu0
    %v2750 = vadd.f32 0.0, %v2749
    %v2751 = vpop.f32.mrb[0].mxu0
    %2752 = vmatprep.mubr.f32.mxu0 0.0
    %2753 = vmatmul.mubr.f32.gmra.mrb[0].mxu0 %v2630
    %v2754 = vpop.f32.mrb[0].mxu0
    %v2755 = vadd.f32 0.0, %v2754
    %v2756 = vpop.f32.mrb[0].mxu0
    %2757 = vmatprep.mubr.f32.mxu0 0.0
    %2758 = vmatmul.mubr.f32.gmra.mrb[0].mxu0 %v2633
    %v2759 = vpop.f32.mrb[0].mxu0
    %v2760 = vadd.f32 0.0, %v2759
    %v2761 = vpop.f32.mrb[0].mxu0
    %2762 = vmatprep.mubr.f32.mxu0 0.0
    %2763 = vmatmul.mubr.f32.gmra.mrb[0].mxu0 %v2636
    %v2764 = vpop.f32.mrb[0].mxu0
    %v2765 = vadd.f32 0.0, %v2764
    %v2766 = vpop.f32.mrb[0].mxu0
    %2767 = vmatprep.mubr.f32.mxu0 0.0
    %2768 = vmatmul.mubr.f32.gmra.mrb[0].mxu0 %v2639
    %v2769 = vpop.f32.mrb[0].mxu0
    %v2770 = vadd.f32 0.0, %v2769
    %v2771 = vpop.f32.mrb[0].mxu0
    %2772 = vmatprep.mubr.f32.mxu0 0.0
    %2773 = vmatmul.mubr.f32.gmra.mrb[0].mxu0 %v2642
    %v2774 = vpop.f32.mrb[0].mxu0
    %v2775 = vadd.f32 0.0, %v2774
    %v2776 = vpop.f32.mrb[0].mxu0
    %2777 = vmatprep.mubr.f32.mxu0 0.0
    %2778 = vmatmul.mubr.f32.gmra.mrb[0].mxu0 %v2645
    %v2779 = vpop.f32.mrb[0].mxu0
    %v2780 = vadd.f32 0.0, %v2779
    %v2781 = vpop.f32.mrb[0].mxu0
    %2782 = vmatprep.mubr.f32.mxu0 0.0
    %2783 = vmatmul.mubr.f32.gmra.mrb[0].mxu0 %v2648
    %v2784 = vpop.f32.mrb[0].mxu0
    %v2785 = vadd.f32 0.0, %v2784
    %v2786 = vpop.f32.mrb[0].mxu0
    %2787 = vmatprep.mubr.f32.mxu0 0.0
    %2788 = vmatmul.mubr.f32.gmra.mrb[0].mxu0 %v2651
    %v2789 = vpop.f32.mrb[0].mxu0
    %v2790 = vadd.f32 0.0, %v2789
    %v2791 = vpop.f32.mrb[0].mxu0
    %2792 = vmatprep.mubr.f32.mxu0 0.0
    %2793 = vmatmul.mubr.f32.gmra.mrb[0].mxu0 %v2654
    %v2794 = vpop.f32.mrb[0].mxu0
    %v2795 = vadd.f32 0.0, %v2794
    %v2796 = vpop.f32.mrb[0].mxu0
    %2797 = vmatprep.mubr.f32.mxu0 0.0
    %2798 = vmatmul.mubr.f32.gmra.mrb[0].mxu0 %v2657
    %v2799 = vpop.f32.mrb[0].mxu0
    %v2800 = vadd.f32 0.0, %v2799
    %v2801 = vpop.f32.mrb[0].mxu0
    %2802 = vmatprep.mubr.f32.mxu0 0.0
    %2803 = vmatmul.mubr.f32.gmra.mrb[0].mxu0 %v2660
    %v2804 = vpop.f32.mrb[0].mxu0
    %v2805 = vadd.f32 0.0, %v2804
    %v2806 = vpop.f32.mrb[0].mxu0
    %2807 = vmatprep.mubr.f32.mxu0 0.0
    %2808 = vmatmul.mubr.f32.gmra.mrb[0].mxu0 %v2663
    %v2809 = vpop.f32.mrb[0].mxu0
    %v2810 = vadd.f32 0.0, %v2809
    %v2811 = vpop.f32.mrb[0].mxu0
    %2812 = vmatprep.mubr.f32.mxu0 0.0
    %2813 = vmatmul.mubr.f32.gmra.mrb[0].mxu0 %v2666
    %v2814 = vpop.f32.mrb[0].mxu0
    %v2815 = vadd.f32 0.0, %v2814
    %v2816 = vpop.f32.mrb[0].mxu0
    %2817 = vdwg.mxu0
    %v2818 = vadd.f32 %v2579, %v2735
    %v2819 = vadd.f32 %v2580, %v2740
    %v2820 = vadd.f32 %v2581, %v2745
    %v2821 = vadd.f32 %v2582, %v2750
    %v2822 = vadd.f32 %v2583, %v2755
    %v2823 = vadd.f32 %v2584, %v2760
    %v2824 = vadd.f32 %v2585, %v2765
    %v2825 = vadd.f32 %v2586, %v2770
    %v2826 = vadd.f32 %v2587, %v2775
    %v2827 = vadd.f32 %v2588, %v2780
    %v2828 = vadd.f32 %v2589, %v2785
    %v2829 = vadd.f32 %v2590, %v2790
    %v2830 = vadd.f32 %v2591, %v2795
    %v2831 = vadd.f32 %v2592, %v2800
    %v2832 = vadd.f32 %v2593, %v2805
    %v2833 = vadd.f32 %v2594, %v2810
    %v2834 = vadd.f32 %v2595, %v2815
    %v2835 = vld [vmem:[%s11] sm:$0xff]
    %v2836 = vld [vmem:[%s11 + $0x8] sm:$0xff]
    %v2837 = vld [vmem:[%s11 + $0x10] sm:$0xff]
    %v2838 = vld [vmem:[%s11 + $0x18] sm:$0xff]
    %v2839 = vld [vmem:[%s11 + $0x20] sm:$0xff]
    %v2840 = vld [vmem:[%s11 + $0x28] sm:$0xff]
    %v2841 = vld [vmem:[%s11 + $0x30] sm:$0xff]
    %v2842 = vld [vmem:[%s11 + $0x38] sm:$0xff]
    %v2843 = vld [vmem:[%s11 + $0x40] sm:$0xff]
    %v2844 = vld [vmem:[%s11 + $0x48] sm:$0xff]
    %v2845 = vld [vmem:[%s11 + $0x50] sm:$0xff]
    %v2846 = vld [vmem:[%s11 + $0x58] sm:$0xff]
    %v2847 = vld [vmem:[%s11 + $0x60] sm:$0xff]
    %v2848 = vld [vmem:[%s11 + $0x68] sm:$0xff]
    %v2849 = vld [vmem:[%s11 + $0x70] sm:$0xff]
    %v2850 = vld [vmem:[%s11 + $0x78] sm:$0xff]
    %v2851 = vld [vmem:[%s11 + $0x80] sm:$0xff]
    %v2852 = vld [vmem:[%s11 + $0x88] sm:$0xff]
    %v2853 = vld [vmem:[%s11 + $0x90] sm:$0xff]
    %v2854 = vld [vmem:[%s11 + $0x98] sm:$0xff]
    %v2855 = vld [vmem:[%s11 + $0xa0] sm:$0xff]
    %v2856 = vld [vmem:[%s11 + $0xa8] sm:$0xff]
    %v2857 = vld [vmem:[%s11 + $0xb0] sm:$0xff]
    %v2858 = vld [vmem:[%s11 + $0xb8] sm:$0xff]
    %v2859 = vld [vmem:[%s11 + $0xc0] sm:$0xff]
    %v2860 = vld [vmem:[%s11 + $0xc8] sm:$0xff]
    %v2861 = vld [vmem:[%s11 + $0xd0] sm:$0xff]
    %v2862 = vld [vmem:[%s11 + $0xd8] sm:$0xff]
    %v2863 = vld [vmem:[%s11 + $0xe0] sm:$0xff]
    %v2864 = vld [vmem:[%s11 + $0xe8] sm:$0xff]
    %v2865 = vld [vmem:[%s11 + $0xf0] sm:$0xff]
    %v2866 = vld [vmem:[%s11 + $0xf8] sm:$0xff]
    %vm2867 = vcmask 31744
    %v2869 = vsel %vm2867, %v2836, 0
    %v2872 = vsel %vm2867, %v2838, 0
    %v2875 = vsel %vm2867, %v2840, 0
    %v2878 = vsel %vm2867, %v2842, 0
    %v2881 = vsel %vm2867, %v2844, 0
    %v2884 = vsel %vm2867, %v2846, 0
    %v2887 = vsel %vm2867, %v2848, 0
    %v2890 = vsel %vm2867, %v2850, 0
    %v2893 = vsel %vm2867, %v2852, 0
    %v2896 = vsel %vm2867, %v2854, 0
    %v2899 = vsel %vm2867, %v2856, 0
    %v2902 = vsel %vm2867, %v2858, 0
    %v2905 = vsel %vm2867, %v2860, 0
    %v2908 = vsel %vm2867, %v2862, 0
    %v2911 = vsel %vm2867, %v2864, 0
    %v2914 = vsel %vm2867, %v2866, 0
    %vm2916 = vcmask 1043456
    %v2918 = vsel %vm2916, %v2834, 0
    %2920 = vmatprep.subr.mxu0 0.0
    %2921 = vmatpush1.msra.mxu0 %v2818
    %2922 = vmatprep.subr.mxu0 0.0
    %2923 = vmatpush1.msra.mxu0 %v2819
    %2924 = vmatprep.subr.mxu0 0.0
    %2925 = vmatpush1.msra.mxu0 %v2820
    %2926 = vmatprep.subr.mxu0 0.0
    %2927 = vmatpush1.msra.mxu0 %v2821
    %2928 = vmatprep.subr.mxu0 0.0
    %2929 = vmatpush1.msra.mxu0 %v2822
    %2930 = vmatprep.subr.mxu0 0.0
    %2931 = vmatpush1.msra.mxu0 %v2823
    %2932 = vmatprep.subr.mxu0 0.0
    %2933 = vmatpush1.msra.mxu0 %v2824
    %2934 = vmatprep.subr.mxu0 0.0
    %2935 = vmatpush1.msra.mxu0 %v2825
    %2936 = vmatprep.subr.mxu0 0.0
    %2937 = vmatpush1.msra.mxu0 %v2826
    %2938 = vmatprep.subr.mxu0 0.0
    %2939 = vmatpush1.msra.mxu0 %v2827
    %2940 = vmatprep.subr.mxu0 0.0
    %2941 = vmatpush1.msra.mxu0 %v2828
    %2942 = vmatprep.subr.mxu0 0.0
    %2943 = vmatpush1.msra.mxu0 %v2829
    %2944 = vmatprep.subr.mxu0 0.0
    %2945 = vmatpush1.msra.mxu0 %v2830
    %2946 = vmatprep.subr.mxu0 0.0
    %2947 = vmatpush1.msra.mxu0 %v2831
    %2948 = vmatprep.subr.mxu0 0.0
    %2949 = vmatpush1.msra.mxu0 %v2832
    %2950 = vmatprep.subr.mxu0 0.0
    %2951 = vmatpush1.msra.mxu0 %v2833
    %2952 = vmatprep.subr.mxu0 0.0
    %2953 = vmatpush1.msra.mxu0 %v2918
    %2954 = vmatprep.subr.mxu0 0.0
    %2955 = vmatpush1.msra.mxu0 0.0
    %2956 = vmatprep.subr.mxu0 0.0
    %2957 = vmatpush1.msra.mxu0 0.0
    %2958 = vmatprep.subr.mxu0 0.0
    %2959 = vmatpush1.msra.mxu0 0.0
    %2960 = vmatprep.subr.mxu0 0.0
    %2961 = vmatpush1.msra.mxu0 0.0
    %2962 = vmatprep.subr.mxu0 0.0
    %2963 = vmatpush1.msra.mxu0 0.0
    %2964 = vmatprep.subr.mxu0 0.0
    %2965 = vmatpush1.msra.mxu0 0.0
    %2966 = vmatprep.subr.mxu0 0.0
    %2967 = vmatpush1.msra.mxu0 0.0
    %2968 = vmatprep.subr.mxu0 0.0
    %2969 = vmatpush1.msra.mxu0 0.0
    %2970 = vmatprep.subr.mxu0 0.0
    %2971 = vmatpush1.msra.mxu0 0.0
    %2972 = vmatprep.subr.mxu0 0.0
    %2973 = vmatpush1.msra.mxu0 0.0
    %2974 = vmatprep.subr.mxu0 0.0
    %2975 = vmatpush1.msra.mxu0 0.0
    %2976 = vmatprep.subr.mxu0 0.0
    %2977 = vmatpush1.msra.mxu0 0.0
    %2978 = vmatprep.subr.mxu0 0.0
    %2979 = vmatpush1.msra.mxu0 0.0
    %2980 = vmatprep.subr.mxu0 0.0
    %2981 = vmatpush1.msra.mxu0 0.0
    %2982 = vmatprep.subr.mxu0 0.0
    %2983 = vmatpush1.msra.mxu0 0.0
    %2984 = vmatprep.mubr.f32.mxu0 %v2869
    %2985 = vmatmul.mubr.f32.gmra.mrb[0].mxu0 %v2835
    %v2986 = vpop.f32.mrb[0].mxu0
    %v2987 = vadd.f32 0.0, %v2986
    %v2988 = vpop.f32.mrb[0].mxu0
    %2989 = vmatprep.mubr.f32.mxu0 %v2872
    %2990 = vmatmul.mubr.f32.gmra.mrb[0].mxu0 %v2837
    %v2991 = vpop.f32.mrb[0].mxu0
    %v2992 = vadd.f32 0.0, %v2991
    %v2993 = vpop.f32.mrb[0].mxu0
    %2994 = vmatprep.mubr.f32.mxu0 %v2875
    %2995 = vmatmul.mubr.f32.gmra.mrb[0].mxu0 %v2839
    %v2996 = vpop.f32.mrb[0].mxu0
    %v2997 = vadd.f32 0.0, %v2996
    %v2998 = vpop.f32.mrb[0].mxu0
    %2999 = vmatprep.mubr.f32.mxu0 %v2878
    %3000 = vmatmul.mubr.f32.gmra.mrb[0].mxu0 %v2841
    %v3001 = vpop.f32.mrb[0].mxu0
    %v3002 = vadd.f32 0.0, %v3001
    %v3003 = vpop.f32.mrb[0].mxu0
    %3004 = vmatprep.mubr.f32.mxu0 %v2881
    %3005 = vmatmul.mubr.f32.gmra.mrb[0].mxu0 %v2843
    %v3006 = vpop.f32.mrb[0].mxu0
    %v3007 = vadd.f32 0.0, %v3006
    %v3008 = vpop.f32.mrb[0].mxu0
    %3009 = vmatprep.mubr.f32.mxu0 %v2884
    %3010 = vmatmul.mubr.f32.gmra.mrb[0].mxu0 %v2845
    %v3011 = vpop.f32.mrb[0].mxu0
    %v3012 = vadd.f32 0.0, %v3011
    %v3013 = vpop.f32.mrb[0].mxu0
    %3014 = vmatprep.mubr.f32.mxu0 %v2887
    %3015 = vmatmul.mubr.f32.gmra.mrb[0].mxu0 %v2847
    %v3016 = vpop.f32.mrb[0].mxu0
    %v3017 = vadd.f32 0.0, %v3016
    %v3018 = vpop.f32.mrb[0].mxu0
    %3019 = vmatprep.mubr.f32.mxu0 %v2890
    %3020 = vmatmul.mubr.f32.gmra.mrb[0].mxu0 %v2849
    %v3021 = vpop.f32.mrb[0].mxu0
    %v3022 = vadd.f32 0.0, %v3021
    %v3023 = vpop.f32.mrb[0].mxu0
    %3024 = vmatprep.mubr.f32.mxu0 %v2893
    %3025 = vmatmul.mubr.f32.gmra.mrb[0].mxu0 %v2851
    %v3026 = vpop.f32.mrb[0].mxu0
    %v3027 = vadd.f32 0.0, %v3026
    %v3028 = vpop.f32.mrb[0].mxu0
    %3029 = vmatprep.mubr.f32.mxu0 %v2896
    %3030 = vmatmul.mubr.f32.gmra.mrb[0].mxu0 %v2853
    %v3031 = vpop.f32.mrb[0].mxu0
    %v3032 = vadd.f32 0.0, %v3031
    %v3033 = vpop.f32.mrb[0].mxu0
    %3034 = vmatprep.mubr.f32.mxu0 %v2899
    %3035 = vmatmul.mubr.f32.gmra.mrb[0].mxu0 %v2855
    %v3036 = vpop.f32.mrb[0].mxu0
    %v3037 = vadd.f32 0.0, %v3036
    %v3038 = vpop.f32.mrb[0].mxu0
    %3039 = vmatprep.mubr.f32.mxu0 %v2902
    %3040 = vmatmul.mubr.f32.gmra.mrb[0].mxu0 %v2857
    %v3041 = vpop.f32.mrb[0].mxu0
    %v3042 = vadd.f32 0.0, %v3041
    %v3043 = vpop.f32.mrb[0].mxu0
    %3044 = vmatprep.mubr.f32.mxu0 %v2905
    %3045 = vmatmul.mubr.f32.gmra.mrb[0].mxu0 %v2859
    %v3046 = vpop.f32.mrb[0].mxu0
    %v3047 = vadd.f32 0.0, %v3046
    %v3048 = vpop.f32.mrb[0].mxu0
    %3049 = vmatprep.mubr.f32.mxu0 %v2908
    %3050 = vmatmul.mubr.f32.gmra.mrb[0].mxu0 %v2861
    %v3051 = vpop.f32.mrb[0].mxu0
    %v3052 = vadd.f32 0.0, %v3051
    %v3053 = vpop.f32.mrb[0].mxu0
    %3054 = vmatprep.mubr.f32.mxu0 %v2911
    %3055 = vmatmul.mubr.f32.gmra.mrb[0].mxu0 %v2863
    %v3056 = vpop.f32.mrb[0].mxu0
    %v3057 = vadd.f32 0.0, %v3056
    %v3058 = vpop.f32.mrb[0].mxu0
    %3059 = vmatprep.mubr.f32.mxu0 %v2914
    %3060 = vmatmul.mubr.f32.gmra.mrb[0].mxu0 %v2865
    %v3061 = vpop.f32.mrb[0].mxu0
    %v3062 = vadd.f32 0.0, %v3061
    %v3063 = vpop.f32.mrb[0].mxu0
    %3064 = vdwg.mxu0
    %v3065 = vld [vmem:[%s13] sm:$0xff]
    %v3066 = vld [vmem:[%s13 + $0x8] sm:$0xff]
    %v3067 = vld [vmem:[%s13 + $0x10] sm:$0xff]
    %v3068 = vld [vmem:[%s13 + $0x18] sm:$0xff]
    %s3069 = scalar_lea.vmem %s13, 32
    %v3070 = vld [vmem:[%s3069] sm:$0xff]
    %v3071 = vld [vmem:[%s3069 + $0x8] sm:$0xff]
    %v3072 = vld [vmem:[%s3069 + $0x10] sm:$0xff]
    %v3073 = vld [vmem:[%s3069 + $0x18] sm:$0xff]
    %v3075 = vsel %vm123, %v2997, 0
    %v3078 = vsel %vm123, %v3002, 0
    %3080 = vmatprep.subr.mxu0 0.0
    %3081 = vmatpush1.msra.mxu0 %v3070
    %3082 = vmatprep.subr.mxu0 0.0
    %3083 = vmatpush1.msra.mxu0 %v3071
    %3084 = vmatprep.subr.mxu0 0.0
    %3085 = vmatpush1.msra.mxu0 %v3072
    %3086 = vmatprep.subr.mxu0 0.0
    %3087 = vmatpush1.msra.mxu0 %v3073
    %3088 = vmatprep.subr.mxu0 0.0
    %3089 = vmatpush1.msra.mxu0 0.0
    %3090 = vmatprep.subr.mxu0 0.0
    %3091 = vmatpush1.msra.mxu0 0.0
    %3092 = vmatprep.subr.mxu0 0.0
    %3093 = vmatpush1.msra.mxu0 0.0
    %3094 = vmatprep.subr.mxu0 0.0
    %3095 = vmatpush1.msra.mxu0 0.0
    %3096 = vmatprep.subr.mxu0 0.0
    %3097 = vmatpush1.msra.mxu0 0.0
    %3098 = vmatprep.subr.mxu0 0.0
    %3099 = vmatpush1.msra.mxu0 0.0
    %3100 = vmatprep.subr.mxu0 0.0
    %3101 = vmatpush1.msra.mxu0 0.0
    %3102 = vmatprep.subr.mxu0 0.0
    %3103 = vmatpush1.msra.mxu0 0.0
    %3104 = vmatprep.subr.mxu0 0.0
    %3105 = vmatpush1.msra.mxu0 0.0
    %3106 = vmatprep.subr.mxu0 0.0
    %3107 = vmatpush1.msra.mxu0 0.0
    %3108 = vmatprep.subr.mxu0 0.0
    %3109 = vmatpush1.msra.mxu0 0.0
    %3110 = vmatprep.subr.mxu0 0.0
    %3111 = vmatpush1.msra.mxu0 0.0
    %3112 = vmatprep.subr.mxu0 0.0
    %3113 = vmatpush1.msra.mxu0 0.0
    %3114 = vmatprep.subr.mxu0 0.0
    %3115 = vmatpush1.msra.mxu0 0.0
    %3116 = vmatprep.subr.mxu0 0.0
    %3117 = vmatpush1.msra.mxu0 0.0
    %3118 = vmatprep.subr.mxu0 0.0
    %3119 = vmatpush1.msra.mxu0 0.0
    %3120 = vmatprep.subr.mxu0 0.0
    %3121 = vmatpush1.msra.mxu0 0.0
    %3122 = vmatprep.subr.mxu0 0.0
    %3123 = vmatpush1.msra.mxu0 0.0
    %3124 = vmatprep.subr.mxu0 0.0
    %3125 = vmatpush1.msra.mxu0 0.0
    %3126 = vmatprep.subr.mxu0 0.0
    %3127 = vmatpush1.msra.mxu0 0.0
    %3128 = vmatprep.subr.mxu0 0.0
    %3129 = vmatpush1.msra.mxu0 0.0
    %3130 = vmatprep.subr.mxu0 0.0
    %3131 = vmatpush1.msra.mxu0 0.0
    %3132 = vmatprep.subr.mxu0 0.0
    %3133 = vmatpush1.msra.mxu0 0.0
    %3134 = vmatprep.subr.mxu0 0.0
    %3135 = vmatpush1.msra.mxu0 0.0
    %3136 = vmatprep.subr.mxu0 0.0
    %3137 = vmatpush1.msra.mxu0 0.0
    %3138 = vmatprep.subr.mxu0 0.0
    %3139 = vmatpush1.msra.mxu0 0.0
    %3140 = vmatprep.subr.mxu0 0.0
    %3141 = vmatpush1.msra.mxu0 0.0
    %3142 = vmatprep.subr.mxu0 0.0
    %3143 = vmatpush1.msra.mxu0 0.0
    %3144 = vmatprep.mubr.f32.mxu0 0.0
    %3145 = vmatmul.mubr.f32.gmra.mrb[0].mxu0 %v3075
    %v3146 = vpop.f32.mrb[0].mxu0
    %v3147 = vadd.f32 0.0, %v3146
    %v3148 = vpop.f32.mrb[0].mxu0
    %3149 = vmatprep.mubr.f32.mxu0 0.0
    %3150 = vmatmul.mubr.f32.gmra.mrb[0].mxu0 %v3078
    %v3151 = vpop.f32.mrb[0].mxu0
    %v3152 = vadd.f32 0.0, %v3151
    %v3153 = vpop.f32.mrb[0].mxu0
    %3154 = vdwg.mxu0
    %v3156 = vsel %vm123, %v2987, 0
    %v3159 = vsel %vm123, %v2992, 0
    %3161 = vmatprep.subr.mxu0 0.0
    %3162 = vmatpush1.msra.mxu0 %v3065
    %3163 = vmatprep.subr.mxu0 0.0
    %3164 = vmatpush1.msra.mxu0 %v3066
    %3165 = vmatprep.subr.mxu0 0.0
    %3166 = vmatpush1.msra.mxu0 %v3067
    %3167 = vmatprep.subr.mxu0 0.0
    %3168 = vmatpush1.msra.mxu0 %v3068
    %3169 = vmatprep.subr.mxu0 0.0
    %3170 = vmatpush1.msra.mxu0 0.0
    %3171 = vmatprep.subr.mxu0 0.0
    %3172 = vmatpush1.msra.mxu0 0.0
    %3173 = vmatprep.subr.mxu0 0.0
    %3174 = vmatpush1.msra.mxu0 0.0
    %3175 = vmatprep.subr.mxu0 0.0
    %3176 = vmatpush1.msra.mxu0 0.0
    %3177 = vmatprep.subr.mxu0 0.0
    %3178 = vmatpush1.msra.mxu0 0.0
    %3179 = vmatprep.subr.mxu0 0.0
    %3180 = vmatpush1.msra.mxu0 0.0
    %3181 = vmatprep.subr.mxu0 0.0
    %3182 = vmatpush1.msra.mxu0 0.0
    %3183 = vmatprep.subr.mxu0 0.0
    %3184 = vmatpush1.msra.mxu0 0.0
    %3185 = vmatprep.subr.mxu0 0.0
    %3186 = vmatpush1.msra.mxu0 0.0
    %3187 = vmatprep.subr.mxu0 0.0
    %3188 = vmatpush1.msra.mxu0 0.0
    %3189 = vmatprep.subr.mxu0 0.0
    %3190 = vmatpush1.msra.mxu0 0.0
    %3191 = vmatprep.subr.mxu0 0.0
    %3192 = vmatpush1.msra.mxu0 0.0
    %3193 = vmatprep.subr.mxu0 0.0
    %3194 = vmatpush1.msra.mxu0 0.0
    %3195 = vmatprep.subr.mxu0 0.0
    %3196 = vmatpush1.msra.mxu0 0.0
    %3197 = vmatprep.subr.mxu0 0.0
    %3198 = vmatpush1.msra.mxu0 0.0
    %3199 = vmatprep.subr.mxu0 0.0
    %3200 = vmatpush1.msra.mxu0 0.0
    %3201 = vmatprep.subr.mxu0 0.0
    %3202 = vmatpush1.msra.mxu0 0.0
    %3203 = vmatprep.subr.mxu0 0.0
    %3204 = vmatpush1.msra.mxu0 0.0
    %3205 = vmatprep.subr.mxu0 0.0
    %3206 = vmatpush1.msra.mxu0 0.0
    %3207 = vmatprep.subr.mxu0 0.0
    %3208 = vmatpush1.msra.mxu0 0.0
    %3209 = vmatprep.subr.mxu0 0.0
    %3210 = vmatpush1.msra.mxu0 0.0
    %3211 = vmatprep.subr.mxu0 0.0
    %3212 = vmatpush1.msra.mxu0 0.0
    %3213 = vmatprep.subr.mxu0 0.0
    %3214 = vmatpush1.msra.mxu0 0.0
    %3215 = vmatprep.subr.mxu0 0.0
    %3216 = vmatpush1.msra.mxu0 0.0
    %3217 = vmatprep.subr.mxu0 0.0
    %3218 = vmatpush1.msra.mxu0 0.0
    %3219 = vmatprep.subr.mxu0 0.0
    %3220 = vmatpush1.msra.mxu0 0.0
    %3221 = vmatprep.subr.mxu0 0.0
    %3222 = vmatpush1.msra.mxu0 0.0
    %3223 = vmatprep.subr.mxu0 0.0
    %3224 = vmatpush1.msra.mxu0 0.0
    %3225 = vmatprep.mubr.f32.mxu0 0.0
    %3226 = vmatmul.mubr.f32.gmra.mrb[0].mxu0 %v3156
    %v3227 = vpop.f32.mrb[0].mxu0
    %v3228 = vadd.f32 %v3147, %v3227
    %v3229 = vpop.f32.mrb[0].mxu0
    %3230 = vmatprep.mubr.f32.mxu0 0.0
    %3231 = vmatmul.mubr.f32.gmra.mrb[0].mxu0 %v3159
    %v3232 = vpop.f32.mrb[0].mxu0
    %v3233 = vadd.f32 %v3152, %v3232
    %v3234 = vpop.f32.mrb[0].mxu0
    %3235 = vdwg.mxu0
    %s3236 = scalar_lea.vmem %s13, 64
    %v3237 = vld [vmem:[%s3236] sm:$0xff]
    %v3238 = vld [vmem:[%s3236 + $0x8] sm:$0xff]
    %v3239 = vld [vmem:[%s3236 + $0x10] sm:$0xff]
    %v3240 = vld [vmem:[%s3236 + $0x18] sm:$0xff]
    %v3242 = vsel %vm123, %v3007, 0
    %v3245 = vsel %vm123, %v3012, 0
    %3247 = vmatprep.subr.mxu0 0.0
    %3248 = vmatpush1.msra.mxu0 %v3237
    %3249 = vmatprep.subr.mxu0 0.0
    %3250 = vmatpush1.msra.mxu0 %v3238
    %3251 = vmatprep.subr.mxu0 0.0
    %3252 = vmatpush1.msra.mxu0 %v3239
    %3253 = vmatprep.subr.mxu0 0.0
    %3254 = vmatpush1.msra.mxu0 %v3240
    %3255 = vmatprep.subr.mxu0 0.0
    %3256 = vmatpush1.msra.mxu0 0.0
    %3257 = vmatprep.subr.mxu0 0.0
    %3258 = vmatpush1.msra.mxu0 0.0
    %3259 = vmatprep.subr.mxu0 0.0
    %3260 = vmatpush1.msra.mxu0 0.0
    %3261 = vmatprep.subr.mxu0 0.0
    %3262 = vmatpush1.msra.mxu0 0.0
    %3263 = vmatprep.subr.mxu0 0.0
    %3264 = vmatpush1.msra.mxu0 0.0
    %3265 = vmatprep.subr.mxu0 0.0
    %3266 = vmatpush1.msra.mxu0 0.0
    %3267 = vmatprep.subr.mxu0 0.0
    %3268 = vmatpush1.msra.mxu0 0.0
    %3269 = vmatprep.subr.mxu0 0.0
    %3270 = vmatpush1.msra.mxu0 0.0
    %3271 = vmatprep.subr.mxu0 0.0
    %3272 = vmatpush1.msra.mxu0 0.0
    %3273 = vmatprep.subr.mxu0 0.0
    %3274 = vmatpush1.msra.mxu0 0.0
    %3275 = vmatprep.subr.mxu0 0.0
    %3276 = vmatpush1.msra.mxu0 0.0
    %3277 = vmatprep.subr.mxu0 0.0
    %3278 = vmatpush1.msra.mxu0 0.0
    %3279 = vmatprep.subr.mxu0 0.0
    %3280 = vmatpush1.msra.mxu0 0.0
    %3281 = vmatprep.subr.mxu0 0.0
    %3282 = vmatpush1.msra.mxu0 0.0
    %3283 = vmatprep.subr.mxu0 0.0
    %3284 = vmatpush1.msra.mxu0 0.0
    %3285 = vmatprep.subr.mxu0 0.0
    %3286 = vmatpush1.msra.mxu0 0.0
    %3287 = vmatprep.subr.mxu0 0.0
    %3288 = vmatpush1.msra.mxu0 0.0
    %3289 = vmatprep.subr.mxu0 0.0
    %3290 = vmatpush1.msra.mxu0 0.0
    %3291 = vmatprep.subr.mxu0 0.0
    %3292 = vmatpush1.msra.mxu0 0.0
    %3293 = vmatprep.subr.mxu0 0.0
    %3294 = vmatpush1.msra.mxu0 0.0
    %3295 = vmatprep.subr.mxu0 0.0
    %3296 = vmatpush1.msra.mxu0 0.0
    %3297 = vmatprep.subr.mxu0 0.0
    %3298 = vmatpush1.msra.mxu0 0.0
    %3299 = vmatprep.subr.mxu0 0.0
    %3300 = vmatpush1.msra.mxu0 0.0
    %3301 = vmatprep.subr.mxu0 0.0
    %3302 = vmatpush1.msra.mxu0 0.0
    %3303 = vmatprep.subr.mxu0 0.0
    %3304 = vmatpush1.msra.mxu0 0.0
    %3305 = vmatprep.subr.mxu0 0.0
    %3306 = vmatpush1.msra.mxu0 0.0
    %3307 = vmatprep.subr.mxu0 0.0
    %3308 = vmatpush1.msra.mxu0 0.0
    %3309 = vmatprep.subr.mxu0 0.0
    %3310 = vmatpush1.msra.mxu0 0.0
    %3311 = vmatprep.mubr.f32.mxu0 0.0
    %3312 = vmatmul.mubr.f32.gmra.mrb[0].mxu0 %v3242
    %v3313 = vpop.f32.mrb[0].mxu0
    %v3314 = vadd.f32 0.0, %v3313
    %v3315 = vpop.f32.mrb[0].mxu0
    %3316 = vmatprep.mubr.f32.mxu0 0.0
    %3317 = vmatmul.mubr.f32.gmra.mrb[0].mxu0 %v3245
    %v3318 = vpop.f32.mrb[0].mxu0
    %v3319 = vadd.f32 0.0, %v3318
    %v3320 = vpop.f32.mrb[0].mxu0
    %3321 = vdwg.mxu0
    %v3322 = vadd.f32 %v3228, %v3314
    %v3323 = vadd.f32 %v3233, %v3319
    %s3324 = scalar_lea.vmem %s13, 96
    %v3325 = vld [vmem:[%s3324] sm:$0xff]
    %v3326 = vld [vmem:[%s3324 + $0x8] sm:$0xff]
    %v3327 = vld [vmem:[%s3324 + $0x10] sm:$0xff]
    %v3328 = vld [vmem:[%s3324 + $0x18] sm:$0xff]
    %v3330 = vsel %vm123, %v3017, 0
    %v3333 = vsel %vm123, %v3022, 0
    %3335 = vmatprep.subr.mxu0 0.0
    %3336 = vmatpush1.msra.mxu0 %v3325
    %3337 = vmatprep.subr.mxu0 0.0
    %3338 = vmatpush1.msra.mxu0 %v3326
    %3339 = vmatprep.subr.mxu0 0.0
    %3340 = vmatpush1.msra.mxu0 %v3327
    %3341 = vmatprep.subr.mxu0 0.0
    %3342 = vmatpush1.msra.mxu0 %v3328
    %3343 = vmatprep.subr.mxu0 0.0
    %3344 = vmatpush1.msra.mxu0 0.0
    %3345 = vmatprep.subr.mxu0 0.0
    %3346 = vmatpush1.msra.mxu0 0.0
    %3347 = vmatprep.subr.mxu0 0.0
    %3348 = vmatpush1.msra.mxu0 0.0
    %3349 = vmatprep.subr.mxu0 0.0
    %3350 = vmatpush1.msra.mxu0 0.0
    %3351 = vmatprep.subr.mxu0 0.0
    %3352 = vmatpush1.msra.mxu0 0.0
    %3353 = vmatprep.subr.mxu0 0.0
    %3354 = vmatpush1.msra.mxu0 0.0
    %3355 = vmatprep.subr.mxu0 0.0
    %3356 = vmatpush1.msra.mxu0 0.0
    %3357 = vmatprep.subr.mxu0 0.0
    %3358 = vmatpush1.msra.mxu0 0.0
    %3359 = vmatprep.subr.mxu0 0.0
    %3360 = vmatpush1.msra.mxu0 0.0
    %3361 = vmatprep.subr.mxu0 0.0
    %3362 = vmatpush1.msra.mxu0 0.0
    %3363 = vmatprep.subr.mxu0 0.0
    %3364 = vmatpush1.msra.mxu0 0.0
    %3365 = vmatprep.subr.mxu0 0.0
    %3366 = vmatpush1.msra.mxu0 0.0
    %3367 = vmatprep.subr.mxu0 0.0
    %3368 = vmatpush1.msra.mxu0 0.0
    %3369 = vmatprep.subr.mxu0 0.0
    %3370 = vmatpush1.msra.mxu0 0.0
    %3371 = vmatprep.subr.mxu0 0.0
    %3372 = vmatpush1.msra.mxu0 0.0
    %3373 = vmatprep.subr.mxu0 0.0
    %3374 = vmatpush1.msra.mxu0 0.0
    %3375 = vmatprep.subr.mxu0 0.0
    %3376 = vmatpush1.msra.mxu0 0.0
    %3377 = vmatprep.subr.mxu0 0.0
    %3378 = vmatpush1.msra.mxu0 0.0
    %3379 = vmatprep.subr.mxu0 0.0
    %3380 = vmatpush1.msra.mxu0 0.0
    %3381 = vmatprep.subr.mxu0 0.0
    %3382 = vmatpush1.msra.mxu0 0.0
    %3383 = vmatprep.subr.mxu0 0.0
    %3384 = vmatpush1.msra.mxu0 0.0
    %3385 = vmatprep.subr.mxu0 0.0
    %3386 = vmatpush1.msra.mxu0 0.0
    %3387 = vmatprep.subr.mxu0 0.0
    %3388 = vmatpush1.msra.mxu0 0.0
    %3389 = vmatprep.subr.mxu0 0.0
    %3390 = vmatpush1.msra.mxu0 0.0
    %3391 = vmatprep.subr.mxu0 0.0
    %3392 = vmatpush1.msra.mxu0 0.0
    %3393 = vmatprep.subr.mxu0 0.0
    %3394 = vmatpush1.msra.mxu0 0.0
    %3395 = vmatprep.subr.mxu0 0.0
    %3396 = vmatpush1.msra.mxu0 0.0
    %3397 = vmatprep.subr.mxu0 0.0
    %3398 = vmatpush1.msra.mxu0 0.0
    %3399 = vmatprep.mubr.f32.mxu0 0.0
    %3400 = vmatmul.mubr.f32.gmra.mrb[0].mxu0 %v3330
    %v3401 = vpop.f32.mrb[0].mxu0
    %v3402 = vadd.f32 0.0, %v3401
    %v3403 = vpop.f32.mrb[0].mxu0
    %3404 = vmatprep.mubr.f32.mxu0 0.0
    %3405 = vmatmul.mubr.f32.gmra.mrb[0].mxu0 %v3333
    %v3406 = vpop.f32.mrb[0].mxu0
    %v3407 = vadd.f32 0.0, %v3406
    %v3408 = vpop.f32.mrb[0].mxu0
    %3409 = vdwg.mxu0
    %v3410 = vadd.f32 %v3322, %v3402
    %v3411 = vadd.f32 %v3323, %v3407
    %s3412 = scalar_lea.vmem %s13, 128
    %v3413 = vld [vmem:[%s3412] sm:$0xff]
    %v3414 = vld [vmem:[%s3412 + $0x8] sm:$0xff]
    %v3415 = vld [vmem:[%s3412 + $0x10] sm:$0xff]
    %v3416 = vld [vmem:[%s3412 + $0x18] sm:$0xff]
    %v3418 = vsel %vm123, %v3027, 0
    %v3421 = vsel %vm123, %v3032, 0
    %3423 = vmatprep.subr.mxu0 0.0
    %3424 = vmatpush1.msra.mxu0 %v3413
    %3425 = vmatprep.subr.mxu0 0.0
    %3426 = vmatpush1.msra.mxu0 %v3414
    %3427 = vmatprep.subr.mxu0 0.0
    %3428 = vmatpush1.msra.mxu0 %v3415
    %3429 = vmatprep.subr.mxu0 0.0
    %3430 = vmatpush1.msra.mxu0 %v3416
    %3431 = vmatprep.subr.mxu0 0.0
    %3432 = vmatpush1.msra.mxu0 0.0
    %3433 = vmatprep.subr.mxu0 0.0
    %3434 = vmatpush1.msra.mxu0 0.0
    %3435 = vmatprep.subr.mxu0 0.0
    %3436 = vmatpush1.msra.mxu0 0.0
    %3437 = vmatprep.subr.mxu0 0.0
    %3438 = vmatpush1.msra.mxu0 0.0
    %3439 = vmatprep.subr.mxu0 0.0
    %3440 = vmatpush1.msra.mxu0 0.0
    %3441 = vmatprep.subr.mxu0 0.0
    %3442 = vmatpush1.msra.mxu0 0.0
    %3443 = vmatprep.subr.mxu0 0.0
    %3444 = vmatpush1.msra.mxu0 0.0
    %3445 = vmatprep.subr.mxu0 0.0
    %3446 = vmatpush1.msra.mxu0 0.0
    %3447 = vmatprep.subr.mxu0 0.0
    %3448 = vmatpush1.msra.mxu0 0.0
    %3449 = vmatprep.subr.mxu0 0.0
    %3450 = vmatpush1.msra.mxu0 0.0
    %3451 = vmatprep.subr.mxu0 0.0
    %3452 = vmatpush1.msra.mxu0 0.0
    %3453 = vmatprep.subr.mxu0 0.0
    %3454 = vmatpush1.msra.mxu0 0.0
    %3455 = vmatprep.subr.mxu0 0.0
    %3456 = vmatpush1.msra.mxu0 0.0
    %3457 = vmatprep.subr.mxu0 0.0
    %3458 = vmatpush1.msra.mxu0 0.0
    %3459 = vmatprep.subr.mxu0 0.0
    %3460 = vmatpush1.msra.mxu0 0.0
    %3461 = vmatprep.subr.mxu0 0.0
    %3462 = vmatpush1.msra.mxu0 0.0
    %3463 = vmatprep.subr.mxu0 0.0
    %3464 = vmatpush1.msra.mxu0 0.0
    %3465 = vmatprep.subr.mxu0 0.0
    %3466 = vmatpush1.msra.mxu0 0.0
    %3467 = vmatprep.subr.mxu0 0.0
    %3468 = vmatpush1.msra.mxu0 0.0
    %3469 = vmatprep.subr.mxu0 0.0
    %3470 = vmatpush1.msra.mxu0 0.0
    %3471 = vmatprep.subr.mxu0 0.0
    %3472 = vmatpush1.msra.mxu0 0.0
    %3473 = vmatprep.subr.mxu0 0.0
    %3474 = vmatpush1.msra.mxu0 0.0
    %3475 = vmatprep.subr.mxu0 0.0
    %3476 = vmatpush1.msra.mxu0 0.0
    %3477 = vmatprep.subr.mxu0 0.0
    %3478 = vmatpush1.msra.mxu0 0.0
    %3479 = vmatprep.subr.mxu0 0.0
    %3480 = vmatpush1.msra.mxu0 0.0
    %3481 = vmatprep.subr.mxu0 0.0
    %3482 = vmatpush1.msra.mxu0 0.0
    %3483 = vmatprep.subr.mxu0 0.0
    %3484 = vmatpush1.msra.mxu0 0.0
    %3485 = vmatprep.subr.mxu0 0.0
    %3486 = vmatpush1.msra.mxu0 0.0
    %3487 = vmatprep.mubr.f32.mxu0 0.0
    %3488 = vmatmul.mubr.f32.gmra.mrb[0].mxu0 %v3418
    %v3489 = vpop.f32.mrb[0].mxu0
    %v3490 = vadd.f32 0.0, %v3489
    %v3491 = vpop.f32.mrb[0].mxu0
    %3492 = vmatprep.mubr.f32.mxu0 0.0
    %3493 = vmatmul.mubr.f32.gmra.mrb[0].mxu0 %v3421
    %v3494 = vpop.f32.mrb[0].mxu0
    %v3495 = vadd.f32 0.0, %v3494
    %v3496 = vpop.f32.mrb[0].mxu0
    %3497 = vdwg.mxu0
    %v3498 = vadd.f32 %v3410, %v3490
    %v3499 = vadd.f32 %v3411, %v3495
    %s3500 = scalar_lea.vmem %s13, 160
    %v3501 = vld [vmem:[%s3500] sm:$0xff]
    %v3502 = vld [vmem:[%s3500 + $0x8] sm:$0xff]
    %v3503 = vld [vmem:[%s3500 + $0x10] sm:$0xff]
    %v3504 = vld [vmem:[%s3500 + $0x18] sm:$0xff]
    %v3506 = vsel %vm123, %v3037, 0
    %v3509 = vsel %vm123, %v3042, 0
    %3511 = vmatprep.subr.mxu0 0.0
    %3512 = vmatpush1.msra.mxu0 %v3501
    %3513 = vmatprep.subr.mxu0 0.0
    %3514 = vmatpush1.msra.mxu0 %v3502
    %3515 = vmatprep.subr.mxu0 0.0
    %3516 = vmatpush1.msra.mxu0 %v3503
    %3517 = vmatprep.subr.mxu0 0.0
    %3518 = vmatpush1.msra.mxu0 %v3504
    %3519 = vmatprep.subr.mxu0 0.0
    %3520 = vmatpush1.msra.mxu0 0.0
    %3521 = vmatprep.subr.mxu0 0.0
    %3522 = vmatpush1.msra.mxu0 0.0
    %3523 = vmatprep.subr.mxu0 0.0
    %3524 = vmatpush1.msra.mxu0 0.0
    %3525 = vmatprep.subr.mxu0 0.0
    %3526 = vmatpush1.msra.mxu0 0.0
    %3527 = vmatprep.subr.mxu0 0.0
    %3528 = vmatpush1.msra.mxu0 0.0
    %3529 = vmatprep.subr.mxu0 0.0
    %3530 = vmatpush1.msra.mxu0 0.0
    %3531 = vmatprep.subr.mxu0 0.0
    %3532 = vmatpush1.msra.mxu0 0.0
    %3533 = vmatprep.subr.mxu0 0.0
    %3534 = vmatpush1.msra.mxu0 0.0
    %3535 = vmatprep.subr.mxu0 0.0
    %3536 = vmatpush1.msra.mxu0 0.0
    %3537 = vmatprep.subr.mxu0 0.0
    %3538 = vmatpush1.msra.mxu0 0.0
    %3539 = vmatprep.subr.mxu0 0.0
    %3540 = vmatpush1.msra.mxu0 0.0
    %3541 = vmatprep.subr.mxu0 0.0
    %3542 = vmatpush1.msra.mxu0 0.0
    %3543 = vmatprep.subr.mxu0 0.0
    %3544 = vmatpush1.msra.mxu0 0.0
    %3545 = vmatprep.subr.mxu0 0.0
    %3546 = vmatpush1.msra.mxu0 0.0
    %3547 = vmatprep.subr.mxu0 0.0
    %3548 = vmatpush1.msra.mxu0 0.0
    %3549 = vmatprep.subr.mxu0 0.0
    %3550 = vmatpush1.msra.mxu0 0.0
    %3551 = vmatprep.subr.mxu0 0.0
    %3552 = vmatpush1.msra.mxu0 0.0
    %3553 = vmatprep.subr.mxu0 0.0
    %3554 = vmatpush1.msra.mxu0 0.0
    %3555 = vmatprep.subr.mxu0 0.0
    %3556 = vmatpush1.msra.mxu0 0.0
    %3557 = vmatprep.subr.mxu0 0.0
    %3558 = vmatpush1.msra.mxu0 0.0
    %3559 = vmatprep.subr.mxu0 0.0
    %3560 = vmatpush1.msra.mxu0 0.0
    %3561 = vmatprep.subr.mxu0 0.0
    %3562 = vmatpush1.msra.mxu0 0.0
    %3563 = vmatprep.subr.mxu0 0.0
    %3564 = vmatpush1.msra.mxu0 0.0
    %3565 = vmatprep.subr.mxu0 0.0
    %3566 = vmatpush1.msra.mxu0 0.0
    %3567 = vmatprep.subr.mxu0 0.0
    %3568 = vmatpush1.msra.mxu0 0.0
    %3569 = vmatprep.subr.mxu0 0.0
    %3570 = vmatpush1.msra.mxu0 0.0
    %3571 = vmatprep.subr.mxu0 0.0
    %3572 = vmatpush1.msra.mxu0 0.0
    %3573 = vmatprep.subr.mxu0 0.0
    %3574 = vmatpush1.msra.mxu0 0.0
    %3575 = vmatprep.mubr.f32.mxu0 0.0
    %3576 = vmatmul.mubr.f32.gmra.mrb[0].mxu0 %v3506
    %v3577 = vpop.f32.mrb[0].mxu0
    %v3578 = vadd.f32 0.0, %v3577
    %v3579 = vpop.f32.mrb[0].mxu0
    %3580 = vmatprep.mubr.f32.mxu0 0.0
    %3581 = vmatmul.mubr.f32.gmra.mrb[0].mxu0 %v3509
    %v3582 = vpop.f32.mrb[0].mxu0
    %v3583 = vadd.f32 0.0, %v3582
    %v3584 = vpop.f32.mrb[0].mxu0
    %3585 = vdwg.mxu0
    %v3586 = vadd.f32 %v3498, %v3578
    %v3587 = vadd.f32 %v3499, %v3583
    %s3588 = scalar_lea.vmem %s13, 192
    %v3589 = vld [vmem:[%s3588] sm:$0xff]
    %v3590 = vld [vmem:[%s3588 + $0x8] sm:$0xff]
    %v3591 = vld [vmem:[%s3588 + $0x10] sm:$0xff]
    %v3592 = vld [vmem:[%s3588 + $0x18] sm:$0xff]
    %v3594 = vsel %vm123, %v3047, 0
    %v3597 = vsel %vm123, %v3052, 0
    %3599 = vmatprep.subr.mxu0 0.0
    %3600 = vmatpush1.msra.mxu0 %v3589
    %3601 = vmatprep.subr.mxu0 0.0
    %3602 = vmatpush1.msra.mxu0 %v3590
    %3603 = vmatprep.subr.mxu0 0.0
    %3604 = vmatpush1.msra.mxu0 %v3591
    %3605 = vmatprep.subr.mxu0 0.0
    %3606 = vmatpush1.msra.mxu0 %v3592
    %3607 = vmatprep.subr.mxu0 0.0
    %3608 = vmatpush1.msra.mxu0 0.0
    %3609 = vmatprep.subr.mxu0 0.0
    %3610 = vmatpush1.msra.mxu0 0.0
    %3611 = vmatprep.subr.mxu0 0.0
    %3612 = vmatpush1.msra.mxu0 0.0
    %3613 = vmatprep.subr.mxu0 0.0
    %3614 = vmatpush1.msra.mxu0 0.0
    %3615 = vmatprep.subr.mxu0 0.0
    %3616 = vmatpush1.msra.mxu0 0.0
    %3617 = vmatprep.subr.mxu0 0.0
    %3618 = vmatpush1.msra.mxu0 0.0
    %3619 = vmatprep.subr.mxu0 0.0
    %3620 = vmatpush1.msra.mxu0 0.0
    %3621 = vmatprep.subr.mxu0 0.0
    %3622 = vmatpush1.msra.mxu0 0.0
    %3623 = vmatprep.subr.mxu0 0.0
    %3624 = vmatpush1.msra.mxu0 0.0
    %3625 = vmatprep.subr.mxu0 0.0
    %3626 = vmatpush1.msra.mxu0 0.0
    %3627 = vmatprep.subr.mxu0 0.0
    %3628 = vmatpush1.msra.mxu0 0.0
    %3629 = vmatprep.subr.mxu0 0.0
    %3630 = vmatpush1.msra.mxu0 0.0
    %3631 = vmatprep.subr.mxu0 0.0
    %3632 = vmatpush1.msra.mxu0 0.0
    %3633 = vmatprep.subr.mxu0 0.0
    %3634 = vmatpush1.msra.mxu0 0.0
    %3635 = vmatprep.subr.mxu0 0.0
    %3636 = vmatpush1.msra.mxu0 0.0
    %3637 = vmatprep.subr.mxu0 0.0
    %3638 = vmatpush1.msra.mxu0 0.0
    %3639 = vmatprep.subr.mxu0 0.0
    %3640 = vmatpush1.msra.mxu0 0.0
    %3641 = vmatprep.subr.mxu0 0.0
    %3642 = vmatpush1.msra.mxu0 0.0
    %3643 = vmatprep.subr.mxu0 0.0
    %3644 = vmatpush1.msra.mxu0 0.0
    %3645 = vmatprep.subr.mxu0 0.0
    %3646 = vmatpush1.msra.mxu0 0.0
    %3647 = vmatprep.subr.mxu0 0.0
    %3648 = vmatpush1.msra.mxu0 0.0
    %3649 = vmatprep.subr.mxu0 0.0
    %3650 = vmatpush1.msra.mxu0 0.0
    %3651 = vmatprep.subr.mxu0 0.0
    %3652 = vmatpush1.msra.mxu0 0.0
    %3653 = vmatprep.subr.mxu0 0.0
    %3654 = vmatpush1.msra.mxu0 0.0
    %3655 = vmatprep.subr.mxu0 0.0
    %3656 = vmatpush1.msra.mxu0 0.0
    %3657 = vmatprep.subr.mxu0 0.0
    %3658 = vmatpush1.msra.mxu0 0.0
    %3659 = vmatprep.subr.mxu0 0.0
    %3660 = vmatpush1.msra.mxu0 0.0
    %3661 = vmatprep.subr.mxu0 0.0
    %3662 = vmatpush1.msra.mxu0 0.0
    %3663 = vmatprep.mubr.f32.mxu0 0.0
    %3664 = vmatmul.mubr.f32.gmra.mrb[0].mxu0 %v3594
    %v3665 = vpop.f32.mrb[0].mxu0
    %v3666 = vadd.f32 0.0, %v3665
    %v3667 = vpop.f32.mrb[0].mxu0
    %3668 = vmatprep.mubr.f32.mxu0 0.0
    %3669 = vmatmul.mubr.f32.gmra.mrb[0].mxu0 %v3597
    %v3670 = vpop.f32.mrb[0].mxu0
    %v3671 = vadd.f32 0.0, %v3670
    %v3672 = vpop.f32.mrb[0].mxu0
    %3673 = vdwg.mxu0
    %v3674 = vadd.f32 %v3586, %v3666
    %v3675 = vadd.f32 %v3587, %v3671
    %s3676 = scalar_lea.vmem %s13, 224
    %v3677 = vld [vmem:[%s3676] sm:$0xff]
    %v3678 = vld [vmem:[%s3676 + $0x8] sm:$0xff]
    %v3679 = vld [vmem:[%s3676 + $0x10] sm:$0xff]
    %v3680 = vld [vmem:[%s3676 + $0x18] sm:$0xff]
    %v3682 = vsel %vm123, %v3057, 0
    %v3685 = vsel %vm123, %v3062, 0
    %3687 = vmatprep.subr.mxu0 0.0
    %3688 = vmatpush1.msra.mxu0 %v3677
    %3689 = vmatprep.subr.mxu0 0.0
    %3690 = vmatpush1.msra.mxu0 %v3678
    %3691 = vmatprep.subr.mxu0 0.0
    %3692 = vmatpush1.msra.mxu0 %v3679
    %3693 = vmatprep.subr.mxu0 0.0
    %3694 = vmatpush1.msra.mxu0 %v3680
    %3695 = vmatprep.subr.mxu0 0.0
    %3696 = vmatpush1.msra.mxu0 0.0
    %3697 = vmatprep.subr.mxu0 0.0
    %3698 = vmatpush1.msra.mxu0 0.0
    %3699 = vmatprep.subr.mxu0 0.0
    %3700 = vmatpush1.msra.mxu0 0.0
    %3701 = vmatprep.subr.mxu0 0.0
    %3702 = vmatpush1.msra.mxu0 0.0
    %3703 = vmatprep.subr.mxu0 0.0
    %3704 = vmatpush1.msra.mxu0 0.0
    %3705 = vmatprep.subr.mxu0 0.0
    %3706 = vmatpush1.msra.mxu0 0.0
    %3707 = vmatprep.subr.mxu0 0.0
    %3708 = vmatpush1.msra.mxu0 0.0
    %3709 = vmatprep.subr.mxu0 0.0
    %3710 = vmatpush1.msra.mxu0 0.0
    %3711 = vmatprep.subr.mxu0 0.0
    %3712 = vmatpush1.msra.mxu0 0.0
    %3713 = vmatprep.subr.mxu0 0.0
    %3714 = vmatpush1.msra.mxu0 0.0
    %3715 = vmatprep.subr.mxu0 0.0
    %3716 = vmatpush1.msra.mxu0 0.0
    %3717 = vmatprep.subr.mxu0 0.0
    %3718 = vmatpush1.msra.mxu0 0.0
    %3719 = vmatprep.subr.mxu0 0.0
    %3720 = vmatpush1.msra.mxu0 0.0
    %3721 = vmatprep.subr.mxu0 0.0
    %3722 = vmatpush1.msra.mxu0 0.0
    %3723 = vmatprep.subr.mxu0 0.0
    %3724 = vmatpush1.msra.mxu0 0.0
    %3725 = vmatprep.subr.mxu0 0.0
    %3726 = vmatpush1.msra.mxu0 0.0
    %3727 = vmatprep.subr.mxu0 0.0
    %3728 = vmatpush1.msra.mxu0 0.0
    %3729 = vmatprep.subr.mxu0 0.0
    %3730 = vmatpush1.msra.mxu0 0.0
    %3731 = vmatprep.subr.mxu0 0.0
    %3732 = vmatpush1.msra.mxu0 0.0
    %3733 = vmatprep.subr.mxu0 0.0
    %3734 = vmatpush1.msra.mxu0 0.0
    %3735 = vmatprep.subr.mxu0 0.0
    %3736 = vmatpush1.msra.mxu0 0.0
    %3737 = vmatprep.subr.mxu0 0.0
    %3738 = vmatpush1.msra.mxu0 0.0
    %3739 = vmatprep.subr.mxu0 0.0
    %3740 = vmatpush1.msra.mxu0 0.0
    %3741 = vmatprep.subr.mxu0 0.0
    %3742 = vmatpush1.msra.mxu0 0.0
    %3743 = vmatprep.subr.mxu0 0.0
    %3744 = vmatpush1.msra.mxu0 0.0
    %3745 = vmatprep.subr.mxu0 0.0
    %3746 = vmatpush1.msra.mxu0 0.0
    %3747 = vmatprep.subr.mxu0 0.0
    %3748 = vmatpush1.msra.mxu0 0.0
    %3749 = vmatprep.subr.mxu0 0.0
    %3750 = vmatpush1.msra.mxu0 0.0
    %3751 = vmatprep.mubr.f32.mxu0 0.0
    %3752 = vmatmul.mubr.f32.gmra.mrb[0].mxu0 %v3682
    %v3753 = vpop.f32.mrb[0].mxu0
    %v3754 = vadd.f32 0.0, %v3753
    %v3755 = vpop.f32.mrb[0].mxu0
    %3756 = vmatprep.mubr.f32.mxu0 0.0
    %3757 = vmatmul.mubr.f32.gmra.mrb[0].mxu0 %v3685
    %v3758 = vpop.f32.mrb[0].mxu0
    %v3759 = vadd.f32 0.0, %v3758
    %v3760 = vpop.f32.mrb[0].mxu0
    %3761 = vdwg.mxu0
    %v3762 = vadd.f32 %v3674, %v3754
    %v3763 = vadd.f32 %v3675, %v3759
    %v3764 = vld [vmem:[%s15] sm:$0x1]
    %v3766 = vlaneseq
    %v3767 = vshrl.u32 %v3766, 7
    %v3768 = vsub.s32 0, %v3767
    %v3769 = vrot.slane %v3764, %v3768
    %v3771 = vadd.f32 %v3762, %v3769
    %v3772 = vadd.f32 %v3763, %v3769
    %v3773 = vld [vmem:[%s17] sm:$0x1]
    %v3774 = vld [vmem:[%s19] sm:$0x1]
    %v3775 = vsel %vm123, %v3771, 0.0
    %3776 = vadd.xlane.f32.xlu0 %v3775
    %v3777 = vpop.xlane.xlu0 %3776
    %v3778 = vsel %vm123, %v3772, 0.0
    %3779 = vadd.xlane.f32.xlu0 %v3778
    %v3780 = vpop.xlane.xlu0 %3779
    %v3781 = vrcp.pop 32.0
    %v3782 = vmul.f32 %v3777, %v3781
    %v3783 = vmul.f32 %v3780, %v3781
    %v3784 = vsub.f32 %v3771, %v3782
    %v3785 = vsub.f32 %v3772, %v3783
    %v3786 = vmul.f32 %v3784, %v3784
    %v3787 = vmul.f32 %v3785, %v3785
    %v3788 = vsel %vm123, %v3786, 0.0
    %3789 = vadd.xlane.f32.xlu0 %v3788
    %v3790 = vpop.xlane.xlu0 %3789
    %v3791 = vsel %vm123, %v3787, 0.0
    %3792 = vadd.xlane.f32.xlu0 %v3791
    %v3793 = vpop.xlane.xlu0 %3792
    %v3794 = vmul.f32 %v3790, %v3781
    %v3795 = vmul.f32 %v3793, %v3781
    %v3796 = vadd.f32 %v3794, 1e-05
    %v3797 = vadd.f32 %v3795, 1e-05
    %v3798 = vrsqrt.pop %v3796
    %v3799 = vrsqrt.pop %v3797
    %v3800 = vmul.f32 %v3784, %v3798
    %v3801 = vmul.f32 %v3785, %v3799
    %v3803 = vlaneseq
    %v3804 = vshrl.u32 %v3803, 7
    %v3805 = vsub.s32 0, %v3804
    %v3806 = vrot.slane %v3773, %v3805
    %v3808 = vmul.f32 %v3800, %v3806
    %v3809 = vmul.f32 %v3801, %v3806
    %v3811 = vlaneseq
    %v3812 = vshrl.u32 %v3811, 7
    %v3813 = vsub.s32 0, %v3812
    %v3814 = vrot.slane %v3774, %v3813
    %v3816 = vadd.f32 %v3808, %v3814
    %v3817 = vadd.f32 %v3809, %v3814
    %v3818 = vld [vmem:[%s21] sm:$0xff]
    %v3819 = vld [vmem:[%s21 + $0x8] sm:$0xff]
    %v3820 = vld [vmem:[%s21 + $0x10] sm:$0xff]
    %v3821 = vld [vmem:[%s21 + $0x18] sm:$0xff]
    %v3823 = vsel %vm123, %v3816, 0
    %v3826 = vsel %vm123, %v3817, 0
    %3828 = vmatprep.subr.mxu0 0.0
    %3829 = vmatpush1.msra.mxu0 %v3818
    %3830 = vmatprep.subr.mxu0 0.0
    %3831 = vmatpush1.msra.mxu0 %v3819
    %3832 = vmatprep.subr.mxu0 0.0
    %3833 = vmatpush1.msra.mxu0 %v3820
    %3834 = vmatprep.subr.mxu0 0.0
    %3835 = vmatpush1.msra.mxu0 %v3821
    %3836 = vmatprep.subr.mxu0 0.0
    %3837 = vmatpush1.msra.mxu0 0.0
    %3838 = vmatprep.subr.mxu0 0.0
    %3839 = vmatpush1.msra.mxu0 0.0
    %3840 = vmatprep.subr.mxu0 0.0
    %3841 = vmatpush1.msra.mxu0 0.0
    %3842 = vmatprep.subr.mxu0 0.0
    %3843 = vmatpush1.msra.mxu0 0.0
    %3844 = vmatprep.subr.mxu0 0.0
    %3845 = vmatpush1.msra.mxu0 0.0
    %3846 = vmatprep.subr.mxu0 0.0
    %3847 = vmatpush1.msra.mxu0 0.0
    %3848 = vmatprep.subr.mxu0 0.0
    %3849 = vmatpush1.msra.mxu0 0.0
    %3850 = vmatprep.subr.mxu0 0.0
    %3851 = vmatpush1.msra.mxu0 0.0
    %3852 = vmatprep.subr.mxu0 0.0
    %3853 = vmatpush1.msra.mxu0 0.0
    %3854 = vmatprep.subr.mxu0 0.0
    %3855 = vmatpush1.msra.mxu0 0.0
    %3856 = vmatprep.subr.mxu0 0.0
    %3857 = vmatpush1.msra.mxu0 0.0
    %3858 = vmatprep.subr.mxu0 0.0
    %3859 = vmatpush1.msra.mxu0 0.0
    %3860 = vmatprep.subr.mxu0 0.0
    %3861 = vmatpush1.msra.mxu0 0.0
    %3862 = vmatprep.subr.mxu0 0.0
    %3863 = vmatpush1.msra.mxu0 0.0
    %3864 = vmatprep.subr.mxu0 0.0
    %3865 = vmatpush1.msra.mxu0 0.0
    %3866 = vmatprep.subr.mxu0 0.0
    %3867 = vmatpush1.msra.mxu0 0.0
    %3868 = vmatprep.subr.mxu0 0.0
    %3869 = vmatpush1.msra.mxu0 0.0
    %3870 = vmatprep.subr.mxu0 0.0
    %3871 = vmatpush1.msra.mxu0 0.0
    %3872 = vmatprep.subr.mxu0 0.0
    %3873 = vmatpush1.msra.mxu0 0.0
    %3874 = vmatprep.subr.mxu0 0.0
    %3875 = vmatpush1.msra.mxu0 0.0
    %3876 = vmatprep.subr.mxu0 0.0
    %3877 = vmatpush1.msra.mxu0 0.0
    %3878 = vmatprep.subr.mxu0 0.0
    %3879 = vmatpush1.msra.mxu0 0.0
    %3880 = vmatprep.subr.mxu0 0.0
    %3881 = vmatpush1.msra.mxu0 0.0
    %3882 = vmatprep.subr.mxu0 0.0
    %3883 = vmatpush1.msra.mxu0 0.0
    %3884 = vmatprep.subr.mxu0 0.0
    %3885 = vmatpush1.msra.mxu0 0.0
    %3886 = vmatprep.subr.mxu0 0.0
    %3887 = vmatpush1.msra.mxu0 0.0
    %3888 = vmatprep.subr.mxu0 0.0
    %3889 = vmatpush1.msra.mxu0 0.0
    %3890 = vmatprep.subr.mxu0 0.0
    %3891 = vmatpush1.msra.mxu0 0.0
    %3892 = vmatprep.mubr.f32.mxu0 0.0
    %3893 = vmatmul.mubr.f32.gmra.mrb[0].mxu0 %v3823
    %v3894 = vpop.f32.mrb[0].mxu0
    %v3895 = vadd.f32 0.0, %v3894
    %v3896 = vpop.f32.mrb[0].mxu0
    %3897 = vmatprep.mubr.f32.mxu0 0.0
    %3898 = vmatmul.mubr.f32.gmra.mrb[0].mxu0 %v3826
    %v3899 = vpop.f32.mrb[0].mxu0
    %v3900 = vadd.f32 0.0, %v3899
    %v3901 = vpop.f32.mrb[0].mxu0
    %3902 = vdwg.mxu0
    %3905 = vrot.lane.b32.xlu0 %v3895, 96
    %v3906 = vpop.permute.xlu0 %3905
    %3907 = vrot.lane.b32.xlu0 %v3900, 96
    %v3908 = vpop.permute.xlu0 %3907
    %3911 = vxpose.xlu0.b32.start [1/16] %v3906, 128
    %3912 = vxpose.xlu0.b32.cont [2/16] %v3908, 128
    %3913 = vxpose.xlu0.b32.cont [3/16] 0.0, 128
    %3914 = vxpose.xlu0.b32.cont [4/16] 0.0, 128
    %3915 = vxpose.xlu0.b32.cont [5/16] 0.0, 128
    %3916 = vxpose.xlu0.b32.cont [6/16] 0.0, 128
    %3917 = vxpose.xlu0.b32.cont [7/16] 0.0, 128
    %3918 = vxpose.xlu0.b32.cont [8/16] 0.0, 128
    %3919 = vxpose.xlu0.b32.cont [9/16] 0.0, 128
    %3920 = vxpose.xlu0.b32.cont [10/16] 0.0, 128
    %3921 = vxpose.xlu0.b32.cont [11/16] 0.0, 128
    %3922 = vxpose.xlu0.b32.cont [12/16] 0.0, 128
    %3923 = vxpose.xlu0.b32.cont [13/16] 0.0, 128
    %3924 = vxpose.xlu0.b32.cont [14/16] 0.0, 128
    %3925 = vxpose.xlu0.b32.cont [15/16] 0.0, 128
    %3926 = vxpose.xlu0.b32.end [16/16] 0.0, 128
    %v3927 = vpop.trf.xlu0
    %v3928 = vpop.trf.xlu0
    %v3929 = vpop.trf.xlu0
    %v3930 = vpop.trf.xlu0
    %v3931 = vpop.trf.xlu0
    %v3932 = vpop.trf.xlu0
    %v3933 = vpop.trf.xlu0
    %v3934 = vpop.trf.xlu0
    %v3935 = vpop.trf.xlu0
    %v3936 = vpop.trf.xlu0
    %v3937 = vpop.trf.xlu0
    %v3938 = vpop.trf.xlu0
    %v3939 = vpop.trf.xlu0
    %v3940 = vpop.trf.xlu0
    %v3941 = vpop.trf.xlu0
    %v3942 = vpop.trf.xlu0
    %v3943 = vld [vmem:[%s39] sm:$0xff]
    %v3944 = vld [vmem:[%s39 + $0x8] sm:$0xff]
    %v3945 = vld [vmem:[%s39 + $0x10] sm:$0xff]
    %v3946 = vld [vmem:[%s39 + $0x18] sm:$0xff]
    %vm3947 = vcmask 130048
    %v3949 = vsel %vm3947, %v3927, 0
    %v3952 = vsel %vm3947, %v3928, 0
    %v3955 = vsel %vm3947, %v3929, 0
    %v3958 = vsel %vm3947, %v3930, 0
    %3960 = vmatprep.subr.mxu0 %v3944
    %3961 = vmatpush1.msra.mxu0 %v3943
    %3962 = vmatprep.subr.mxu0 %v3946
    %3963 = vmatpush1.msra.mxu0 %v3945
    %3964 = vmatprep.subr.mxu0 0.0
    %3965 = vmatpush1.msra.mxu0 0.0
    %3966 = vmatprep.subr.mxu0 0.0
    %3967 = vmatpush1.msra.mxu0 0.0
    %3968 = vmatprep.subr.mxu0 0.0
    %3969 = vmatpush1.msra.mxu0 0.0
    %3970 = vmatprep.subr.mxu0 0.0
    %3971 = vmatpush1.msra.mxu0 0.0
    %3972 = vmatprep.subr.mxu0 0.0
    %3973 = vmatpush1.msra.mxu0 0.0
    %3974 = vmatprep.subr.mxu0 0.0
    %3975 = vmatpush1.msra.mxu0 0.0
    %3976 = vmatprep.subr.mxu0 0.0
    %3977 = vmatpush1.msra.mxu0 0.0
    %3978 = vmatprep.subr.mxu0 0.0
    %3979 = vmatpush1.msra.mxu0 0.0
    %3980 = vmatprep.subr.mxu0 0.0
    %3981 = vmatpush1.msra.mxu0 0.0
    %3982 = vmatprep.subr.mxu0 0.0
    %3983 = vmatpush1.msra.mxu0 0.0
    %3984 = vmatprep.subr.mxu0 0.0
    %3985 = vmatpush1.msra.mxu0 0.0
    %3986 = vmatprep.subr.mxu0 0.0
    %3987 = vmatpush1.msra.mxu0 0.0
    %3988 = vmatprep.subr.mxu0 0.0
    %3989 = vmatpush1.msra.mxu0 0.0
    %3990 = vmatprep.subr.mxu0 0.0
    %3991 = vmatpush1.msra.mxu0 0.0
    %3992 = vmatprep.subr.mxu0 0.0
    %3993 = vmatpush1.msra.mxu0 0.0
    %3994 = vmatprep.subr.mxu0 0.0
    %3995 = vmatpush1.msra.mxu0 0.0
    %3996 = vmatprep.subr.mxu0 0.0
    %3997 = vmatpush1.msra.mxu0 0.0
    %3998 = vmatprep.subr.mxu0 0.0
    %3999 = vmatpush1.msra.mxu0 0.0
    %4000 = vmatprep.subr.mxu0 0.0
    %4001 = vmatpush1.msra.mxu0 0.0
    %4002 = vmatprep.subr.mxu0 0.0
    %4003 = vmatpush1.msra.mxu0 0.0
    %4004 = vmatprep.subr.mxu0 0.0
    %4005 = vmatpush1.msra.mxu0 0.0
    %4006 = vmatprep.subr.mxu0 0.0
    %4007 = vmatpush1.msra.mxu0 0.0
    %4008 = vmatprep.subr.mxu0 0.0
    %4009 = vmatpush1.msra.mxu0 0.0
    %4010 = vmatprep.subr.mxu0 0.0
    %4011 = vmatpush1.msra.mxu0 0.0
    %4012 = vmatprep.subr.mxu0 0.0
    %4013 = vmatpush1.msra.mxu0 0.0
    %4014 = vmatprep.subr.mxu0 0.0
    %4015 = vmatpush1.msra.mxu0 0.0
    %4016 = vmatprep.subr.mxu0 0.0
    %4017 = vmatpush1.msra.mxu0 0.0
    %4018 = vmatprep.subr.mxu0 0.0
    %4019 = vmatpush1.msra.mxu0 0.0
    %4020 = vmatprep.subr.mxu0 0.0
    %4021 = vmatpush1.msra.mxu0 0.0
    %4022 = vmatprep.subr.mxu0 0.0
    %4023 = vmatpush1.msra.mxu0 0.0
    %4024 = vmatprep.mubr.f32.mxu0 0.0
    %4025 = vmatmul.mubr.f32.gmra.mrb[0].mxu0 %v3949
    %v4026 = vpop.f32.mrb[0].mxu0
    %v4027 = vadd.f32 0.0, %v4026
    %v4028 = vpop.f32.mrb[0].mxu0
    %v4029 = vadd.f32 0.0, %v4028
    %4030 = vmatprep.mubr.f32.mxu0 0.0
    %4031 = vmatmul.mubr.f32.gmra.mrb[0].mxu0 %v3952
    %v4032 = vpop.f32.mrb[0].mxu0
    %v4033 = vadd.f32 0.0, %v4032
    %v4034 = vpop.f32.mrb[0].mxu0
    %v4035 = vadd.f32 0.0, %v4034
    %4036 = vmatprep.mubr.f32.mxu0 0.0
    %4037 = vmatmul.mubr.f32.gmra.mrb[0].mxu0 %v3955
    %v4038 = vpop.f32.mrb[0].mxu0
    %v4039 = vadd.f32 0.0, %v4038
    %v4040 = vpop.f32.mrb[0].mxu0
    %v4041 = vadd.f32 0.0, %v4040
    %4042 = vmatprep.mubr.f32.mxu0 0.0
    %4043 = vmatmul.mubr.f32.gmra.mrb[0].mxu0 %v3958
    %v4044 = vpop.f32.mrb[0].mxu0
    %v4045 = vadd.f32 0.0, %v4044
    %v4046 = vpop.f32.mrb[0].mxu0
    %v4047 = vadd.f32 0.0, %v4046
    %4048 = vdwg.mxu0
    %v4049 = vld [vmem:[%s41] sm:$0xff]
    %v4050 = vld [vmem:[%s41 + $0x8] sm:$0xff]
    %v4051 = vld [vmem:[%s41 + $0x10] sm:$0xff]
    %v4052 = vld [vmem:[%s41 + $0x18] sm:$0xff]
    %v4053 = vld [vmem:[%s41 + $0x20] sm:$0xff]
    %v4054 = vld [vmem:[%s41 + $0x28] sm:$0xff]
    %v4055 = vld [vmem:[%s41 + $0x30] sm:$0xff]
    %v4056 = vld [vmem:[%s41 + $0x38] sm:$0xff]
    %v4057 = vmul.f32 %v4027, %v4049
    %v4058 = vmul.f32 %v4029, %v4050
    %v4059 = vmul.f32 %v4033, %v4051
    %v4060 = vmul.f32 %v4035, %v4052
    %v4061 = vmul.f32 %v4039, %v4053
    %v4062 = vmul.f32 %v4041, %v4054
    %v4063 = vmul.f32 %v4045, %v4055
    %v4064 = vmul.f32 %v4047, %v4056
    %v4065 = vsel %vm123, %v3895, 0
    %v4067 = vsel %vm123, %v3900, 0
    %4069 = vmatprep.subr.mxu0 %v4058
    %4070 = vmatpush1.msra.mxu0 %v4057
    %4071 = vmatprep.subr.mxu0 %v4060
    %4072 = vmatpush1.msra.mxu0 %v4059
    %4073 = vmatprep.subr.mxu0 %v4062
    %4074 = vmatpush1.msra.mxu0 %v4061
    %4075 = vmatprep.subr.mxu0 %v4064
    %4076 = vmatpush1.msra.mxu0 %v4063
    %4077 = vmatprep.subr.mxu0 0.0
    %4078 = vmatpush1.msra.mxu0 0.0
    %4079 = vmatprep.subr.mxu0 0.0
    %4080 = vmatpush1.msra.mxu0 0.0
    %4081 = vmatprep.subr.mxu0 0.0
    %4082 = vmatpush1.msra.mxu0 0.0
    %4083 = vmatprep.subr.mxu0 0.0
    %4084 = vmatpush1.msra.mxu0 0.0
    %4085 = vmatprep.subr.mxu0 0.0
    %4086 = vmatpush1.msra.mxu0 0.0
    %4087 = vmatprep.subr.mxu0 0.0
    %4088 = vmatpush1.msra.mxu0 0.0
    %4089 = vmatprep.subr.mxu0 0.0
    %4090 = vmatpush1.msra.mxu0 0.0
    %4091 = vmatprep.subr.mxu0 0.0
    %4092 = vmatpush1.msra.mxu0 0.0
    %4093 = vmatprep.subr.mxu0 0.0
    %4094 = vmatpush1.msra.mxu0 0.0
    %4095 = vmatprep.subr.mxu0 0.0
    %4096 = vmatpush1.msra.mxu0 0.0
    %4097 = vmatprep.subr.mxu0 0.0
    %4098 = vmatpush1.msra.mxu0 0.0
    %4099 = vmatprep.subr.mxu0 0.0
    %4100 = vmatpush1.msra.mxu0 0.0
    %4101 = vmatprep.subr.mxu0 0.0
    %4102 = vmatpush1.msra.mxu0 0.0
    %4103 = vmatprep.subr.mxu0 0.0
    %4104 = vmatpush1.msra.mxu0 0.0
    %4105 = vmatprep.subr.mxu0 0.0
    %4106 = vmatpush1.msra.mxu0 0.0
    %4107 = vmatprep.subr.mxu0 0.0
    %4108 = vmatpush1.msra.mxu0 0.0
    %4109 = vmatprep.subr.mxu0 0.0
    %4110 = vmatpush1.msra.mxu0 0.0
    %4111 = vmatprep.subr.mxu0 0.0
    %4112 = vmatpush1.msra.mxu0 0.0
    %4113 = vmatprep.subr.mxu0 0.0
    %4114 = vmatpush1.msra.mxu0 0.0
    %4115 = vmatprep.subr.mxu0 0.0
    %4116 = vmatpush1.msra.mxu0 0.0
    %4117 = vmatprep.subr.mxu0 0.0
    %4118 = vmatpush1.msra.mxu0 0.0
    %4119 = vmatprep.subr.mxu0 0.0
    %4120 = vmatpush1.msra.mxu0 0.0
    %4121 = vmatprep.subr.mxu0 0.0
    %4122 = vmatpush1.msra.mxu0 0.0
    %4123 = vmatprep.subr.mxu0 0.0
    %4124 = vmatpush1.msra.mxu0 0.0
    %4125 = vmatprep.subr.mxu0 0.0
    %4126 = vmatpush1.msra.mxu0 0.0
    %4127 = vmatprep.subr.mxu0 0.0
    %4128 = vmatpush1.msra.mxu0 0.0
    %4129 = vmatprep.subr.mxu0 0.0
    %4130 = vmatpush1.msra.mxu0 0.0
    %4131 = vmatprep.subr.mxu0 0.0
    %4132 = vmatpush1.msra.mxu0 0.0
    %4133 = vmatprep.mubr.f32.mxu0 0.0
    %4134 = vmatmul.mubr.f32.gmra.mrb[0].mxu0 %v4065
    %v4135 = vpop.f32.mrb[0].mxu0
    %v4136 = vadd.f32 0.0, %v4135
    %v4137 = vpop.f32.mrb[0].mxu0
    %v4138 = vadd.f32 0.0, %v4137
    %4139 = vmatprep.mubr.f32.mxu0 0.0
    %4140 = vmatmul.mubr.f32.gmra.mrb[0].mxu0 %v4067
    %v4141 = vpop.f32.mrb[0].mxu0
    %v4142 = vadd.f32 0.0, %v4141
    %v4143 = vpop.f32.mrb[0].mxu0
    %v4144 = vadd.f32 0.0, %v4143
    %4145 = vdwg.mxu0
    %v4146 = vmul.f32 %v4136, 0.70710677
    %v4147 = vmul.f32 %v4138, 0.70710677
    %v4148 = vmul.f32 %v4142, 0.70710677
    %v4149 = vmul.f32 %v4144, 0.70710677
    %v4150 = vld [vmem:[%s51] sm:$0xff]
    %v4151 = vld [vmem:[%s51 + $0x8] sm:$0xff]
    %v4152 = vld [vmem:[%s51 + $0x10] sm:$0xff]
    %v4153 = vld [vmem:[%s51 + $0x18] sm:$0xff]
    %v4154 = vadd.f32 %v4146, %v4150
    %v4155 = vadd.f32 %v4147, %v4151
    %v4156 = vadd.f32 %v4148, %v4152
    %v4157 = vadd.f32 %v4149, %v4153
    %v4158 = vmax.f32 %v4154, %v4155
    %4159 = vmax.xlane.f32.xlu0 %v4158
    %v4160 = vpop.xlane.xlu0 %4159
    %v4161 = vmax.f32 %v4156, %v4157
    %4162 = vmax.xlane.f32.xlu0 %v4161
    %v4163 = vpop.xlane.xlu0 %4162
    %v4164 = vsub.f32 %v4154, %v4160
    %v4165 = vsub.f32 %v4155, %v4160
    %v4166 = vsub.f32 %v4156, %v4163
    %v4167 = vsub.f32 %v4157, %v4163
    %v4168 = vmul.f32 %v4164, 1.442695
    %v4169 = vpow.pop %v4168
    %v4170 = vmul.f32 %v4165, 1.442695
    %v4171 = vpow.pop %v4170
    %v4172 = vmul.f32 %v4166, 1.442695
    %v4173 = vpow.pop %v4172
    %v4174 = vmul.f32 %v4167, 1.442695
    %v4175 = vpow.pop %v4174
    %v4176 = vld [vmem:[%s43] sm:$0xff]
    %v4177 = vld [vmem:[%s43 + $0x8] sm:$0xff]
    %v4178 = vld [vmem:[%s43 + $0x10] sm:$0xff]
    %v4179 = vld [vmem:[%s43 + $0x18] sm:$0xff]
    %v4180 = vld [vmem:[%s43 + $0x20] sm:$0xff]
    %v4181 = vld [vmem:[%s43 + $0x28] sm:$0xff]
    %v4182 = vld [vmem:[%s43 + $0x30] sm:$0xff]
    %v4183 = vld [vmem:[%s43 + $0x38] sm:$0xff]
    %v4184 = vld [vmem:[%s43 + $0x40] sm:$0xff]
    %v4185 = vld [vmem:[%s43 + $0x48] sm:$0xff]
    %v4186 = vld [vmem:[%s43 + $0x50] sm:$0xff]
    %v4187 = vld [vmem:[%s43 + $0x58] sm:$0xff]
    %v4188 = vld [vmem:[%s43 + $0x60] sm:$0xff]
    %v4189 = vld [vmem:[%s43 + $0x68] sm:$0xff]
    %v4190 = vld [vmem:[%s43 + $0x70] sm:$0xff]
    %v4191 = vld [vmem:[%s43 + $0x78] sm:$0xff]
    %v4192 = vld [vmem:[%s43 + $0x80] sm:$0xff]
    %v4193 = vld [vmem:[%s43 + $0x88] sm:$0xff]
    %v4194 = vld [vmem:[%s43 + $0x90] sm:$0xff]
    %v4195 = vld [vmem:[%s43 + $0x98] sm:$0xff]
    %v4196 = vld [vmem:[%s43 + $0xa0] sm:$0xff]
    %v4197 = vld [vmem:[%s43 + $0xa8] sm:$0xff]
    %v4198 = vld [vmem:[%s43 + $0xb0] sm:$0xff]
    %v4199 = vld [vmem:[%s43 + $0xb8] sm:$0xff]
    %v4200 = vld [vmem:[%s43 + $0xc0] sm:$0xff]
    %v4201 = vld [vmem:[%s43 + $0xc8] sm:$0xff]
    %v4202 = vld [vmem:[%s43 + $0xd0] sm:$0xff]
    %v4203 = vld [vmem:[%s43 + $0xd8] sm:$0xff]
    %v4204 = vld [vmem:[%s43 + $0xe0] sm:$0xff]
    %v4205 = vld [vmem:[%s43 + $0xe8] sm:$0xff]
    %v4206 = vld [vmem:[%s43 + $0xf0] sm:$0xff]
    %v4207 = vld [vmem:[%s43 + $0xf8] sm:$0xff]
    %4208 = vrot.lane.b32.xlu0 %v3895, 64
    %v4209 = vpop.permute.xlu0 %4208
    %4210 = vrot.lane.b32.xlu0 %v3900, 64
    %v4211 = vpop.permute.xlu0 %4210
    %v4215 = vsel %vm3947, %v4176, 0
    %v4218 = vsel %vm3947, %v4177, 0
    %v4221 = vsel %vm3947, %v4178, 0
    %v4224 = vsel %vm3947, %v4179, 0
    %v4227 = vsel %vm3947, %v4180, 0
    %v4230 = vsel %vm3947, %v4181, 0
    %v4233 = vsel %vm3947, %v4182, 0
    %v4236 = vsel %vm3947, %v4183, 0
    %v4239 = vsel %vm3947, %v4184, 0
    %v4242 = vsel %vm3947, %v4185, 0
    %v4245 = vsel %vm3947, %v4186, 0
    %v4248 = vsel %vm3947, %v4187, 0
    %v4251 = vsel %vm3947, %v4188, 0
    %v4254 = vsel %vm3947, %v4189, 0
    %v4257 = vsel %vm3947, %v4190, 0
    %v4260 = vsel %vm3947, %v4191, 0
    %v4263 = vsel %vm3947, %v4192, 0
    %v4266 = vsel %vm3947, %v4193, 0
    %v4269 = vsel %vm3947, %v4194, 0
    %v4272 = vsel %vm3947, %v4195, 0
    %v4275 = vsel %vm3947, %v4196, 0
    %v4278 = vsel %vm3947, %v4197, 0
    %v4281 = vsel %vm3947, %v4198, 0
    %v4284 = vsel %vm3947, %v4199, 0
    %v4287 = vsel %vm3947, %v4200, 0
    %v4290 = vsel %vm3947, %v4201, 0
    %v4293 = vsel %vm3947, %v4202, 0
    %v4296 = vsel %vm3947, %v4203, 0
    %v4299 = vsel %vm3947, %v4204, 0
    %v4302 = vsel %vm3947, %v4205, 0
    %v4305 = vsel %vm3947, %v4206, 0
    %v4308 = vsel %vm3947, %v4207, 0
    %4310 = vmatprep.subr.mxu0 0.0
    %4311 = vmatpush1.msra.mxu0 %v4209
    %4312 = vmatprep.subr.mxu0 0.0
    %4313 = vmatpush1.msra.mxu0 %v4211
    %4314 = vmatprep.subr.mxu0 0.0
    %4315 = vmatpush1.msra.mxu0 0.0
    %4316 = vmatprep.subr.mxu0 0.0
    %4317 = vmatpush1.msra.mxu0 0.0
    %4318 = vmatprep.subr.mxu0 0.0
    %4319 = vmatpush1.msra.mxu0 0.0
    %4320 = vmatprep.subr.mxu0 0.0
    %4321 = vmatpush1.msra.mxu0 0.0
    %4322 = vmatprep.subr.mxu0 0.0
    %4323 = vmatpush1.msra.mxu0 0.0
    %4324 = vmatprep.subr.mxu0 0.0
    %4325 = vmatpush1.msra.mxu0 0.0
    %4326 = vmatprep.subr.mxu0 0.0
    %4327 = vmatpush1.msra.mxu0 0.0
    %4328 = vmatprep.subr.mxu0 0.0
    %4329 = vmatpush1.msra.mxu0 0.0
    %4330 = vmatprep.subr.mxu0 0.0
    %4331 = vmatpush1.msra.mxu0 0.0
    %4332 = vmatprep.subr.mxu0 0.0
    %4333 = vmatpush1.msra.mxu0 0.0
    %4334 = vmatprep.subr.mxu0 0.0
    %4335 = vmatpush1.msra.mxu0 0.0
    %4336 = vmatprep.subr.mxu0 0.0
    %4337 = vmatpush1.msra.mxu0 0.0
    %4338 = vmatprep.subr.mxu0 0.0
    %4339 = vmatpush1.msra.mxu0 0.0
    %4340 = vmatprep.subr.mxu0 0.0
    %4341 = vmatpush1.msra.mxu0 0.0
    %4342 = vmatprep.subr.mxu0 0.0
    %4343 = vmatpush1.msra.mxu0 0.0
    %4344 = vmatprep.subr.mxu0 0.0
    %4345 = vmatpush1.msra.mxu0 0.0
    %4346 = vmatprep.subr.mxu0 0.0
    %4347 = vmatpush1.msra.mxu0 0.0
    %4348 = vmatprep.subr.mxu0 0.0
    %4349 = vmatpush1.msra.mxu0 0.0
    %4350 = vmatprep.subr.mxu0 0.0
    %4351 = vmatpush1.msra.mxu0 0.0
    %4352 = vmatprep.subr.mxu0 0.0
    %4353 = vmatpush1.msra.mxu0 0.0
    %4354 = vmatprep.subr.mxu0 0.0
    %4355 = vmatpush1.msra.mxu0 0.0
    %4356 = vmatprep.subr.mxu0 0.0
    %4357 = vmatpush1.msra.mxu0 0.0
    %4358 = vmatprep.subr.mxu0 0.0
    %4359 = vmatpush1.msra.mxu0 0.0
    %4360 = vmatprep.subr.mxu0 0.0
    %4361 = vmatpush1.msra.mxu0 0.0
    %4362 = vmatprep.subr.mxu0 0.0
    %4363 = vmatpush1.msra.mxu0 0.0
    %4364 = vmatprep.subr.mxu0 0.0
    %4365 = vmatpush1.msra.mxu0 0.0
    %4366 = vmatprep.subr.mxu0 0.0
    %4367 = vmatpush1.msra.mxu0 0.0
    %4368 = vmatprep.subr.mxu0 0.0
    %4369 = vmatpush1.msra.mxu0 0.0
    %4370 = vmatprep.subr.mxu0 0.0
    %4371 = vmatpush1.msra.mxu0 0.0
    %4372 = vmatprep.subr.mxu0 0.0
    %4373 = vmatpush1.msra.mxu0 0.0
    %4374 = vmatprep.mubr.f32.mxu0 0.0
    %4375 = vmatmul.mubr.f32.gmra.mrb[0].mxu0 %v4215
    %v4376 = vpop.f32.mrb[0].mxu0
    %v4377 = vadd.f32 0.0, %v4376
    %v4378 = vpop.f32.mrb[0].mxu0
    %4379 = vmatprep.mubr.f32.mxu0 0.0
    %4380 = vmatmul.mubr.f32.gmra.mrb[0].mxu0 %v4218
    %v4381 = vpop.f32.mrb[0].mxu0
    %v4382 = vadd.f32 0.0, %v4381
    %v4383 = vpop.f32.mrb[0].mxu0
    %4384 = vmatprep.mubr.f32.mxu0 0.0
    %4385 = vmatmul.mubr.f32.gmra.mrb[0].mxu0 %v4221
    %v4386 = vpop.f32.mrb[0].mxu0
    %v4387 = vadd.f32 0.0, %v4386
    %v4388 = vpop.f32.mrb[0].mxu0
    %4389 = vmatprep.mubr.f32.mxu0 0.0
    %4390 = vmatmul.mubr.f32.gmra.mrb[0].mxu0 %v4224
    %v4391 = vpop.f32.mrb[0].mxu0
    %v4392 = vadd.f32 0.0, %v4391
    %v4393 = vpop.f32.mrb[0].mxu0
    %4394 = vmatprep.mubr.f32.mxu0 0.0
    %4395 = vmatmul.mubr.f32.gmra.mrb[0].mxu0 %v4227
    %v4396 = vpop.f32.mrb[0].mxu0
    %v4397 = vadd.f32 0.0, %v4396
    %v4398 = vpop.f32.mrb[0].mxu0
    %4399 = vmatprep.mubr.f32.mxu0 0.0
    %4400 = vmatmul.mubr.f32.gmra.mrb[0].mxu0 %v4230
    %v4401 = vpop.f32.mrb[0].mxu0
    %v4402 = vadd.f32 0.0, %v4401
    %v4403 = vpop.f32.mrb[0].mxu0
    %4404 = vmatprep.mubr.f32.mxu0 0.0
    %4405 = vmatmul.mubr.f32.gmra.mrb[0].mxu0 %v4233
    %v4406 = vpop.f32.mrb[0].mxu0
    %v4407 = vadd.f32 0.0, %v4406
    %v4408 = vpop.f32.mrb[0].mxu0
    %4409 = vmatprep.mubr.f32.mxu0 0.0
    %4410 = vmatmul.mubr.f32.gmra.mrb[0].mxu0 %v4236
    %v4411 = vpop.f32.mrb[0].mxu0
    %v4412 = vadd.f32 0.0, %v4411
    %v4413 = vpop.f32.mrb[0].mxu0
    %4414 = vmatprep.mubr.f32.mxu0 0.0
    %4415 = vmatmul.mubr.f32.gmra.mrb[0].mxu0 %v4239
    %v4416 = vpop.f32.mrb[0].mxu0
    %v4417 = vadd.f32 0.0, %v4416
    %v4418 = vpop.f32.mrb[0].mxu0
    %4419 = vmatprep.mubr.f32.mxu0 0.0
    %4420 = vmatmul.mubr.f32.gmra.mrb[0].mxu0 %v4242
    %v4421 = vpop.f32.mrb[0].mxu0
    %v4422 = vadd.f32 0.0, %v4421
    %v4423 = vpop.f32.mrb[0].mxu0
    %4424 = vmatprep.mubr.f32.mxu0 0.0
    %4425 = vmatmul.mubr.f32.gmra.mrb[0].mxu0 %v4245
    %v4426 = vpop.f32.mrb[0].mxu0
    %v4427 = vadd.f32 0.0, %v4426
    %v4428 = vpop.f32.mrb[0].mxu0
    %4429 = vmatprep.mubr.f32.mxu0 0.0
    %4430 = vmatmul.mubr.f32.gmra.mrb[0].mxu0 %v4248
    %v4431 = vpop.f32.mrb[0].mxu0
    %v4432 = vadd.f32 0.0, %v4431
    %v4433 = vpop.f32.mrb[0].mxu0
    %4434 = vmatprep.mubr.f32.mxu0 0.0
    %4435 = vmatmul.mubr.f32.gmra.mrb[0].mxu0 %v4251
    %v4436 = vpop.f32.mrb[0].mxu0
    %v4437 = vadd.f32 0.0, %v4436
    %v4438 = vpop.f32.mrb[0].mxu0
    %4439 = vmatprep.mubr.f32.mxu0 0.0
    %4440 = vmatmul.mubr.f32.gmra.mrb[0].mxu0 %v4254
    %v4441 = vpop.f32.mrb[0].mxu0
    %v4442 = vadd.f32 0.0, %v4441
    %v4443 = vpop.f32.mrb[0].mxu0
    %4444 = vmatprep.mubr.f32.mxu0 0.0
    %4445 = vmatmul.mubr.f32.gmra.mrb[0].mxu0 %v4257
    %v4446 = vpop.f32.mrb[0].mxu0
    %v4447 = vadd.f32 0.0, %v4446
    %v4448 = vpop.f32.mrb[0].mxu0
    %4449 = vmatprep.mubr.f32.mxu0 0.0
    %4450 = vmatmul.mubr.f32.gmra.mrb[0].mxu0 %v4260
    %v4451 = vpop.f32.mrb[0].mxu0
    %v4452 = vadd.f32 0.0, %v4451
    %v4453 = vpop.f32.mrb[0].mxu0
    %4454 = vmatprep.mubr.f32.mxu0 0.0
    %4455 = vmatmul.mubr.f32.gmra.mrb[0].mxu0 %v4263
    %v4456 = vpop.f32.mrb[0].mxu0
    %v4457 = vadd.f32 0.0, %v4456
    %v4458 = vpop.f32.mrb[0].mxu0
    %4459 = vmatprep.mubr.f32.mxu0 0.0
    %4460 = vmatmul.mubr.f32.gmra.mrb[0].mxu0 %v4266
    %v4461 = vpop.f32.mrb[0].mxu0
    %v4462 = vadd.f32 0.0, %v4461
    %v4463 = vpop.f32.mrb[0].mxu0
    %4464 = vmatprep.mubr.f32.mxu0 0.0
    %4465 = vmatmul.mubr.f32.gmra.mrb[0].mxu0 %v4269
    %v4466 = vpop.f32.mrb[0].mxu0
    %v4467 = vadd.f32 0.0, %v4466
    %v4468 = vpop.f32.mrb[0].mxu0
    %4469 = vmatprep.mubr.f32.mxu0 0.0
    %4470 = vmatmul.mubr.f32.gmra.mrb[0].mxu0 %v4272
    %v4471 = vpop.f32.mrb[0].mxu0
    %v4472 = vadd.f32 0.0, %v4471
    %v4473 = vpop.f32.mrb[0].mxu0
    %4474 = vmatprep.mubr.f32.mxu0 0.0
    %4475 = vmatmul.mubr.f32.gmra.mrb[0].mxu0 %v4275
    %v4476 = vpop.f32.mrb[0].mxu0
    %v4477 = vadd.f32 0.0, %v4476
    %v4478 = vpop.f32.mrb[0].mxu0
    %4479 = vmatprep.mubr.f32.mxu0 0.0
    %4480 = vmatmul.mubr.f32.gmra.mrb[0].mxu0 %v4278
    %v4481 = vpop.f32.mrb[0].mxu0
    %v4482 = vadd.f32 0.0, %v4481
    %v4483 = vpop.f32.mrb[0].mxu0
    %4484 = vmatprep.mubr.f32.mxu0 0.0
    %4485 = vmatmul.mubr.f32.gmra.mrb[0].mxu0 %v4281
    %v4486 = vpop.f32.mrb[0].mxu0
    %v4487 = vadd.f32 0.0, %v4486
    %v4488 = vpop.f32.mrb[0].mxu0
    %4489 = vmatprep.mubr.f32.mxu0 0.0
    %4490 = vmatmul.mubr.f32.gmra.mrb[0].mxu0 %v4284
    %v4491 = vpop.f32.mrb[0].mxu0
    %v4492 = vadd.f32 0.0, %v4491
    %v4493 = vpop.f32.mrb[0].mxu0
    %4494 = vmatprep.mubr.f32.mxu0 0.0
    %4495 = vmatmul.mubr.f32.gmra.mrb[0].mxu0 %v4287
    %v4496 = vpop.f32.mrb[0].mxu0
    %v4497 = vadd.f32 0.0, %v4496
    %v4498 = vpop.f32.mrb[0].mxu0
    %4499 = vmatprep.mubr.f32.mxu0 0.0
    %4500 = vmatmul.mubr.f32.gmra.mrb[0].mxu0 %v4290
    %v4501 = vpop.f32.mrb[0].mxu0
    %v4502 = vadd.f32 0.0, %v4501
    %v4503 = vpop.f32.mrb[0].mxu0
    %4504 = vmatprep.mubr.f32.mxu0 0.0
    %4505 = vmatmul.mubr.f32.gmra.mrb[0].mxu0 %v4293
    %v4506 = vpop.f32.mrb[0].mxu0
    %v4507 = vadd.f32 0.0, %v4506
    %v4508 = vpop.f32.mrb[0].mxu0
    %4509 = vmatprep.mubr.f32.mxu0 0.0
    %4510 = vmatmul.mubr.f32.gmra.mrb[0].mxu0 %v4296
    %v4511 = vpop.f32.mrb[0].mxu0
    %v4512 = vadd.f32 0.0, %v4511
    %v4513 = vpop.f32.mrb[0].mxu0
    %4514 = vmatprep.mubr.f32.mxu0 0.0
    %4515 = vmatmul.mubr.f32.gmra.mrb[0].mxu0 %v4299
    %v4516 = vpop.f32.mrb[0].mxu0
    %v4517 = vadd.f32 0.0, %v4516
    %v4518 = vpop.f32.mrb[0].mxu0
    %4519 = vmatprep.mubr.f32.mxu0 0.0
    %4520 = vmatmul.mubr.f32.gmra.mrb[0].mxu0 %v4302
    %v4521 = vpop.f32.mrb[0].mxu0
    %v4522 = vadd.f32 0.0, %v4521
    %v4523 = vpop.f32.mrb[0].mxu0
    %4524 = vmatprep.mubr.f32.mxu0 0.0
    %4525 = vmatmul.mubr.f32.gmra.mrb[0].mxu0 %v4305
    %v4526 = vpop.f32.mrb[0].mxu0
    %v4527 = vadd.f32 0.0, %v4526
    %v4528 = vpop.f32.mrb[0].mxu0
    %4529 = vmatprep.mubr.f32.mxu0 0.0
    %4530 = vmatmul.mubr.f32.gmra.mrb[0].mxu0 %v4308
    %v4531 = vpop.f32.mrb[0].mxu0
    %v4532 = vadd.f32 0.0, %v4531
    %v4533 = vpop.f32.mrb[0].mxu0
    %4534 = vdwg.mxu0
    %v4535 = vld [vmem:[%s45] sm:$0xff]
    %v4536 = vld [vmem:[%s45 + $0x8] sm:$0xff]
    %v4537 = vld [vmem:[%s45 + $0x10] sm:$0xff]
    %v4538 = vld [vmem:[%s45 + $0x18] sm:$0xff]
    %v4539 = vld [vmem:[%s45 + $0x20] sm:$0xff]
    %v4540 = vld [vmem:[%s45 + $0x28] sm:$0xff]
    %v4541 = vld [vmem:[%s45 + $0x30] sm:$0xff]
    %v4542 = vld [vmem:[%s45 + $0x38] sm:$0xff]
    %v4543 = vld [vmem:[%s45 + $0x40] sm:$0xff]
    %v4544 = vld [vmem:[%s45 + $0x48] sm:$0xff]
    %v4545 = vld [vmem:[%s45 + $0x50] sm:$0xff]
    %v4546 = vld [vmem:[%s45 + $0x58] sm:$0xff]
    %v4547 = vld [vmem:[%s45 + $0x60] sm:$0xff]
    %v4548 = vld [vmem:[%s45 + $0x68] sm:$0xff]
    %v4549 = vld [vmem:[%s45 + $0x70] sm:$0xff]
    %v4550 = vld [vmem:[%s45 + $0x78] sm:$0xff]
    %v4551 = vld [vmem:[%s45 + $0x80] sm:$0xff]
    %v4552 = vld [vmem:[%s45 + $0x88] sm:$0xff]
    %v4553 = vld [vmem:[%s45 + $0x90] sm:$0xff]
    %v4554 = vld [vmem:[%s45 + $0x98] sm:$0xff]
    %v4555 = vld [vmem:[%s45 + $0xa0] sm:$0xff]
    %v4556 = vld [vmem:[%s45 + $0xa8] sm:$0xff]
    %v4557 = vld [vmem:[%s45 + $0xb0] sm:$0xff]
    %v4558 = vld [vmem:[%s45 + $0xb8] sm:$0xff]
    %v4559 = vld [vmem:[%s45 + $0xc0] sm:$0xff]
    %v4560 = vld [vmem:[%s45 + $0xc8] sm:$0xff]
    %v4561 = vld [vmem:[%s45 + $0xd0] sm:$0xff]
    %v4562 = vld [vmem:[%s45 + $0xd8] sm:$0xff]
    %v4563 = vld [vmem:[%s45 + $0xe0] sm:$0xff]
    %v4564 = vld [vmem:[%s45 + $0xe8] sm:$0xff]
    %v4565 = vld [vmem:[%s45 + $0xf0] sm:$0xff]
    %v4566 = vld [vmem:[%s45 + $0xf8] sm:$0xff]
    %v4567 = vmul.f32 %v4377, %v4535
    %v4568 = vmul.f32 %v4382, %v4536
    %v4569 = vmul.f32 %v4387, %v4537
    %v4570 = vmul.f32 %v4392, %v4538
    %v4571 = vmul.f32 %v4397, %v4539
    %v4572 = vmul.f32 %v4402, %v4540
    %v4573 = vmul.f32 %v4407, %v4541
    %v4574 = vmul.f32 %v4412, %v4542
    %v4575 = vmul.f32 %v4417, %v4543
    %v4576 = vmul.f32 %v4422, %v4544
    %v4577 = vmul.f32 %v4427, %v4545
    %v4578 = vmul.f32 %v4432, %v4546
    %v4579 = vmul.f32 %v4437, %v4547
    %v4580 = vmul.f32 %v4442, %v4548
    %v4581 = vmul.f32 %v4447, %v4549
    %v4582 = vmul.f32 %v4452, %v4550
    %v4583 = vmul.f32 %v4457, %v4551
    %v4584 = vmul.f32 %v4462, %v4552
    %v4585 = vmul.f32 %v4467, %v4553
    %v4586 = vmul.f32 %v4472, %v4554
    %v4587 = vmul.f32 %v4477, %v4555
    %v4588 = vmul.f32 %v4482, %v4556
    %v4589 = vmul.f32 %v4487, %v4557
    %v4590 = vmul.f32 %v4492, %v4558
    %v4591 = vmul.f32 %v4497, %v4559
    %v4592 = vmul.f32 %v4502, %v4560
    %v4593 = vmul.f32 %v4507, %v4561
    %v4594 = vmul.f32 %v4512, %v4562
    %v4595 = vmul.f32 %v4517, %v4563
    %v4596 = vmul.f32 %v4522, %v4564
    %v4597 = vmul.f32 %v4527, %v4565
    %v4598 = vmul.f32 %v4532, %v4566
    %4599 = vmatprep.subr.mxu0 0.0
    %4600 = vmatpush1.msra.mxu0 %v4567
    %4601 = vmatprep.subr.mxu0 0.0
    %4602 = vmatpush1.msra.mxu0 %v4568
    %4603 = vmatprep.subr.mxu0 0.0
    %4604 = vmatpush1.msra.mxu0 %v4569
    %4605 = vmatprep.subr.mxu0 0.0
    %4606 = vmatpush1.msra.mxu0 %v4570
    %4607 = vmatprep.subr.mxu0 0.0
    %4608 = vmatpush1.msra.mxu0 %v4571
    %4609 = vmatprep.subr.mxu0 0.0
    %4610 = vmatpush1.msra.mxu0 %v4572
    %4611 = vmatprep.subr.mxu0 0.0
    %4612 = vmatpush1.msra.mxu0 %v4573
    %4613 = vmatprep.subr.mxu0 0.0
    %4614 = vmatpush1.msra.mxu0 %v4574
    %4615 = vmatprep.subr.mxu0 0.0
    %4616 = vmatpush1.msra.mxu0 %v4575
    %4617 = vmatprep.subr.mxu0 0.0
    %4618 = vmatpush1.msra.mxu0 %v4576
    %4619 = vmatprep.subr.mxu0 0.0
    %4620 = vmatpush1.msra.mxu0 %v4577
    %4621 = vmatprep.subr.mxu0 0.0
    %4622 = vmatpush1.msra.mxu0 %v4578
    %4623 = vmatprep.subr.mxu0 0.0
    %4624 = vmatpush1.msra.mxu0 %v4579
    %4625 = vmatprep.subr.mxu0 0.0
    %4626 = vmatpush1.msra.mxu0 %v4580
    %4627 = vmatprep.subr.mxu0 0.0
    %4628 = vmatpush1.msra.mxu0 %v4581
    %4629 = vmatprep.subr.mxu0 0.0
    %4630 = vmatpush1.msra.mxu0 %v4582
    %4631 = vmatprep.subr.mxu0 0.0
    %4632 = vmatpush1.msra.mxu0 %v4583
    %4633 = vmatprep.subr.mxu0 0.0
    %4634 = vmatpush1.msra.mxu0 %v4584
    %4635 = vmatprep.subr.mxu0 0.0
    %4636 = vmatpush1.msra.mxu0 %v4585
    %4637 = vmatprep.subr.mxu0 0.0
    %4638 = vmatpush1.msra.mxu0 %v4586
    %4639 = vmatprep.subr.mxu0 0.0
    %4640 = vmatpush1.msra.mxu0 %v4587
    %4641 = vmatprep.subr.mxu0 0.0
    %4642 = vmatpush1.msra.mxu0 %v4588
    %4643 = vmatprep.subr.mxu0 0.0
    %4644 = vmatpush1.msra.mxu0 %v4589
    %4645 = vmatprep.subr.mxu0 0.0
    %4646 = vmatpush1.msra.mxu0 %v4590
    %4647 = vmatprep.subr.mxu0 0.0
    %4648 = vmatpush1.msra.mxu0 %v4591
    %4649 = vmatprep.subr.mxu0 0.0
    %4650 = vmatpush1.msra.mxu0 %v4592
    %4651 = vmatprep.subr.mxu0 0.0
    %4652 = vmatpush1.msra.mxu0 %v4593
    %4653 = vmatprep.subr.mxu0 0.0
    %4654 = vmatpush1.msra.mxu0 %v4594
    %4655 = vmatprep.subr.mxu0 0.0
    %4656 = vmatpush1.msra.mxu0 %v4595
    %4657 = vmatprep.subr.mxu0 0.0
    %4658 = vmatpush1.msra.mxu0 %v4596
    %4659 = vmatprep.subr.mxu0 0.0
    %4660 = vmatpush1.msra.mxu0 %v4597
    %4661 = vmatprep.subr.mxu0 0.0
    %4662 = vmatpush1.msra.mxu0 %v4598
    %4663 = vmatprep.mubr.f32.mxu0 %v4171
    %4664 = vmatmul.mubr.f32.gmra.mrb[0].mxu0 %v4169
    %v4665 = vpop.f32.mrb[0].mxu0
    %v4666 = vadd.f32 0.0, %v4665
    %v4667 = vpop.f32.mrb[0].mxu0
    %4668 = vmatprep.mubr.f32.mxu0 %v4175
    %4669 = vmatmul.mubr.f32.gmra.mrb[0].mxu0 %v4173
    %v4670 = vpop.f32.mrb[0].mxu0
    %v4671 = vadd.f32 0.0, %v4670
    %v4672 = vpop.f32.mrb[0].mxu0
    %4673 = vdwg.mxu0
    %v4674 = vld [vmem:[%s47] sm:$0xff]
    %v4675 = vld [vmem:[%s47 + $0x8] sm:$0xff]
    %v4676 = vld [vmem:[%s47 + $0x10] sm:$0xff]
    %v4677 = vld [vmem:[%s47 + $0x18] sm:$0xff]
    %v4678 = vld [vmem:[%s47 + $0x20] sm:$0xff]
    %v4679 = vld [vmem:[%s47 + $0x28] sm:$0xff]
    %v4680 = vld [vmem:[%s47 + $0x30] sm:$0xff]
    %v4681 = vld [vmem:[%s47 + $0x38] sm:$0xff]
    %v4682 = vld [vmem:[%s47 + $0x40] sm:$0xff]
    %v4683 = vld [vmem:[%s47 + $0x48] sm:$0xff]
    %v4684 = vld [vmem:[%s47 + $0x50] sm:$0xff]
    %v4685 = vld [vmem:[%s47 + $0x58] sm:$0xff]
    %v4686 = vld [vmem:[%s47 + $0x60] sm:$0xff]
    %v4687 = vld [vmem:[%s47 + $0x68] sm:$0xff]
    %v4688 = vld [vmem:[%s47 + $0x70] sm:$0xff]
    %v4689 = vld [vmem:[%s47 + $0x78] sm:$0xff]
    %v4690 = vld [vmem:[%s47 + $0x80] sm:$0xff]
    %v4691 = vld [vmem:[%s47 + $0x88] sm:$0xff]
    %v4692 = vld [vmem:[%s47 + $0x90] sm:$0xff]
    %v4693 = vld [vmem:[%s47 + $0x98] sm:$0xff]
    %v4694 = vld [vmem:[%s47 + $0xa0] sm:$0xff]
    %v4695 = vld [vmem:[%s47 + $0xa8] sm:$0xff]
    %v4696 = vld [vmem:[%s47 + $0xb0] sm:$0xff]
    %v4697 = vld [vmem:[%s47 + $0xb8] sm:$0xff]
    %v4698 = vld [vmem:[%s47 + $0xc0] sm:$0xff]
    %v4699 = vld [vmem:[%s47 + $0xc8] sm:$0xff]
    %v4700 = vld [vmem:[%s47 + $0xd0] sm:$0xff]
    %v4701 = vld [vmem:[%s47 + $0xd8] sm:$0xff]
    %v4702 = vld [vmem:[%s47 + $0xe0] sm:$0xff]
    %v4703 = vld [vmem:[%s47 + $0xe8] sm:$0xff]
    %v4704 = vld [vmem:[%s47 + $0xf0] sm:$0xff]
    %v4705 = vld [vmem:[%s47 + $0xf8] sm:$0xff]
    %4706 = vmatprep.subr.mxu0 0.0
    %4707 = vmatpush1.msra.mxu0 %v4674
    %4708 = vmatprep.subr.mxu0 0.0
    %4709 = vmatpush1.msra.mxu0 %v4675
    %4710 = vmatprep.subr.mxu0 0.0
    %4711 = vmatpush1.msra.mxu0 %v4676
    %4712 = vmatprep.subr.mxu0 0.0
    %4713 = vmatpush1.msra.mxu0 %v4677
    %4714 = vmatprep.subr.mxu0 0.0
    %4715 = vmatpush1.msra.mxu0 %v4678
    %4716 = vmatprep.subr.mxu0 0.0
    %4717 = vmatpush1.msra.mxu0 %v4679
    %4718 = vmatprep.subr.mxu0 0.0
    %4719 = vmatpush1.msra.mxu0 %v4680
    %4720 = vmatprep.subr.mxu0 0.0
    %4721 = vmatpush1.msra.mxu0 %v4681
    %4722 = vmatprep.subr.mxu0 0.0
    %4723 = vmatpush1.msra.mxu0 %v4682
    %4724 = vmatprep.subr.mxu0 0.0
    %4725 = vmatpush1.msra.mxu0 %v4683
    %4726 = vmatprep.subr.mxu0 0.0
    %4727 = vmatpush1.msra.mxu0 %v4684
    %4728 = vmatprep.subr.mxu0 0.0
    %4729 = vmatpush1.msra.mxu0 %v4685
    %4730 = vmatprep.subr.mxu0 0.0
    %4731 = vmatpush1.msra.mxu0 %v4686
    %4732 = vmatprep.subr.mxu0 0.0
    %4733 = vmatpush1.msra.mxu0 %v4687
    %4734 = vmatprep.subr.mxu0 0.0
    %4735 = vmatpush1.msra.mxu0 %v4688
    %4736 = vmatprep.subr.mxu0 0.0
    %4737 = vmatpush1.msra.mxu0 %v4689
    %4738 = vmatprep.subr.mxu0 0.0
    %4739 = vmatpush1.msra.mxu0 %v4690
    %4740 = vmatprep.subr.mxu0 0.0
    %4741 = vmatpush1.msra.mxu0 %v4691
    %4742 = vmatprep.subr.mxu0 0.0
    %4743 = vmatpush1.msra.mxu0 %v4692
    %4744 = vmatprep.subr.mxu0 0.0
    %4745 = vmatpush1.msra.mxu0 %v4693
    %4746 = vmatprep.subr.mxu0 0.0
    %4747 = vmatpush1.msra.mxu0 %v4694
    %4748 = vmatprep.subr.mxu0 0.0
    %4749 = vmatpush1.msra.mxu0 %v4695
    %4750 = vmatprep.subr.mxu0 0.0
    %4751 = vmatpush1.msra.mxu0 %v4696
    %4752 = vmatprep.subr.mxu0 0.0
    %4753 = vmatpush1.msra.mxu0 %v4697
    %4754 = vmatprep.subr.mxu0 0.0
    %4755 = vmatpush1.msra.mxu0 %v4698
    %4756 = vmatprep.subr.mxu0 0.0
    %4757 = vmatpush1.msra.mxu0 %v4699
    %4758 = vmatprep.subr.mxu0 0.0
    %4759 = vmatpush1.msra.mxu0 %v4700
    %4760 = vmatprep.subr.mxu0 0.0
    %4761 = vmatpush1.msra.mxu0 %v4701
    %4762 = vmatprep.subr.mxu0 0.0
    %4763 = vmatpush1.msra.mxu0 %v4702
    %4764 = vmatprep.subr.mxu0 0.0
    %4765 = vmatpush1.msra.mxu0 %v4703
    %4766 = vmatprep.subr.mxu0 0.0
    %4767 = vmatpush1.msra.mxu0 %v4704
    %4768 = vmatprep.subr.mxu0 0.0
    %4769 = vmatpush1.msra.mxu0 %v4705
    %4770 = vmatprep.mubr.f32.mxu0 %v4171
    %4771 = vmatmul.mubr.f32.gmra.mrb[0].mxu0 %v4169
    %v4772 = vpop.f32.mrb[0].mxu0
    %v4773 = vadd.f32 0.0, %v4772
    %v4774 = vpop.f32.mrb[0].mxu0
    %4775 = vmatprep.mubr.f32.mxu0 %v4175
    %4776 = vmatmul.mubr.f32.gmra.mrb[0].mxu0 %v4173
    %v4777 = vpop.f32.mrb[0].mxu0
    %v4778 = vadd.f32 0.0, %v4777
    %v4779 = vpop.f32.mrb[0].mxu0
    %4780 = vdwg.mxu0
    %v4781 = vld [vmem:[%s49] sm:$0xff]
    %v4782 = vld [vmem:[%s49 + $0x8] sm:$0xff]
    %v4784 = vsel %vm3947, %v4773, 0
    %v4787 = vsel %vm3947, %v4778, 0
    %4789 = vmatprep.subr.mxu0 0.0
    %4790 = vmatpush1.msra.mxu0 %v4781
    %4791 = vmatprep.subr.mxu0 0.0
    %4792 = vmatpush1.msra.mxu0 %v4782
    %4793 = vmatprep.subr.mxu0 0.0
    %4794 = vmatpush1.msra.mxu0 0.0
    %4795 = vmatprep.subr.mxu0 0.0
    %4796 = vmatpush1.msra.mxu0 0.0
    %4797 = vmatprep.subr.mxu0 0.0
    %4798 = vmatpush1.msra.mxu0 0.0
    %4799 = vmatprep.subr.mxu0 0.0
    %4800 = vmatpush1.msra.mxu0 0.0
    %4801 = vmatprep.subr.mxu0 0.0
    %4802 = vmatpush1.msra.mxu0 0.0
    %4803 = vmatprep.subr.mxu0 0.0
    %4804 = vmatpush1.msra.mxu0 0.0
    %4805 = vmatprep.subr.mxu0 0.0
    %4806 = vmatpush1.msra.mxu0 0.0
    %4807 = vmatprep.subr.mxu0 0.0
    %4808 = vmatpush1.msra.mxu0 0.0
    %4809 = vmatprep.subr.mxu0 0.0
    %4810 = vmatpush1.msra.mxu0 0.0
    %4811 = vmatprep.subr.mxu0 0.0
    %4812 = vmatpush1.msra.mxu0 0.0
    %4813 = vmatprep.subr.mxu0 0.0
    %4814 = vmatpush1.msra.mxu0 0.0
    %4815 = vmatprep.subr.mxu0 0.0
    %4816 = vmatpush1.msra.mxu0 0.0
    %4817 = vmatprep.subr.mxu0 0.0
    %4818 = vmatpush1.msra.mxu0 0.0
    %4819 = vmatprep.subr.mxu0 0.0
    %4820 = vmatpush1.msra.mxu0 0.0
    %4821 = vmatprep.subr.mxu0 0.0
    %4822 = vmatpush1.msra.mxu0 0.0
    %4823 = vmatprep.subr.mxu0 0.0
    %4824 = vmatpush1.msra.mxu0 0.0
    %4825 = vmatprep.subr.mxu0 0.0
    %4826 = vmatpush1.msra.mxu0 0.0
    %4827 = vmatprep.subr.mxu0 0.0
    %4828 = vmatpush1.msra.mxu0 0.0
    %4829 = vmatprep.subr.mxu0 0.0
    %4830 = vmatpush1.msra.mxu0 0.0
    %4831 = vmatprep.subr.mxu0 0.0
    %4832 = vmatpush1.msra.mxu0 0.0
    %4833 = vmatprep.subr.mxu0 0.0
    %4834 = vmatpush1.msra.mxu0 0.0
    %4835 = vmatprep.subr.mxu0 0.0
    %4836 = vmatpush1.msra.mxu0 0.0
    %4837 = vmatprep.subr.mxu0 0.0
    %4838 = vmatpush1.msra.mxu0 0.0
    %4839 = vmatprep.subr.mxu0 0.0
    %4840 = vmatpush1.msra.mxu0 0.0
    %4841 = vmatprep.subr.mxu0 0.0
    %4842 = vmatpush1.msra.mxu0 0.0
    %4843 = vmatprep.subr.mxu0 0.0
    %4844 = vmatpush1.msra.mxu0 0.0
    %4845 = vmatprep.subr.mxu0 0.0
    %4846 = vmatpush1.msra.mxu0 0.0
    %4847 = vmatprep.subr.mxu0 0.0
    %4848 = vmatpush1.msra.mxu0 0.0
    %4849 = vmatprep.subr.mxu0 0.0
    %4850 = vmatpush1.msra.mxu0 0.0
    %4851 = vmatprep.subr.mxu0 0.0
    %4852 = vmatpush1.msra.mxu0 0.0
    %4853 = vmatprep.mubr.f32.mxu0 0.0
    %4854 = vmatmul.mubr.f32.gmra.mrb[0].mxu0 %v4784
    %v4855 = vpop.f32.mrb[0].mxu0
    %v4856 = vadd.f32 0.0, %v4855
    %v4857 = vpop.f32.mrb[0].mxu0
    %4858 = vmatprep.mubr.f32.mxu0 0.0
    %4859 = vmatmul.mubr.f32.gmra.mrb[0].mxu0 %v4787
    %v4860 = vpop.f32.mrb[0].mxu0
    %v4861 = vadd.f32 0.0, %v4860
    %v4862 = vpop.f32.mrb[0].mxu0
    %4863 = vdwg.mxu0
    %v4864 = vrcp.pop %v4856
    %v4865 = vmul.f32 %v4666, %v4864
    %v4866 = vrcp.pop %v4861
    %v4867 = vmul.f32 %v4671, %v4866
    %v4868 = vld [vmem:[%s23] sm:$0xff]
    %v4869 = vld [vmem:[%s23 + $0x8] sm:$0xff]
    %v4870 = vld [vmem:[%s23 + $0x10] sm:$0xff]
    %v4871 = vld [vmem:[%s23 + $0x18] sm:$0xff]
    %v4872 = vld [vmem:[%s25] sm:$0x1]
    %v4874 = vlaneseq
    %v4875 = vshrl.u32 %v4874, 7
    %v4876 = vsub.s32 0, %v4875
    %v4877 = vrot.slane %v4872, %v4876
    %v4880 = vsel %vm123, %v4865, 0
    %v4883 = vsel %vm123, %v4867, 0
    %4885 = vmatprep.subr.mxu0 0.0
    %4886 = vmatpush1.msra.mxu0 %v4868
    %4887 = vmatprep.subr.mxu0 0.0
    %4888 = vmatpush1.msra.mxu0 %v4869
    %4889 = vmatprep.subr.mxu0 0.0
    %4890 = vmatpush1.msra.mxu0 %v4870
    %4891 = vmatprep.subr.mxu0 0.0
    %4892 = vmatpush1.msra.mxu0 %v4871
    %4893 = vmatprep.subr.mxu0 0.0
    %4894 = vmatpush1.msra.mxu0 0.0
    %4895 = vmatprep.subr.mxu0 0.0
    %4896 = vmatpush1.msra.mxu0 0.0
    %4897 = vmatprep.subr.mxu0 0.0
    %4898 = vmatpush1.msra.mxu0 0.0
    %4899 = vmatprep.subr.mxu0 0.0
    %4900 = vmatpush1.msra.mxu0 0.0
    %4901 = vmatprep.subr.mxu0 0.0
    %4902 = vmatpush1.msra.mxu0 0.0
    %4903 = vmatprep.subr.mxu0 0.0
    %4904 = vmatpush1.msra.mxu0 0.0
    %4905 = vmatprep.subr.mxu0 0.0
    %4906 = vmatpush1.msra.mxu0 0.0
    %4907 = vmatprep.subr.mxu0 0.0
    %4908 = vmatpush1.msra.mxu0 0.0
    %4909 = vmatprep.subr.mxu0 0.0
    %4910 = vmatpush1.msra.mxu0 0.0
    %4911 = vmatprep.subr.mxu0 0.0
    %4912 = vmatpush1.msra.mxu0 0.0
    %4913 = vmatprep.subr.mxu0 0.0
    %4914 = vmatpush1.msra.mxu0 0.0
    %4915 = vmatprep.subr.mxu0 0.0
    %4916 = vmatpush1.msra.mxu0 0.0
    %4917 = vmatprep.subr.mxu0 0.0
    %4918 = vmatpush1.msra.mxu0 0.0
    %4919 = vmatprep.subr.mxu0 0.0
    %4920 = vmatpush1.msra.mxu0 0.0
    %4921 = vmatprep.subr.mxu0 0.0
    %4922 = vmatpush1.msra.mxu0 0.0
    %4923 = vmatprep.subr.mxu0 0.0
    %4924 = vmatpush1.msra.mxu0 0.0
    %4925 = vmatprep.subr.mxu0 0.0
    %4926 = vmatpush1.msra.mxu0 0.0
    %4927 = vmatprep.subr.mxu0 0.0
    %4928 = vmatpush1.msra.mxu0 0.0
    %4929 = vmatprep.subr.mxu0 0.0
    %4930 = vmatpush1.msra.mxu0 0.0
    %4931 = vmatprep.subr.mxu0 0.0
    %4932 = vmatpush1.msra.mxu0 0.0
    %4933 = vmatprep.subr.mxu0 0.0
    %4934 = vmatpush1.msra.mxu0 0.0
    %4935 = vmatprep.subr.mxu0 0.0
    %4936 = vmatpush1.msra.mxu0 0.0
    %4937 = vmatprep.subr.mxu0 0.0
    %4938 = vmatpush1.msra.mxu0 0.0
    %4939 = vmatprep.subr.mxu0 0.0
    %4940 = vmatpush1.msra.mxu0 0.0
    %4941 = vmatprep.subr.mxu0 0.0
    %4942 = vmatpush1.msra.mxu0 0.0
    %4943 = vmatprep.subr.mxu0 0.0
    %4944 = vmatpush1.msra.mxu0 0.0
    %4945 = vmatprep.subr.mxu0 0.0
    %4946 = vmatpush1.msra.mxu0 0.0
    %4947 = vmatprep.subr.mxu0 0.0
    %4948 = vmatpush1.msra.mxu0 0.0
    %4949 = vmatprep.mubr.f32.mxu0 0.0
    %4950 = vmatmul.mubr.f32.gmra.mrb[0].mxu0 %v4880
    %v4951 = vpop.f32.mrb[0].mxu0
    %v4952 = vadd.f32 %v4877, %v4951
    %v4953 = vpop.f32.mrb[0].mxu0
    %4954 = vmatprep.mubr.f32.mxu0 0.0
    %4955 = vmatmul.mubr.f32.gmra.mrb[0].mxu0 %v4883
    %v4956 = vpop.f32.mrb[0].mxu0
    %v4957 = vadd.f32 %v4877, %v4956
    %v4958 = vpop.f32.mrb[0].mxu0
    %4959 = vdwg.mxu0
    %v4960 = vadd.f32 %v3771, %v4952
    %v4961 = vadd.f32 %v3772, %v4957
    %v4962 = vld [vmem:[%s27] sm:$0x1]
    %v4963 = vld [vmem:[%s29] sm:$0x1]
    %v4964 = vsel %vm123, %v4960, 0.0
    %4965 = vadd.xlane.f32.xlu0 %v4964
    %v4966 = vpop.xlane.xlu0 %4965
    %v4967 = vsel %vm123, %v4961, 0.0
    %4968 = vadd.xlane.f32.xlu0 %v4967
    %v4969 = vpop.xlane.xlu0 %4968
    %v4970 = vmul.f32 %v4966, %v3781
    %v4971 = vmul.f32 %v4969, %v3781
    %v4972 = vsub.f32 %v4960, %v4970
    %v4973 = vsub.f32 %v4961, %v4971
    %v4974 = vmul.f32 %v4972, %v4972
    %v4975 = vmul.f32 %v4973, %v4973
    %v4976 = vsel %vm123, %v4974, 0.0
    %4977 = vadd.xlane.f32.xlu0 %v4976
    %v4978 = vpop.xlane.xlu0 %4977
    %v4979 = vsel %vm123, %v4975, 0.0
    %4980 = vadd.xlane.f32.xlu0 %v4979
    %v4981 = vpop.xlane.xlu0 %4980
    %v4982 = vmul.f32 %v4978, %v3781
    %v4983 = vmul.f32 %v4981, %v3781
    %v4984 = vadd.f32 %v4982, 1e-05
    %v4985 = vadd.f32 %v4983, 1e-05
    %v4986 = vrsqrt.pop %v4984
    %v4987 = vrsqrt.pop %v4985
    %v4988 = vmul.f32 %v4972, %v4986
    %v4989 = vmul.f32 %v4973, %v4987
    %v4991 = vlaneseq
    %v4992 = vshrl.u32 %v4991, 7
    %v4993 = vsub.s32 0, %v4992
    %v4994 = vrot.slane %v4962, %v4993
    %v4996 = vmul.f32 %v4988, %v4994
    %v4997 = vmul.f32 %v4989, %v4994
    %v4999 = vlaneseq
    %v5000 = vshrl.u32 %v4999, 7
    %v5001 = vsub.s32 0, %v5000
    %v5002 = vrot.slane %v4963, %v5001
    %v5004 = vadd.f32 %v4996, %v5002
    %v5005 = vadd.f32 %v4997, %v5002
    %v5006 = vld [vmem:[%s31] sm:$0xff]
    %v5007 = vld [vmem:[%s31 + $0x8] sm:$0xff]
    %v5008 = vld [vmem:[%s31 + $0x10] sm:$0xff]
    %v5009 = vld [vmem:[%s31 + $0x18] sm:$0xff]
    %v5010 = vld [vmem:[%s33] sm:$0x1]
    %v5012 = vlaneseq
    %v5013 = vshrl.u32 %v5012, 7
    %v5014 = vsub.s32 0, %v5013
    %v5015 = vrot.slane %v5010, %v5014
    %v5018 = vsel %vm123, %v5004, 0
    %v5021 = vsel %vm123, %v5005, 0
    %5023 = vmatprep.subr.mxu0 0.0
    %5024 = vmatpush1.msra.mxu0 %v5006
    %5025 = vmatprep.subr.mxu0 0.0
    %5026 = vmatpush1.msra.mxu0 %v5007
    %5027 = vmatprep.subr.mxu0 0.0
    %5028 = vmatpush1.msra.mxu0 %v5008
    %5029 = vmatprep.subr.mxu0 0.0
    %5030 = vmatpush1.msra.mxu0 %v5009
    %5031 = vmatprep.subr.mxu0 0.0
    %5032 = vmatpush1.msra.mxu0 0.0
    %5033 = vmatprep.subr.mxu0 0.0
    %5034 = vmatpush1.msra.mxu0 0.0
    %5035 = vmatprep.subr.mxu0 0.0
    %5036 = vmatpush1.msra.mxu0 0.0
    %5037 = vmatprep.subr.mxu0 0.0
    %5038 = vmatpush1.msra.mxu0 0.0
    %5039 = vmatprep.subr.mxu0 0.0
    %5040 = vmatpush1.msra.mxu0 0.0
    %5041 = vmatprep.subr.mxu0 0.0
    %5042 = vmatpush1.msra.mxu0 0.0
    %5043 = vmatprep.subr.mxu0 0.0
    %5044 = vmatpush1.msra.mxu0 0.0
    %5045 = vmatprep.subr.mxu0 0.0
    %5046 = vmatpush1.msra.mxu0 0.0
    %5047 = vmatprep.subr.mxu0 0.0
    %5048 = vmatpush1.msra.mxu0 0.0
    %5049 = vmatprep.subr.mxu0 0.0
    %5050 = vmatpush1.msra.mxu0 0.0
    %5051 = vmatprep.subr.mxu0 0.0
    %5052 = vmatpush1.msra.mxu0 0.0
    %5053 = vmatprep.subr.mxu0 0.0
    %5054 = vmatpush1.msra.mxu0 0.0
    %5055 = vmatprep.subr.mxu0 0.0
    %5056 = vmatpush1.msra.mxu0 0.0
    %5057 = vmatprep.subr.mxu0 0.0
    %5058 = vmatpush1.msra.mxu0 0.0
    %5059 = vmatprep.subr.mxu0 0.0
    %5060 = vmatpush1.msra.mxu0 0.0
    %5061 = vmatprep.subr.mxu0 0.0
    %5062 = vmatpush1.msra.mxu0 0.0
    %5063 = vmatprep.subr.mxu0 0.0
    %5064 = vmatpush1.msra.mxu0 0.0
    %5065 = vmatprep.subr.mxu0 0.0
    %5066 = vmatpush1.msra.mxu0 0.0
    %5067 = vmatprep.subr.mxu0 0.0
    %5068 = vmatpush1.msra.mxu0 0.0
    %5069 = vmatprep.subr.mxu0 0.0
    %5070 = vmatpush1.msra.mxu0 0.0
    %5071 = vmatprep.subr.mxu0 0.0
    %5072 = vmatpush1.msra.mxu0 0.0
    %5073 = vmatprep.subr.mxu0 0.0
    %5074 = vmatpush1.msra.mxu0 0.0
    %5075 = vmatprep.subr.mxu0 0.0
    %5076 = vmatpush1.msra.mxu0 0.0
    %5077 = vmatprep.subr.mxu0 0.0
    %5078 = vmatpush1.msra.mxu0 0.0
    %5079 = vmatprep.subr.mxu0 0.0
    %5080 = vmatpush1.msra.mxu0 0.0
    %5081 = vmatprep.subr.mxu0 0.0
    %5082 = vmatpush1.msra.mxu0 0.0
    %5083 = vmatprep.subr.mxu0 0.0
    %5084 = vmatpush1.msra.mxu0 0.0
    %5085 = vmatprep.subr.mxu0 0.0
    %5086 = vmatpush1.msra.mxu0 0.0
    %5087 = vmatprep.mubr.f32.mxu0 0.0
    %5088 = vmatmul.mubr.f32.gmra.mrb[0].mxu0 %v5018
    %v5089 = vpop.f32.mrb[0].mxu0
    %v5090 = vadd.f32 %v5015, %v5089
    %v5091 = vpop.f32.mrb[0].mxu0
    %5092 = vmatprep.mubr.f32.mxu0 0.0
    %5093 = vmatmul.mubr.f32.gmra.mrb[0].mxu0 %v5021
    %v5094 = vpop.f32.mrb[0].mxu0
    %v5095 = vadd.f32 %v5015, %v5094
    %v5096 = vpop.f32.mrb[0].mxu0
    %5097 = vdwg.mxu0
    %v5098 = vmul.f32 %v5090, 0.5
    %v5099 = vmul.f32 %v5095, 0.5
    %v5100 = vmul.f32 %v5090, 0.70710677
    %v5101 = vmul.f32 %v5095, 0.70710677
    %v5102 = vand.u32 2147483647, %v5100
    %v5103 = vand.u32 2147483647, %v5101
    %v5104 = vmul.f32 %v5102, 0.3275911
    %v5105 = vmul.f32 %v5103, 0.3275911
    %v5106 = vadd.f32 %v5104, 1.0
    %v5107 = vadd.f32 %v5105, 1.0
    %v5108 = vrcp.pop %v5106
    %v5109 = vmul.f32 1.0, %v5108
    %v5110 = vrcp.pop %v5107
    %v5111 = vmul.f32 1.0, %v5110
    %v5112 = vmul.f32 %v5109, 1.0614054
    %v5113 = vmul.f32 %v5111, 1.0614054
    %v5114 = vadd.f32 %v5112, -1.4531521
    %v5115 = vadd.f32 %v5113, -1.4531521
    %v5116 = vmul.f32 %v5114, %v5109
    %v5117 = vmul.f32 %v5115, %v5111
    %v5118 = vadd.f32 %v5116, 1.4214138
    %v5119 = vadd.f32 %v5117, 1.4214138
    %v5120 = vmul.f32 %v5118, %v5109
    %v5121 = vmul.f32 %v5119, %v5111
    %v5122 = vadd.f32 %v5120, -0.28449672
    %v5123 = vadd.f32 %v5121, -0.28449672
    %v5124 = vmul.f32 %v5122, %v5109
    %v5125 = vmul.f32 %v5123, %v5111
    %v5126 = vadd.f32 %v5124, 0.2548296
    %v5127 = vadd.f32 %v5125, 0.2548296
    %v5128 = vmul.f32 %v5126, %v5109
    %v5129 = vmul.f32 %v5127, %v5111
    %v5130 = vsub.f32 0.0, %v5102
    %v5131 = vsub.f32 0.0, %v5103
    %v5132 = vmul.f32 %v5130, %v5102
    %v5133 = vmul.f32 %v5131, %v5103
    %v5134 = vmul.f32 %v5132, 1.442695
    %v5135 = vpow.pop %v5134
    %v5136 = vmul.f32 %v5133, 1.442695
    %v5137 = vpow.pop %v5136
    %v5138 = vmul.f32 %v5128, %v5135
    %v5139 = vmul.f32 %v5129, %v5137
    %v5140 = vsub.f32 1.0, %v5138
    %v5141 = vsub.f32 1.0, %v5139
    %vm5142 = vcmp.ge.f32.partialorder %v5100, 0.0
    %vm5143 = vcmp.ge.f32.partialorder %v5101, 0.0
    %v5144 = vsub.f32 0.0, %v5140
    %v5145 = vsub.f32 0.0, %v5141
    %v5146 = vsel %vm5142, %v5140, %v5144
    %v5147 = vsel %vm5143, %v5141, %v5145
    %v5148 = vadd.f32 %v5146, 1.0
    %v5149 = vadd.f32 %v5147, 1.0
    %v5150 = vmul.f32 %v5098, %v5148
    %v5151 = vmul.f32 %v5099, %v5149
    %v5152 = vld [vmem:[%s35] sm:$0xff]
    %v5153 = vld [vmem:[%s35 + $0x8] sm:$0xff]
    %v5154 = vld [vmem:[%s37] sm:$0x1]
    %v5156 = vlaneseq
    %v5157 = vshrl.u32 %v5156, 7
    %v5158 = vsub.s32 0, %v5157
    %v5159 = vrot.slane %v5154, %v5158
    %v5162 = vsel %vm3947, %v5150, 0
    %v5165 = vsel %vm3947, %v5151, 0
    %5167 = vmatprep.subr.mxu0 0.0
    %5168 = vmatpush1.msra.mxu0 %v5152
    %5169 = vmatprep.subr.mxu0 0.0
    %5170 = vmatpush1.msra.mxu0 %v5153
    %5171 = vmatprep.subr.mxu0 0.0
    %5172 = vmatpush1.msra.mxu0 0.0
    %5173 = vmatprep.subr.mxu0 0.0
    %5174 = vmatpush1.msra.mxu0 0.0
    %5175 = vmatprep.subr.mxu0 0.0
    %5176 = vmatpush1.msra.mxu0 0.0
    %5177 = vmatprep.subr.mxu0 0.0
    %5178 = vmatpush1.msra.mxu0 0.0
    %5179 = vmatprep.subr.mxu0 0.0
    %5180 = vmatpush1.msra.mxu0 0.0
    %5181 = vmatprep.subr.mxu0 0.0
    %5182 = vmatpush1.msra.mxu0 0.0
    %5183 = vmatprep.subr.mxu0 0.0
    %5184 = vmatpush1.msra.mxu0 0.0
    %5185 = vmatprep.subr.mxu0 0.0
    %5186 = vmatpush1.msra.mxu0 0.0
    %5187 = vmatprep.subr.mxu0 0.0
    %5188 = vmatpush1.msra.mxu0 0.0
    %5189 = vmatprep.subr.mxu0 0.0
    %5190 = vmatpush1.msra.mxu0 0.0
    %5191 = vmatprep.subr.mxu0 0.0
    %5192 = vmatpush1.msra.mxu0 0.0
    %5193 = vmatprep.subr.mxu0 0.0
    %5194 = vmatpush1.msra.mxu0 0.0
    %5195 = vmatprep.subr.mxu0 0.0
    %5196 = vmatpush1.msra.mxu0 0.0
    %5197 = vmatprep.subr.mxu0 0.0
    %5198 = vmatpush1.msra.mxu0 0.0
    %5199 = vmatprep.subr.mxu0 0.0
    %5200 = vmatpush1.msra.mxu0 0.0
    %5201 = vmatprep.subr.mxu0 0.0
    %5202 = vmatpush1.msra.mxu0 0.0
    %5203 = vmatprep.subr.mxu0 0.0
    %5204 = vmatpush1.msra.mxu0 0.0
    %5205 = vmatprep.subr.mxu0 0.0
    %5206 = vmatpush1.msra.mxu0 0.0
    %5207 = vmatprep.subr.mxu0 0.0
    %5208 = vmatpush1.msra.mxu0 0.0
    %5209 = vmatprep.subr.mxu0 0.0
    %5210 = vmatpush1.msra.mxu0 0.0
    %5211 = vmatprep.subr.mxu0 0.0
    %5212 = vmatpush1.msra.mxu0 0.0
    %5213 = vmatprep.subr.mxu0 0.0
    %5214 = vmatpush1.msra.mxu0 0.0
    %5215 = vmatprep.subr.mxu0 0.0
    %5216 = vmatpush1.msra.mxu0 0.0
    %5217 = vmatprep.subr.mxu0 0.0
    %5218 = vmatpush1.msra.mxu0 0.0
    %5219 = vmatprep.subr.mxu0 0.0
    %5220 = vmatpush1.msra.mxu0 0.0
    %5221 = vmatprep.subr.mxu0 0.0
    %5222 = vmatpush1.msra.mxu0 0.0
    %5223 = vmatprep.subr.mxu0 0.0
    %5224 = vmatpush1.msra.mxu0 0.0
    %5225 = vmatprep.subr.mxu0 0.0
    %5226 = vmatpush1.msra.mxu0 0.0
    %5227 = vmatprep.subr.mxu0 0.0
    %5228 = vmatpush1.msra.mxu0 0.0
    %5229 = vmatprep.subr.mxu0 0.0
    %5230 = vmatpush1.msra.mxu0 0.0
    %5231 = vmatprep.mubr.f32.mxu0 0.0
    %5232 = vmatmul.mubr.f32.gmra.mrb[0].mxu0 %v5162
    %v5233 = vpop.f32.mrb[0].mxu0
    %v5234 = vadd.f32 %v5159, %v5233
    %v5235 = vpop.f32.mrb[0].mxu0
    %5236 = vmatprep.mubr.f32.mxu0 0.0
    %5237 = vmatmul.mubr.f32.gmra.mrb[0].mxu0 %v5165
    %v5238 = vpop.f32.mrb[0].mxu0
    %v5239 = vadd.f32 %v5159, %v5238
    %v5240 = vpop.f32.mrb[0].mxu0
    %5241 = vdwg.mxu0
    %v5242 = vadd.f32 %v4960, %v5234
    %v5243 = vadd.f32 %v4961, %v5239
    %v5244 = vld [vmem:[%s53] sm:$0x3]
    %v5246 = vsel %vm3947, %v5244, 0
    %5248 = vmatprep.subr.mxu0 0.0
    %5249 = vmatpush1.msra.mxu0 %v5242
    %5250 = vmatprep.subr.mxu0 0.0
    %5251 = vmatpush1.msra.mxu0 %v5243
    %5252 = vmatprep.subr.mxu0 0.0
    %5253 = vmatpush1.msra.mxu0 0.0
    %5254 = vmatprep.subr.mxu0 0.0
    %5255 = vmatpush1.msra.mxu0 0.0
    %5256 = vmatprep.subr.mxu0 0.0
    %5257 = vmatpush1.msra.mxu0 0.0
    %5258 = vmatprep.subr.mxu0 0.0
    %5259 = vmatpush1.msra.mxu0 0.0
    %5260 = vmatprep.subr.mxu0 0.0
    %5261 = vmatpush1.msra.mxu0 0.0
    %5262 = vmatprep.subr.mxu0 0.0
    %5263 = vmatpush1.msra.mxu0 0.0
    %5264 = vmatprep.subr.mxu0 0.0
    %5265 = vmatpush1.msra.mxu0 0.0
    %5266 = vmatprep.subr.mxu0 0.0
    %5267 = vmatpush1.msra.mxu0 0.0
    %5268 = vmatprep.subr.mxu0 0.0
    %5269 = vmatpush1.msra.mxu0 0.0
    %5270 = vmatprep.subr.mxu0 0.0
    %5271 = vmatpush1.msra.mxu0 0.0
    %5272 = vmatprep.subr.mxu0 0.0
    %5273 = vmatpush1.msra.mxu0 0.0
    %5274 = vmatprep.subr.mxu0 0.0
    %5275 = vmatpush1.msra.mxu0 0.0
    %5276 = vmatprep.subr.mxu0 0.0
    %5277 = vmatpush1.msra.mxu0 0.0
    %5278 = vmatprep.subr.mxu0 0.0
    %5279 = vmatpush1.msra.mxu0 0.0
    %5280 = vmatprep.subr.mxu0 0.0
    %5281 = vmatpush1.msra.mxu0 0.0
    %5282 = vmatprep.subr.mxu0 0.0
    %5283 = vmatpush1.msra.mxu0 0.0
    %5284 = vmatprep.subr.mxu0 0.0
    %5285 = vmatpush1.msra.mxu0 0.0
    %5286 = vmatprep.subr.mxu0 0.0
    %5287 = vmatpush1.msra.mxu0 0.0
    %5288 = vmatprep.subr.mxu0 0.0
    %5289 = vmatpush1.msra.mxu0 0.0
    %5290 = vmatprep.subr.mxu0 0.0
    %5291 = vmatpush1.msra.mxu0 0.0
    %5292 = vmatprep.subr.mxu0 0.0
    %5293 = vmatpush1.msra.mxu0 0.0
    %5294 = vmatprep.subr.mxu0 0.0
    %5295 = vmatpush1.msra.mxu0 0.0
    %5296 = vmatprep.subr.mxu0 0.0
    %5297 = vmatpush1.msra.mxu0 0.0
    %5298 = vmatprep.subr.mxu0 0.0
    %5299 = vmatpush1.msra.mxu0 0.0
    %5300 = vmatprep.subr.mxu0 0.0
    %5301 = vmatpush1.msra.mxu0 0.0
    %5302 = vmatprep.subr.mxu0 0.0
    %5303 = vmatpush1.msra.mxu0 0.0
    %5304 = vmatprep.subr.mxu0 0.0
    %5305 = vmatpush1.msra.mxu0 0.0
    %5306 = vmatprep.subr.mxu0 0.0
    %5307 = vmatpush1.msra.mxu0 0.0
    %5308 = vmatprep.subr.mxu0 0.0
    %5309 = vmatpush1.msra.mxu0 0.0
    %5310 = vmatprep.subr.mxu0 0.0
    %5311 = vmatpush1.msra.mxu0 0.0
    %5312 = vmatprep.mubr.f32.mxu0 0.0
    %5313 = vmatmul.mubr.f32.gmra.mrb[0].mxu0 %v5246
    %v5314 = vpop.f32.mrb[0].mxu0
    %v5315 = vadd.f32 0.0, %v5314
    %v5316 = vpop.f32.mrb[0].mxu0
    %5317 = vdwg.mxu0
    %v5318 = vld [vmem:[%s55] sm:$0xff]
    %v5319 = vld [vmem:[%s55 + $0x8] sm:$0xff]
    %v5320 = vld [vmem:[%s55 + $0x10] sm:$0xff]
    %v5321 = vld [vmem:[%s55 + $0x18] sm:$0xff]
    %v5322 = vld [vmem:[%s57] sm:$0x1]
    %v5324 = vlaneseq
    %v5325 = vshrl.u32 %v5324, 7
    %v5326 = vsub.s32 0, %v5325
    %v5327 = vrot.slane %v5322, %v5326
    %v5330 = vsel %vm123, %v5315, 0
    %5332 = vmatprep.subr.mxu0 0.0
    %5333 = vmatpush1.msra.mxu0 %v5318
    %5334 = vmatprep.subr.mxu0 0.0
    %5335 = vmatpush1.msra.mxu0 %v5319
    %5336 = vmatprep.subr.mxu0 0.0
    %5337 = vmatpush1.msra.mxu0 %v5320
    %5338 = vmatprep.subr.mxu0 0.0
    %5339 = vmatpush1.msra.mxu0 %v5321
    %5340 = vmatprep.subr.mxu0 0.0
    %5341 = vmatpush1.msra.mxu0 0.0
    %5342 = vmatprep.subr.mxu0 0.0
    %5343 = vmatpush1.msra.mxu0 0.0
    %5344 = vmatprep.subr.mxu0 0.0
    %5345 = vmatpush1.msra.mxu0 0.0
    %5346 = vmatprep.subr.mxu0 0.0
    %5347 = vmatpush1.msra.mxu0 0.0
    %5348 = vmatprep.subr.mxu0 0.0
    %5349 = vmatpush1.msra.mxu0 0.0
    %5350 = vmatprep.subr.mxu0 0.0
    %5351 = vmatpush1.msra.mxu0 0.0
    %5352 = vmatprep.subr.mxu0 0.0
    %5353 = vmatpush1.msra.mxu0 0.0
    %5354 = vmatprep.subr.mxu0 0.0
    %5355 = vmatpush1.msra.mxu0 0.0
    %5356 = vmatprep.subr.mxu0 0.0
    %5357 = vmatpush1.msra.mxu0 0.0
    %5358 = vmatprep.subr.mxu0 0.0
    %5359 = vmatpush1.msra.mxu0 0.0
    %5360 = vmatprep.subr.mxu0 0.0
    %5361 = vmatpush1.msra.mxu0 0.0
    %5362 = vmatprep.subr.mxu0 0.0
    %5363 = vmatpush1.msra.mxu0 0.0
    %5364 = vmatprep.subr.mxu0 0.0
    %5365 = vmatpush1.msra.mxu0 0.0
    %5366 = vmatprep.subr.mxu0 0.0
    %5367 = vmatpush1.msra.mxu0 0.0
    %5368 = vmatprep.subr.mxu0 0.0
    %5369 = vmatpush1.msra.mxu0 0.0
    %5370 = vmatprep.subr.mxu0 0.0
    %5371 = vmatpush1.msra.mxu0 0.0
    %5372 = vmatprep.subr.mxu0 0.0
    %5373 = vmatpush1.msra.mxu0 0.0
    %5374 = vmatprep.subr.mxu0 0.0
    %5375 = vmatpush1.msra.mxu0 0.0
    %5376 = vmatprep.subr.mxu0 0.0
    %5377 = vmatpush1.msra.mxu0 0.0
    %5378 = vmatprep.subr.mxu0 0.0
    %5379 = vmatpush1.msra.mxu0 0.0
    %5380 = vmatprep.subr.mxu0 0.0
    %5381 = vmatpush1.msra.mxu0 0.0
    %5382 = vmatprep.subr.mxu0 0.0
    %5383 = vmatpush1.msra.mxu0 0.0
    %5384 = vmatprep.subr.mxu0 0.0
    %5385 = vmatpush1.msra.mxu0 0.0
    %5386 = vmatprep.subr.mxu0 0.0
    %5387 = vmatpush1.msra.mxu0 0.0
    %5388 = vmatprep.subr.mxu0 0.0
    %5389 = vmatpush1.msra.mxu0 0.0
    %5390 = vmatprep.subr.mxu0 0.0
    %5391 = vmatpush1.msra.mxu0 0.0
    %5392 = vmatprep.subr.mxu0 0.0
    %5393 = vmatpush1.msra.mxu0 0.0
    %5394 = vmatprep.subr.mxu0 0.0
    %5395 = vmatpush1.msra.mxu0 0.0
    %5396 = vmatprep.mubr.f32.mxu0 0.0
    %5397 = vmatmul.mubr.f32.gmra.mrb[0].mxu0 %v5330
    %v5398 = vpop.f32.mrb[0].mxu0
    %v5399 = vadd.f32 %v5327, %v5398
    %v5400 = vpop.f32.mrb[0].mxu0
    %5401 = vdwg.mxu0
    %vm5402 = vcmask 33792
    %v5403 = vsel %vm5402, %v5399, -inf
    %5404 = vmax.xlane.f32.xlu0 %v5403
    %v5405 = vpop.xlane.xlu0 %5404
    %v5406 = vsub.f32 %v5399, %v5405
    %v5407 = vmul.f32 %v5406, 1.442695
    %v5408 = vpow.pop %v5407
    %v5409 = vsel %vm5402, %v5408, 0.0
    %5410 = vadd.xlane.f32.xlu0 %v5409
    %v5411 = vpop.xlane.xlu0 %5410
    %v5412 = vrcp.pop %v5411
    %v5413 = vmul.f32 %v5408, %v5412
    %5414 = vst.msk [vmem:[#allocation3] sm:$0x3] %vm5402, %v5413
    // Predicated region
    $region118: #{mcsat_forward_pallas.1} parent=1 // pred_check
      _
    $region119: #{mcsat_forward_pallas.1} parent=1 // pred_check_branch
      %5416 = sbr.rel (0) target = $region121
    $region120: #{mcsat_forward_pallas.1} parent=1 // pred_region
      %s5418 = ssub.s32 32, 32
      %5419 = vsyncadd [#allocation4], %s5418
      %s5421 = sshll.u32 [#allocation3], 4
      %s5422 = int_to_ptr.vmem [resolvable:$true] %s5421
      %5424 = dma.vmem_to_hbm [thread:$0]  %s5422, 32, %s59, [#allocation4]
    $region121: #{mcsat_forward_pallas.1} parent=1 // pred_fallthru
      _
    // Predicated region
    $region122: #{mcsat_forward_pallas.1} parent=1 // pred_check
      _
    $region123: #{mcsat_forward_pallas.1} parent=1 // pred_check_branch
      %5426 = sbr.rel (0) target = $region125
    $region124: #{mcsat_forward_pallas.1} parent=1 // pred_region
      %5427 = dma.done [#allocation4], 32
    $region125: #{mcsat_forward_pallas.1} parent=1 // pred_fallthru
      _
    %5428 = vsyncpa [#allocation4], 1

</llo_original>
